<compile_context>
chip_gen: v7x
topology: tpu7x:2x2x1
jax: 0.10.0
libtpu: 0.0.40
codegen_flags: <defaults>
</compile_context>

<pallas_src>
import functools

import jax
import jax.numpy as jnp
from jax.experimental import pallas as pl
from jax.experimental.pallas import tpu as pltpu

HIDDEN = 256
D_OUT = 128
HEAD_DIMS = {"head_64ms": 4096, "head_256ms": 1024, "head_1000ms": 384}


def _round_up(x, m):
    return ((x + m - 1) // m) * m


def _fused_heads_kernel(
    x64_ref, x256_ref, x1000_ref,
    w1a_ref, b1a_ref, w2a_ref, b2a_ref,      # head_64ms
    w1b_ref, b1b_ref, w2b_ref, b2b_ref,      # head_256ms
    w1c_ref, b1c_ref, w2c_ref, b2c_ref,      # head_1000ms
    o64_ref, o256_ref, o1000_ref,
):
    def head(x_ref, w1_ref, b1_ref, w2_ref, b2_ref, o_ref):
        # In-kernel fp32 -> bf16 cast (VPU, hidden under the x DMA), MXU matmul with
        # fp32 accumulation, bias + ReLU in fp32.
        x = x_ref[...].astype(w1_ref.dtype)
        h = jnp.dot(x, w1_ref[...], preferred_element_type=jnp.float32)
        h = jnp.maximum(h + b1_ref[...], 0.0)
        o = jnp.dot(h.astype(w2_ref.dtype), w2_ref[...],
                    preferred_element_type=jnp.float32)
        o_ref[...] = jnp.maximum(o + b2_ref[...], 0.0)

    head(x64_ref, w1a_ref, b1a_ref, w2a_ref, b2a_ref, o64_ref)
    head(x256_ref, w1b_ref, b1b_ref, w2b_ref, b2b_ref, o256_ref)
    head(x1000_ref, w1c_ref, b1c_ref, w2c_ref, b2c_ref, o1000_ref)


def multi_res_mlp_heads(params, x_64ms, x_256ms, x_1000ms, *, tile_b=512):
    """Fused forward of the three MLP heads. Returns (h64, h256, h1000) in fp32."""
    assert tile_b % 16 == 0  # 16-row granule: bf16 (16,128) minimum tile for the cast x
    B = x_64ms.shape[0]
    assert x_256ms.shape[0] == B and x_1000ms.shape[0] == B

    d_ins = list(HEAD_DIMS.values())   # [4096, 1024, 384]

    # Batch tile: at most tile_b, never larger than the (16-aligned) batch.
    tb = min(tile_b, _round_up(B, 16))
    grid = (pl.cdiv(B, tb),)           # ragged last block handled by Pallas masking

    weight_mode = pl.Buffered(1)       # grid-invariant weights: no second buffer needed
    in_specs = [pl.BlockSpec((tb, d), lambda i: (i, 0)) for d in d_ins]
    for d in d_ins:
        in_specs += [
            pl.BlockSpec((d, HIDDEN), lambda i: (0, 0), pipeline_mode=weight_mode),
            pl.BlockSpec((1, HIDDEN), lambda i: (0, 0), pipeline_mode=weight_mode),
            pl.BlockSpec((HIDDEN, D_OUT), lambda i: (0, 0), pipeline_mode=weight_mode),
            pl.BlockSpec((1, D_OUT), lambda i: (0, 0), pipeline_mode=weight_mode),
        ]

    out_specs = tuple(pl.BlockSpec((tb, D_OUT), lambda i: (i, 0)) for _ in range(3))
    out_shape = tuple(jax.ShapeDtypeStruct((B, D_OUT), jnp.float32) for _ in range(3))

    flops = 2 * B * sum(d * HIDDEN + HIDDEN * D_OUT for d in d_ins)
    bytes_accessed = (
        sum(B * d * 4 for d in d_ins)                                       # fp32 x
        + sum((d * HIDDEN + HIDDEN * D_OUT) * 2 + (HIDDEN + D_OUT) * 4       # bf16 w + fp32 b
              for d in d_ins)
        + 3 * B * D_OUT * 4                                                  # fp32 outputs
    )
    cost = pl.CostEstimate(flops=flops, transcendentals=0,
                           bytes_accessed=bytes_accessed)

    compiler_kwargs = dict(dimension_semantics=("parallel",))
    if tb >= 256:
        # Estimated VMEM footprint (x/out double-buffered, weights single-buffered),
        # with ~1.5x headroom.  ~48 MiB at tb=512: above v5e's 16 MiB default scoped
        # limit (hence the override) but below v7x's 64 MiB physical per-TC VMEM.
        est_vmem = (2 * tb * sum(d_ins) * 4
                    + 2 * 3 * tb * D_OUT * 4
                    + sum(d * HIDDEN + HIDDEN * D_OUT for d in d_ins) * 2
                    + 3 * (HIDDEN + D_OUT) * 4)
        compiler_kwargs["vmem_limit_bytes"] = int(est_vmem * 1.5) + (8 << 20)

    flat_params = []
    for name in HEAD_DIMS:
        w1, b1, w2, b2 = params[name]
        flat_params += [w1.astype(jnp.bfloat16), b1.astype(jnp.float32),
                        w2.astype(jnp.bfloat16), b2.astype(jnp.float32)]

    o64, o256, o1000 = pl.pallas_call(
        _fused_heads_kernel,
        out_shape=out_shape,
        grid_spec=pltpu.PrefetchScalarGridSpec(
            num_scalar_prefetch=0,
            grid=grid,
            in_specs=in_specs,
            out_specs=out_specs,
        ),
        compiler_params=pltpu.CompilerParams(**compiler_kwargs),
        cost_estimate=cost,
    )(x_64ms, x_256ms, x_1000ms, *flat_params)

    return o64, o256, o1000


def _init_linear(key, d_in, d_out):
    """nn.Linear-style uniform(-1/sqrt(d_in), 1/sqrt(d_in)); weight stored (d_in, d_out)."""
    kw, kb = jax.random.split(key)
    bound = 1.0 / jnp.sqrt(jnp.float32(d_in))
    w = jax.random.uniform(kw, (d_in, d_out), jnp.float32, -bound, bound)
    b = jax.random.uniform(kb, (1, d_out), jnp.float32, -bound, bound)
    return w.astype(jnp.bfloat16), b  # weights kept in bf16, biases in fp32


def init_multi_res_mlp_heads(key):
    params = {}
    keys = jax.random.split(key, len(HEAD_DIMS))
    for k, (name, d_in) in zip(keys, HEAD_DIMS.items()):
        k1, k2 = jax.random.split(k)
        w1, b1 = _init_linear(k1, d_in, HIDDEN)
        w2, b2 = _init_linear(k2, HIDDEN, D_OUT)
        params[name] = (w1, b1, w2, b2)
    return params


@functools.partial(jax.jit, static_argnames=("tile_b",))
def multi_res_mlp_heads_forward(params, x_64ms, x_256ms, x_1000ms, tile_b=512):
    return multi_res_mlp_heads(params, x_64ms, x_256ms, x_1000ms, tile_b=tile_b)


def _reference_forward(params, x_64ms, x_256ms, x_1000ms):
    """Pure-JAX fp32 reference, matching the in-kernel bf16 rounding of x and h."""
    def head(x, w1, b1, w2, b2):
        xb = x.astype(jnp.bfloat16).astype(jnp.float32)
        h = jnp.maximum(xb @ w1.astype(jnp.float32) + b1, 0.0)
        hb = h.astype(jnp.bfloat16).astype(jnp.float32)
        return jnp.maximum(hb @ w2.astype(jnp.float32) + b2, 0.0)
    return (head(x_64ms, *params["head_64ms"]),
            head(x_256ms, *params["head_256ms"]),
            head(x_1000ms, *params["head_1000ms"]))


if __name__ == "__main__":
    key = jax.random.PRNGKey(0)
    kp, k64, k256, k1000 = jax.random.split(key, 4)
    params = init_multi_res_mlp_heads(kp)

    # (B=12, big tile)  -> single partial block (tb clamps to 16, grid=(1,))
    # (B=40, tile=16)   -> multi-step grid with a ragged 8-row last block
    for B, tb in ((12, 512), (40, 16)):
        x_64ms = jax.random.normal(k64, (B, 4096), jnp.float32)
        x_256ms = jax.random.normal(k256, (B, 1024), jnp.float32)
        x_1000ms = jax.random.normal(k1000, (B, 384), jnp.float32)

        outs = multi_res_mlp_heads_forward(params, x_64ms, x_256ms, x_1000ms, tile_b=tb)
        outs = jax.block_until_ready(outs)

        refs = _reference_forward(params, x_64ms, x_256ms, x_1000ms)
        for o, r in zip(outs, refs):
            assert o.shape == r.shape and o.dtype == jnp.float32
            assert jnp.allclose(o, r, atol=2e-2, rtol=2e-2), \
                float(jnp.max(jnp.abs(o - r)))

    print("KERNEL_OK")
</pallas_src>

<mosaic_0001>
module attributes {stable_mosaic.version = 11 : i64} {
  func.func @_fused_heads_kernel(%arg0: i32, %arg1: memref<16x4096xf32, #tpu.memory_space<vmem>>, %arg2: memref<16x1024xf32, #tpu.memory_space<vmem>>, %arg3: memref<16x384xf32, #tpu.memory_space<vmem>>, %arg4: memref<4096x256xbf16, #tpu.memory_space<vmem>>, %arg5: memref<1x256xf32, #tpu.memory_space<vmem>>, %arg6: memref<256x128xbf16, #tpu.memory_space<vmem>>, %arg7: memref<1x128xf32, #tpu.memory_space<vmem>>, %arg8: memref<1024x256xbf16, #tpu.memory_space<vmem>>, %arg9: memref<1x256xf32, #tpu.memory_space<vmem>>, %arg10: memref<256x128xbf16, #tpu.memory_space<vmem>>, %arg11: memref<1x128xf32, #tpu.memory_space<vmem>>, %arg12: memref<384x256xbf16, #tpu.memory_space<vmem>>, %arg13: memref<1x256xf32, #tpu.memory_space<vmem>>, %arg14: memref<256x128xbf16, #tpu.memory_space<vmem>>, %arg15: memref<1x128xf32, #tpu.memory_space<vmem>>, %arg16: memref<16x128xf32, #tpu.memory_space<vmem>>, %arg17: memref<16x128xf32, #tpu.memory_space<vmem>>, %arg18: memref<16x128xf32, #tpu.memory_space<vmem>>) attributes {dimension_semantics = [#tpu.dimension_semantics<parallel>], iteration_bounds = array<i64: 1>, scalar_prefetch = 0 : i64, scratch_operands = 0 : i64, tpu.core_type = #tpu.core_type<tc>, window_params = [{transform_indices = @transform_0, window_bounds = array<i64: 16, 4096>}, {transform_indices = @transform_1, window_bounds = array<i64: 16, 1024>}, {transform_indices = @transform_2, window_bounds = array<i64: 16, 384>}, {pipeline_mode = #tpu.pipeline_mode<synchronous>, transform_indices = @transform_3, window_bounds = array<i64: 4096, 256>}, {pipeline_mode = #tpu.pipeline_mode<synchronous>, transform_indices = @transform_4, window_bounds = array<i64: 1, 256>}, {pipeline_mode = #tpu.pipeline_mode<synchronous>, transform_indices = @transform_5, window_bounds = array<i64: 256, 128>}, {pipeline_mode = #tpu.pipeline_mode<synchronous>, transform_indices = @transform_6, window_bounds = array<i64: 1, 128>}, {pipeline_mode = #tpu.pipeline_mode<synchronous>, transform_indices = @transform_7, window_bounds = array<i64: 1024, 256>}, {pipeline_mode = #tpu.pipeline_mode<synchronous>, transform_indices = @transform_8, window_bounds = array<i64: 1, 256>}, {pipeline_mode = #tpu.pipeline_mode<synchronous>, transform_indices = @transform_9, window_bounds = array<i64: 256, 128>}, {pipeline_mode = #tpu.pipeline_mode<synchronous>, transform_indices = @transform_10, window_bounds = array<i64: 1, 128>}, {pipeline_mode = #tpu.pipeline_mode<synchronous>, transform_indices = @transform_11, window_bounds = array<i64: 384, 256>}, {pipeline_mode = #tpu.pipeline_mode<synchronous>, transform_indices = @transform_12, window_bounds = array<i64: 1, 256>}, {pipeline_mode = #tpu.pipeline_mode<synchronous>, transform_indices = @transform_13, window_bounds = array<i64: 256, 128>}, {pipeline_mode = #tpu.pipeline_mode<synchronous>, transform_indices = @transform_14, window_bounds = array<i64: 1, 128>}, {transform_indices = @transform_15, window_bounds = array<i64: 16, 128>}, {transform_indices = @transform_16, window_bounds = array<i64: 16, 128>}, {transform_indices = @transform_17, window_bounds = array<i64: 16, 128>}]} {
    %c0 = arith.constant 0 : index
    %c0_0 = arith.constant 0 : index
    %0 = vector.load %arg1[%c0, %c0_0] : memref<16x4096xf32, #tpu.memory_space<vmem>>, vector<16x4096xf32>
    %1 = arith.truncf %0 : vector<16x4096xf32> to vector<16x4096xbf16>
    %c0_1 = arith.constant 0 : index
    %c0_2 = arith.constant 0 : index
    %2 = vector.load %arg4[%c0_1, %c0_2] : memref<4096x256xbf16, #tpu.memory_space<vmem>>, vector<4096x256xbf16>
    %cst = arith.constant dense<0.000000e+00> : vector<16x256xf32>
    %3 = tpu.matmul %1, %2, %cst {dimension_numbers = #tpu.dot_dimension_numbers<[1], [0], [0], [1], [0, 0, 1, 1], [], []>} : vector<16x4096xbf16>, vector<4096x256xbf16>, vector<16x256xf32> -> vector<16x256xf32>
    %c0_3 = arith.constant 0 : index
    %c0_4 = arith.constant 0 : index
    %4 = vector.load %arg5[%c0_3, %c0_4] : memref<1x256xf32, #tpu.memory_space<vmem>>, vector<1x256xf32>
    %5 = vector.broadcast %4 : vector<1x256xf32> to vector<16x256xf32>
    %6 = arith.addf %3, %5 : vector<16x256xf32>
    %cst_5 = arith.constant 0.000000e+00 : f32
    %7 = vector.broadcast %cst_5 : f32 to vector<16x256xf32>
    %8 = arith.maximumf %6, %7 : vector<16x256xf32>
    %9 = arith.truncf %8 : vector<16x256xf32> to vector<16x256xbf16>
    %c0_6 = arith.constant 0 : index
    %c0_7 = arith.constant 0 : index
    %10 = vector.load %arg6[%c0_6, %c0_7] : memref<256x128xbf16, #tpu.memory_space<vmem>>, vector<256x128xbf16>
    %cst_8 = arith.constant dense<0.000000e+00> : vector<16x128xf32>
    %11 = tpu.matmul %9, %10, %cst_8 {dimension_numbers = #tpu.dot_dimension_numbers<[1], [0], [0], [1], [0, 0, 1, 1], [], []>} : vector<16x256xbf16>, vector<256x128xbf16>, vector<16x128xf32> -> vector<16x128xf32>
    %c0_9 = arith.constant 0 : index
    %c0_10 = arith.constant 0 : index
    %12 = vector.load %arg7[%c0_9, %c0_10] : memref<1x128xf32, #tpu.memory_space<vmem>>, vector<1x128xf32>
    %13 = vector.broadcast %12 : vector<1x128xf32> to vector<16x128xf32>
    %14 = arith.addf %11, %13 : vector<16x128xf32>
    %cst_11 = arith.constant 0.000000e+00 : f32
    %15 = vector.broadcast %cst_11 : f32 to vector<16x128xf32>
    %16 = arith.maximumf %14, %15 : vector<16x128xf32>
    %c0_12 = arith.constant 0 : index
    %c0_13 = arith.constant 0 : index
    %17 = vector.load %arg16[%c0_12, %c0_13] : memref<16x128xf32, #tpu.memory_space<vmem>>, vector<16x128xf32>
    tpu.vector_store %arg16[%c0_12, %c0_13], %16 {strides = array<i32>} : memref<16x128xf32, #tpu.memory_space<vmem>>, vector<16x128xf32>,
    %c0_14 = arith.constant 0 : index
    %c0_15 = arith.constant 0 : index
    %18 = vector.load %arg2[%c0_14, %c0_15] : memref<16x1024xf32, #tpu.memory_space<vmem>>, vector<16x1024xf32>
    %19 = arith.truncf %18 : vector<16x1024xf32> to vector<16x1024xbf16>
    %c0_16 = arith.constant 0 : index
    %c0_17 = arith.constant 0 : index
    %20 = vector.load %arg8[%c0_16, %c0_17] : memref<1024x256xbf16, #tpu.memory_space<vmem>>, vector<1024x256xbf16>
    %cst_18 = arith.constant dense<0.000000e+00> : vector<16x256xf32>
    %21 = tpu.matmul %19, %20, %cst_18 {dimension_numbers = #tpu.dot_dimension_numbers<[1], [0], [0], [1], [0, 0, 1, 1], [], []>} : vector<16x1024xbf16>, vector<1024x256xbf16>, vector<16x256xf32> -> vector<16x256xf32>
    %c0_19 = arith.constant 0 : index
    %c0_20 = arith.constant 0 : index
    %22 = vector.load %arg9[%c0_19, %c0_20] : memref<1x256xf32, #tpu.memory_space<vmem>>, vector<1x256xf32>
    %23 = vector.broadcast %22 : vector<1x256xf32> to vector<16x256xf32>
    %24 = arith.addf %21, %23 : vector<16x256xf32>
    %cst_21 = arith.constant 0.000000e+00 : f32
    %25 = vector.broadcast %cst_21 : f32 to vector<16x256xf32>
    %26 = arith.maximumf %24, %25 : vector<16x256xf32>
    %27 = arith.truncf %26 : vector<16x256xf32> to vector<16x256xbf16>
    %c0_22 = arith.constant 0 : index
    %c0_23 = arith.constant 0 : index
    %28 = vector.load %arg10[%c0_22, %c0_23] : memref<256x128xbf16, #tpu.memory_space<vmem>>, vector<256x128xbf16>
    %cst_24 = arith.constant dense<0.000000e+00> : vector<16x128xf32>
    %29 = tpu.matmul %27, %28, %cst_24 {dimension_numbers = #tpu.dot_dimension_numbers<[1], [0], [0], [1], [0, 0, 1, 1], [], []>} : vector<16x256xbf16>, vector<256x128xbf16>, vector<16x128xf32> -> vector<16x128xf32>
    %c0_25 = arith.constant 0 : index
    %c0_26 = arith.constant 0 : index
    %30 = vector.load %arg11[%c0_25, %c0_26] : memref<1x128xf32, #tpu.memory_space<vmem>>, vector<1x128xf32>
    %31 = vector.broadcast %30 : vector<1x128xf32> to vector<16x128xf32>
    %32 = arith.addf %29, %31 : vector<16x128xf32>
    %cst_27 = arith.constant 0.000000e+00 : f32
    %33 = vector.broadcast %cst_27 : f32 to vector<16x128xf32>
    %34 = arith.maximumf %32, %33 : vector<16x128xf32>
    %c0_28 = arith.constant 0 : index
    %c0_29 = arith.constant 0 : index
    %35 = vector.load %arg17[%c0_28, %c0_29] : memref<16x128xf32, #tpu.memory_space<vmem>>, vector<16x128xf32>
    tpu.vector_store %arg17[%c0_28, %c0_29], %34 {strides = array<i32>} : memref<16x128xf32, #tpu.memory_space<vmem>>, vector<16x128xf32>,
    %c0_30 = arith.constant 0 : index
    %c0_31 = arith.constant 0 : index
    %36 = vector.load %arg3[%c0_30, %c0_31] : memref<16x384xf32, #tpu.memory_space<vmem>>, vector<16x384xf32>
    %37 = arith.truncf %36 : vector<16x384xf32> to vector<16x384xbf16>
    %c0_32 = arith.constant 0 : index
    %c0_33 = arith.constant 0 : index
    %38 = vector.load %arg12[%c0_32, %c0_33] : memref<384x256xbf16, #tpu.memory_space<vmem>>, vector<384x256xbf16>
    %cst_34 = arith.constant dense<0.000000e+00> : vector<16x256xf32>
    %39 = tpu.matmul %37, %38, %cst_34 {dimension_numbers = #tpu.dot_dimension_numbers<[1], [0], [0], [1], [0, 0, 1, 1], [], []>} : vector<16x384xbf16>, vector<384x256xbf16>, vector<16x256xf32> -> vector<16x256xf32>
    %c0_35 = arith.constant 0 : index
    %c0_36 = arith.constant 0 : index
    %40 = vector.load %arg13[%c0_35, %c0_36] : memref<1x256xf32, #tpu.memory_space<vmem>>, vector<1x256xf32>
    %41 = vector.broadcast %40 : vector<1x256xf32> to vector<16x256xf32>
    %42 = arith.addf %39, %41 : vector<16x256xf32>
    %cst_37 = arith.constant 0.000000e+00 : f32
    %43 = vector.broadcast %cst_37 : f32 to vector<16x256xf32>
    %44 = arith.maximumf %42, %43 : vector<16x256xf32>
    %45 = arith.truncf %44 : vector<16x256xf32> to vector<16x256xbf16>
    %c0_38 = arith.constant 0 : index
    %c0_39 = arith.constant 0 : index
    %46 = vector.load %arg14[%c0_38, %c0_39] : memref<256x128xbf16, #tpu.memory_space<vmem>>, vector<256x128xbf16>
    %cst_40 = arith.constant dense<0.000000e+00> : vector<16x128xf32>
    %47 = tpu.matmul %45, %46, %cst_40 {dimension_numbers = #tpu.dot_dimension_numbers<[1], [0], [0], [1], [0, 0, 1, 1], [], []>} : vector<16x256xbf16>, vector<256x128xbf16>, vector<16x128xf32> -> vector<16x128xf32>
    %c0_41 = arith.constant 0 : index
    %c0_42 = arith.constant 0 : index
    %48 = vector.load %arg15[%c0_41, %c0_42] : memref<1x128xf32, #tpu.memory_space<vmem>>, vector<1x128xf32>
    %49 = vector.broadcast %48 : vector<1x128xf32> to vector<16x128xf32>
    %50 = arith.addf %47, %49 : vector<16x128xf32>
    %cst_43 = arith.constant 0.000000e+00 : f32
    %51 = vector.broadcast %cst_43 : f32 to vector<16x128xf32>
    %52 = arith.maximumf %50, %51 : vector<16x128xf32>
    %c0_44 = arith.constant 0 : index
    %c0_45 = arith.constant 0 : index
    %53 = vector.load %arg18[%c0_44, %c0_45] : memref<16x128xf32, #tpu.memory_space<vmem>>, vector<16x128xf32>
    tpu.vector_store %arg18[%c0_44, %c0_45], %52 {strides = array<i32>} : memref<16x128xf32, #tpu.memory_space<vmem>>, vector<16x128xf32>,
    return
  }
  func.func @transform_0(%arg0: i32) -> (i32, i32) {
    %c0_i32 = arith.constant 0 : i32
    %c0_i32_0 = arith.constant 0 : i32
    return %arg0, %c0_i32 : i32, i32
  }
  func.func @transform_1(%arg0: i32) -> (i32, i32) {
    %c0_i32 = arith.constant 0 : i32
    %c0_i32_0 = arith.constant 0 : i32
    return %arg0, %c0_i32 : i32, i32
  }
  func.func @transform_2(%arg0: i32) -> (i32, i32) {
    %c0_i32 = arith.constant 0 : i32
    %c0_i32_0 = arith.constant 0 : i32
    return %arg0, %c0_i32 : i32, i32
  }
  func.func @transform_3(%arg0: i32) -> (i32, i32) {
    %c0_i32 = arith.constant 0 : i32
    %c0_i32_0 = arith.constant 0 : i32
    %c0_i32_1 = arith.constant 0 : i32
    return %c0_i32, %c0_i32_0 : i32, i32
  }
  func.func @transform_4(%arg0: i32) -> (i32, i32) {
    %c0_i32 = arith.constant 0 : i32
    %c0_i32_0 = arith.constant 0 : i32
    %c0_i32_1 = arith.constant 0 : i32
    return %c0_i32, %c0_i32_0 : i32, i32
  }
  func.func @transform_5(%arg0: i32) -> (i32, i32) {
    %c0_i32 = arith.constant 0 : i32
    %c0_i32_0 = arith.constant 0 : i32
    %c0_i32_1 = arith.constant 0 : i32
    return %c0_i32, %c0_i32_0 : i32, i32
  }
  func.func @transform_6(%arg0: i32) -> (i32, i32) {
    %c0_i32 = arith.constant 0 : i32
    %c0_i32_0 = arith.constant 0 : i32
    %c0_i32_1 = arith.constant 0 : i32
    return %c0_i32, %c0_i32_0 : i32, i32
  }
  func.func @transform_7(%arg0: i32) -> (i32, i32) {
    %c0_i32 = arith.constant 0 : i32
    %c0_i32_0 = arith.constant 0 : i32
    %c0_i32_1 = arith.constant 0 : i32
    return %c0_i32, %c0_i32_0 : i32, i32
  }
  func.func @transform_8(%arg0: i32) -> (i32, i32) {
    %c0_i32 = arith.constant 0 : i32
    %c0_i32_0 = arith.constant 0 : i32
    %c0_i32_1 = arith.constant 0 : i32
    return %c0_i32, %c0_i32_0 : i32, i32
  }
  func.func @transform_9(%arg0: i32) -> (i32, i32) {
    %c0_i32 = arith.constant 0 : i32
    %c0_i32_0 = arith.constant 0 : i32
    %c0_i32_1 = arith.constant 0 : i32
    return %c0_i32, %c0_i32_0 : i32, i32
  }
  func.func @transform_10(%arg0: i32) -> (i32, i32) {
    %c0_i32 = arith.constant 0 : i32
    %c0_i32_0 = arith.constant 0 : i32
    %c0_i32_1 = arith.constant 0 : i32
    return %c0_i32, %c0_i32_0 : i32, i32
  }
  func.func @transform_11(%arg0: i32) -> (i32, i32) {
    %c0_i32 = arith.constant 0 : i32
    %c0_i32_0 = arith.constant 0 : i32
    %c0_i32_1 = arith.constant 0 : i32
    return %c0_i32, %c0_i32_0 : i32, i32
  }
  func.func @transform_12(%arg0: i32) -> (i32, i32) {
    %c0_i32 = arith.constant 0 : i32
    %c0_i32_0 = arith.constant 0 : i32
    %c0_i32_1 = arith.constant 0 : i32
    return %c0_i32, %c0_i32_0 : i32, i32
  }
  func.func @transform_13(%arg0: i32) -> (i32, i32) {
    %c0_i32 = arith.constant 0 : i32
    %c0_i32_0 = arith.constant 0 : i32
    %c0_i32_1 = arith.constant 0 : i32
    return %c0_i32, %c0_i32_0 : i32, i32
  }
  func.func @transform_14(%arg0: i32) -> (i32, i32) {
    %c0_i32 = arith.constant 0 : i32
    %c0_i32_0 = arith.constant 0 : i32
    %c0_i32_1 = arith.constant 0 : i32
    return %c0_i32, %c0_i32_0 : i32, i32
  }
  func.func @transform_15(%arg0: i32) -> (i32, i32) {
    %c0_i32 = arith.constant 0 : i32
    %c0_i32_0 = arith.constant 0 : i32
    return %arg0, %c0_i32 : i32, i32
  }
  func.func @transform_16(%arg0: i32) -> (i32, i32) {
    %c0_i32 = arith.constant 0 : i32
    %c0_i32_0 = arith.constant 0 : i32
    return %arg0, %c0_i32 : i32, i32
  }
  func.func @transform_17(%arg0: i32) -> (i32, i32) {
    %c0_i32 = arith.constant 0 : i32
    %c0_i32_0 = arith.constant 0 : i32
    return %arg0, %c0_i32 : i32, i32
  }
}

</mosaic_0001>

<llo_original>
// kernel: multi_res_mlp_heads_forward.1
$region0: #{multi_res_mlp_heads_forward.1}
  #allocation0 [shape = 'u32[]', space=smem, size = 0x4, offset = 0x4, fixed_abs, tag = 'smem constant byte address 0x4 - core index']
  #allocation1 [shape = 'u32[144,128]{1,0:T(1,128)}', space=vmem, size = 0x12000, scoped, tag = 'internal scratch']
  %s0 = inlined_call_operand.hbm [shape: f32[12,4096], index: 0, kind: input, shape index: {}]
  %s1 = inlined_call_operand.hbm [shape: f32[12,1024], index: 1, kind: input, shape index: {}]
  %s2 = inlined_call_operand.hbm [shape: f32[12,384], index: 2, kind: input, shape index: {}]
  %s3 = inlined_call_operand.hbm [shape: bf16[4096,256], index: 3, kind: input, shape index: {}]
  %s4 = inlined_call_operand.hbm [shape: f32[1,256], index: 4, kind: input, shape index: {}]
  %s5 = inlined_call_operand.hbm [shape: bf16[256,128], index: 5, kind: input, shape index: {}]
  %s6 = inlined_call_operand.hbm [shape: f32[1,128], index: 6, kind: input, shape index: {}]
  %s7 = inlined_call_operand.hbm [shape: bf16[1024,256], index: 7, kind: input, shape index: {}]
  %s8 = inlined_call_operand.hbm [shape: f32[1,256], index: 8, kind: input, shape index: {}]
  %s9 = inlined_call_operand.hbm [shape: bf16[256,128], index: 9, kind: input, shape index: {}]
  %s10 = inlined_call_operand.hbm [shape: f32[1,128], index: 10, kind: input, shape index: {}]
  %s11 = inlined_call_operand.hbm [shape: bf16[384,256], index: 11, kind: input, shape index: {}]
  %s12 = inlined_call_operand.hbm [shape: f32[1,256], index: 12, kind: input, shape index: {}]
  %s13 = inlined_call_operand.hbm [shape: bf16[256,128], index: 13, kind: input, shape index: {}]
  %s14 = inlined_call_operand.hbm [shape: f32[1,128], index: 14, kind: input, shape index: {}]
  %s15 = inlined_call_operand.hbm [shape: f32[12,128], index: 15, kind: output, shape index: {0}]
  %s16 = inlined_call_operand.hbm [shape: f32[12,128], index: 16, kind: output, shape index: {1}]
  %s17 = inlined_call_operand.hbm [shape: f32[12,128], index: 17, kind: output, shape index: {2}]
  %18 = xla_tuple %s15, %s16, %s17
  %s19 = sld [smem:[#allocation0]]
  $region146: #{multi_res_mlp_heads_forward.1} parent=0
    _
  %s21 = ssub.s32 1, %s19
  %s22 = scalar_select 0, %s21, %s19
  $region1: #{multi_res_mlp_heads_forward.1} parent=0
    #allocation2 [shape = 'u8[262144]{0}', space=vmem, size = 0x40000, scoped, tag = 'input window, operand 0, single buffered']
    #allocation3 [shape = 's32[1]{0}', space=sflag, size = 0x4, scoped, tag = 'scoped memory for multi_res_mlp_heads_forward.1']
    #allocation4 [shape = 's32[1]{0}', space=sflag, size = 0x4, scoped, tag = 'scoped memory for multi_res_mlp_heads_forward.1']
    #allocation5 [shape = 'u8[65536]{0}', space=vmem, size = 0x10000, scoped, tag = 'input window, operand 1, single buffered']
    #allocation6 [shape = 's32[1]{0}', space=sflag, size = 0x4, scoped, tag = 'scoped memory for multi_res_mlp_heads_forward.1']
    #allocation7 [shape = 'u8[24576]{0}', space=vmem, size = 0x6000, scoped, tag = 'input window, operand 2, single buffered']
    #allocation8 [shape = 'u8[2097152]{0}', space=vmem, size = 0x200000, scoped, tag = 'input window, operand 3, single buffered']
    #allocation9 [shape = 's32[1]{0}', space=sflag, size = 0x4, scoped, tag = 'scoped memory for multi_res_mlp_heads_forward.1']
    #allocation10 [shape = 'u8[1024]{0}', space=vmem, size = 0x400, scoped, tag = 'input window, operand 4, single buffered']
    #allocation11 [shape = 'u8[65536]{0}', space=vmem, size = 0x10000, scoped, tag = 'input window, operand 5, single buffered']
    #allocation12 [shape = 's32[1]{0}', space=sflag, size = 0x4, scoped, tag = 'scoped memory for multi_res_mlp_heads_forward.1']
    #allocation13 [shape = 'u8[512]{0}', space=vmem, size = 0x400, scoped, tag = 'input window, operand 6, single buffered']
    #allocation14 [shape = 'u8[524288]{0}', space=vmem, size = 0x80000, scoped, tag = 'input window, operand 7, single buffered']
    #allocation15 [shape = 's32[1]{0}', space=sflag, size = 0x4, scoped, tag = 'scoped memory for multi_res_mlp_heads_forward.1']
    #allocation16 [shape = 'u8[1024]{0}', space=vmem, size = 0x400, scoped, tag = 'input window, operand 8, single buffered']
    #allocation17 [shape = 'u8[65536]{0}', space=vmem, size = 0x10000, scoped, tag = 'input window, operand 9, single buffered']
    #allocation18 [shape = 's32[1]{0}', space=sflag, size = 0x4, scoped, tag = 'scoped memory for multi_res_mlp_heads_forward.1']
    #allocation19 [shape = 'u8[512]{0}', space=vmem, size = 0x400, scoped, tag = 'input window, operand 10, single buffered']
    #allocation20 [shape = 'u8[196608]{0}', space=vmem, size = 0x30000, scoped, tag = 'input window, operand 11, single buffered']
    #allocation21 [shape = 's32[1]{0}', space=sflag, size = 0x4, scoped, tag = 'scoped memory for multi_res_mlp_heads_forward.1']
    #allocation22 [shape = 'u8[1024]{0}', space=vmem, size = 0x400, scoped, tag = 'input window, operand 12, single buffered']
    #allocation23 [shape = 'u8[65536]{0}', space=vmem, size = 0x10000, scoped, tag = 'input window, operand 13, single buffered']
    #allocation24 [shape = 's32[1]{0}', space=sflag, size = 0x4, scoped, tag = 'scoped memory for multi_res_mlp_heads_forward.1']
    #allocation25 [shape = 'u8[512]{0}', space=vmem, size = 0x400, scoped, tag = 'input window, operand 14, single buffered']
    #allocation26 [shape = 'u8[8192]{0}', space=vmem, size = 0x2000, scoped, tag = 'output window, operand 0, single buffered']
    #allocation27 [shape = 'u8[8192]{0}', space=vmem, size = 0x2000, scoped, tag = 'output window, operand 1, single buffered']
    #allocation28 [shape = 's32[1]{0}', space=sflag, size = 0x4, scoped, tag = 'scoped memory for multi_res_mlp_heads_forward.1']
    #allocation29 [shape = 'u8[8192]{0}', space=vmem, size = 0x2000, scoped, tag = 'output window, operand 2, single buffered']
    %23 = vsyncpa [#allocation3], 0
    %24 = vsyncpa [#allocation6], 0
    %25 = vsyncpa [#allocation9], 0
    %26 = vsyncpa [#allocation12], 0
    %27 = vsyncpa [#allocation15], 0
    %28 = vsyncpa [#allocation18], 0
    %29 = vsyncpa [#allocation21], 0
    %30 = vsyncpa [#allocation24], 0
    %31 = vsyncpa [#allocation4], 0
    %32 = vsyncpa [#allocation28], 0
    // Predicated region
    $region2: #{multi_res_mlp_heads_forward.1} parent=1 // pred_check
      _
    $region3: #{multi_res_mlp_heads_forward.1} parent=1 // pred_check_branch
      %34 = sbr.rel (0) target = $region5
    $region4: #{multi_res_mlp_heads_forward.1} parent=1 // pred_region
      %s36 = ssub.s32 8192, 8192
      %37 = vsyncadd [#allocation3], %s36
      %s38 = sshll.u32 [#allocation2], 4
      %s39 = int_to_ptr.vmem [resolvable:$true] %s38
      %44 = dma.hbm_to_vmem [thread:$0]  %s0, 8192, %s39, [#allocation3], 4096, 4096, 256
    $region5: #{multi_res_mlp_heads_forward.1} parent=1 // pred_fallthru
      _
    // Predicated region
    $region6: #{multi_res_mlp_heads_forward.1} parent=1 // pred_check
      _
    $region7: #{multi_res_mlp_heads_forward.1} parent=1 // pred_check_branch
      %46 = sbr.rel (0) target = $region9
    $region8: #{multi_res_mlp_heads_forward.1} parent=1 // pred_region
      %s48 = ssub.s32 2048, 2048
      %49 = vsyncadd [#allocation6], %s48
      %s50 = sshll.u32 [#allocation5], 4
      %s51 = int_to_ptr.vmem [resolvable:$true] %s50
      %56 = dma.hbm_to_vmem [thread:$0]  %s1, 2048, %s51, [#allocation6], 1024, 1024, 64
    $region9: #{multi_res_mlp_heads_forward.1} parent=1 // pred_fallthru
      _
    // Predicated region
    $region10: #{multi_res_mlp_heads_forward.1} parent=1 // pred_check
      _
    $region11: #{multi_res_mlp_heads_forward.1} parent=1 // pred_check_branch
      %58 = sbr.rel (0) target = $region13
    $region12: #{multi_res_mlp_heads_forward.1} parent=1 // pred_region
      %s60 = ssub.s32 768, 768
      %61 = vsyncadd [#allocation6], %s60
      %s62 = sshll.u32 [#allocation7], 4
      %s63 = int_to_ptr.vmem [resolvable:$true] %s62
      %68 = dma.hbm_to_vmem [thread:$0]  %s2, 768, %s63, [#allocation6], 384, 384, 24
    $region13: #{multi_res_mlp_heads_forward.1} parent=1 // pred_fallthru
      _
    // Predicated region
    $region14: #{multi_res_mlp_heads_forward.1} parent=1 // pred_check
      _
    $region15: #{multi_res_mlp_heads_forward.1} parent=1 // pred_check_branch
      %70 = sbr.rel (0) target = $region17
    $region16: #{multi_res_mlp_heads_forward.1} parent=1 // pred_region
      %s72 = ssub.s32 65536, 65536
      %73 = vsyncadd [#allocation9], %s72
      %s74 = sshll.u32 [#allocation8], 4
      %s75 = int_to_ptr.vmem [resolvable:$true] %s74
      %80 = dma.hbm_to_vmem [thread:$0]  %s3, 65536, %s75, [#allocation9], 128, 128, 8
    $region17: #{multi_res_mlp_heads_forward.1} parent=1 // pred_fallthru
      _
    // Predicated region
    $region18: #{multi_res_mlp_heads_forward.1} parent=1 // pred_check
      _
    $region19: #{multi_res_mlp_heads_forward.1} parent=1 // pred_check_branch
      %82 = sbr.rel (0) target = $region21
    $region20: #{multi_res_mlp_heads_forward.1} parent=1 // pred_region
      %s84 = ssub.s32 32, 32
      %85 = vsyncadd [#allocation9], %s84
      %s87 = sshll.u32 [#allocation10], 4
      %s88 = int_to_ptr.vmem [resolvable:$true] %s87
      %90 = dma.hbm_to_vmem [thread:$0]  %s4, 32, %s88, [#allocation9]
    $region21: #{multi_res_mlp_heads_forward.1} parent=1 // pred_fallthru
      _
    // Predicated region
    $region22: #{multi_res_mlp_heads_forward.1} parent=1 // pred_check
      _
    $region23: #{multi_res_mlp_heads_forward.1} parent=1 // pred_check_branch
      %92 = sbr.rel (0) target = $region25
    $region24: #{multi_res_mlp_heads_forward.1} parent=1 // pred_region
      %s94 = ssub.s32 2048, 2048
      %95 = vsyncadd [#allocation12], %s94
      %s96 = sshll.u32 [#allocation11], 4
      %s97 = int_to_ptr.vmem [resolvable:$true] %s96
      %102 = dma.hbm_to_vmem [thread:$0]  %s5, 2048, %s97, [#allocation12], 64, 64, 4
    $region25: #{multi_res_mlp_heads_forward.1} parent=1 // pred_fallthru
      _
    // Predicated region
    $region26: #{multi_res_mlp_heads_forward.1} parent=1 // pred_check
      _
    $region27: #{multi_res_mlp_heads_forward.1} parent=1 // pred_check_branch
      %104 = sbr.rel (0) target = $region29
    $region28: #{multi_res_mlp_heads_forward.1} parent=1 // pred_region
      %s106 = ssub.s32 16, 16
      %107 = vsyncadd [#allocation12], %s106
      %s109 = sshll.u32 [#allocation13], 4
      %s110 = int_to_ptr.vmem [resolvable:$true] %s109
      %112 = dma.hbm_to_vmem [thread:$0]  %s6, 16, %s110, [#allocation12]
    $region29: #{multi_res_mlp_heads_forward.1} parent=1 // pred_fallthru
      _
    // Predicated region
    $region30: #{multi_res_mlp_heads_forward.1} parent=1 // pred_check
      _
    $region31: #{multi_res_mlp_heads_forward.1} parent=1 // pred_check_branch
      %114 = sbr.rel (0) target = $region33
    $region32: #{multi_res_mlp_heads_forward.1} parent=1 // pred_region
      %s116 = ssub.s32 16384, 16384
      %117 = vsyncadd [#allocation15], %s116
      %s118 = sshll.u32 [#allocation14], 4
      %s119 = int_to_ptr.vmem [resolvable:$true] %s118
      %124 = dma.hbm_to_vmem [thread:$0]  %s7, 16384, %s119, [#allocation15], 128, 128, 8
    $region33: #{multi_res_mlp_heads_forward.1} parent=1 // pred_fallthru
      _
    // Predicated region
    $region34: #{multi_res_mlp_heads_forward.1} parent=1 // pred_check
      _
    $region35: #{multi_res_mlp_heads_forward.1} parent=1 // pred_check_branch
      %126 = sbr.rel (0) target = $region37
    $region36: #{multi_res_mlp_heads_forward.1} parent=1 // pred_region
      %s128 = ssub.s32 32, 32
      %129 = vsyncadd [#allocation15], %s128
      %s131 = sshll.u32 [#allocation16], 4
      %s132 = int_to_ptr.vmem [resolvable:$true] %s131
      %134 = dma.hbm_to_vmem [thread:$0]  %s8, 32, %s132, [#allocation15]
    $region37: #{multi_res_mlp_heads_forward.1} parent=1 // pred_fallthru
      _
    // Predicated region
    $region38: #{multi_res_mlp_heads_forward.1} parent=1 // pred_check
      _
    $region39: #{multi_res_mlp_heads_forward.1} parent=1 // pred_check_branch
      %136 = sbr.rel (0) target = $region41
    $region40: #{multi_res_mlp_heads_forward.1} parent=1 // pred_region
      %s138 = ssub.s32 2048, 2048
      %139 = vsyncadd [#allocation18], %s138
      %s140 = sshll.u32 [#allocation17], 4
      %s141 = int_to_ptr.vmem [resolvable:$true] %s140
      %146 = dma.hbm_to_vmem [thread:$0]  %s9, 2048, %s141, [#allocation18], 64, 64, 4
    $region41: #{multi_res_mlp_heads_forward.1} parent=1 // pred_fallthru
      _
    // Predicated region
    $region42: #{multi_res_mlp_heads_forward.1} parent=1 // pred_check
      _
    $region43: #{multi_res_mlp_heads_forward.1} parent=1 // pred_check_branch
      %148 = sbr.rel (0) target = $region45
    $region44: #{multi_res_mlp_heads_forward.1} parent=1 // pred_region
      %s150 = ssub.s32 16, 16
      %151 = vsyncadd [#allocation18], %s150
      %s153 = sshll.u32 [#allocation19], 4
      %s154 = int_to_ptr.vmem [resolvable:$true] %s153
      %156 = dma.hbm_to_vmem [thread:$0]  %s10, 16, %s154, [#allocation18]
    $region45: #{multi_res_mlp_heads_forward.1} parent=1 // pred_fallthru
      _
    // Predicated region
    $region46: #{multi_res_mlp_heads_forward.1} parent=1 // pred_check
      _
    $region47: #{multi_res_mlp_heads_forward.1} parent=1 // pred_check_branch
      %158 = sbr.rel (0) target = $region49
    $region48: #{multi_res_mlp_heads_forward.1} parent=1 // pred_region
      %s160 = ssub.s32 6144, 6144
      %161 = vsyncadd [#allocation21], %s160
      %s162 = sshll.u32 [#allocation20], 4
      %s163 = int_to_ptr.vmem [resolvable:$true] %s162
      %168 = dma.hbm_to_vmem [thread:$0]  %s11, 6144, %s163, [#allocation21], 128, 128, 8
    $region49: #{multi_res_mlp_heads_forward.1} parent=1 // pred_fallthru
      _
    // Predicated region
    $region50: #{multi_res_mlp_heads_forward.1} parent=1 // pred_check
      _
    $region51: #{multi_res_mlp_heads_forward.1} parent=1 // pred_check_branch
      %170 = sbr.rel (0) target = $region53
    $region52: #{multi_res_mlp_heads_forward.1} parent=1 // pred_region
      %s172 = ssub.s32 32, 32
      %173 = vsyncadd [#allocation21], %s172
      %s175 = sshll.u32 [#allocation22], 4
      %s176 = int_to_ptr.vmem [resolvable:$true] %s175
      %178 = dma.hbm_to_vmem [thread:$0]  %s12, 32, %s176, [#allocation21]
    $region53: #{multi_res_mlp_heads_forward.1} parent=1 // pred_fallthru
      _
    // Predicated region
    $region54: #{multi_res_mlp_heads_forward.1} parent=1 // pred_check
      _
    $region55: #{multi_res_mlp_heads_forward.1} parent=1 // pred_check_branch
      %180 = sbr.rel (0) target = $region57
    $region56: #{multi_res_mlp_heads_forward.1} parent=1 // pred_region
      %s182 = ssub.s32 2048, 2048
      %183 = vsyncadd [#allocation24], %s182
      %s184 = sshll.u32 [#allocation23], 4
      %s185 = int_to_ptr.vmem [resolvable:$true] %s184
      %190 = dma.hbm_to_vmem [thread:$0]  %s13, 2048, %s185, [#allocation24], 64, 64, 4
    $region57: #{multi_res_mlp_heads_forward.1} parent=1 // pred_fallthru
      _
    // Predicated region
    $region58: #{multi_res_mlp_heads_forward.1} parent=1 // pred_check
      _
    $region59: #{multi_res_mlp_heads_forward.1} parent=1 // pred_check_branch
      %192 = sbr.rel (0) target = $region61
    $region60: #{multi_res_mlp_heads_forward.1} parent=1 // pred_region
      %s194 = ssub.s32 16, 16
      %195 = vsyncadd [#allocation24], %s194
      %s197 = sshll.u32 [#allocation25], 4
      %s198 = int_to_ptr.vmem [resolvable:$true] %s197
      %200 = dma.hbm_to_vmem [thread:$0]  %s14, 16, %s198, [#allocation24]
    $region61: #{multi_res_mlp_heads_forward.1} parent=1 // pred_fallthru
      _
    // Predicated region
    $region62: #{multi_res_mlp_heads_forward.1} parent=1 // pred_check
      _
    $region63: #{multi_res_mlp_heads_forward.1} parent=1 // pred_check_branch
      %202 = sbr.rel (0) target = $region65
    $region64: #{multi_res_mlp_heads_forward.1} parent=1 // pred_region
      %203 = dma.done [#allocation3], 8192
    $region65: #{multi_res_mlp_heads_forward.1} parent=1 // pred_fallthru
      _
    // Predicated region
    $region66: #{multi_res_mlp_heads_forward.1} parent=1 // pred_check
      _
    $region67: #{multi_res_mlp_heads_forward.1} parent=1 // pred_check_branch
      %205 = sbr.rel (0) target = $region69
    $region68: #{multi_res_mlp_heads_forward.1} parent=1 // pred_region
      %206 = dma.done [#allocation6], 2048
    $region69: #{multi_res_mlp_heads_forward.1} parent=1 // pred_fallthru
      _
    // Predicated region
    $region70: #{multi_res_mlp_heads_forward.1} parent=1 // pred_check
      _
    $region71: #{multi_res_mlp_heads_forward.1} parent=1 // pred_check_branch
      %208 = sbr.rel (0) target = $region73
    $region72: #{multi_res_mlp_heads_forward.1} parent=1 // pred_region
      %209 = dma.done [#allocation6], 768
    $region73: #{multi_res_mlp_heads_forward.1} parent=1 // pred_fallthru
      _
    // Predicated region
    $region74: #{multi_res_mlp_heads_forward.1} parent=1 // pred_check
      _
    $region75: #{multi_res_mlp_heads_forward.1} parent=1 // pred_check_branch
      %211 = sbr.rel (0) target = $region77
    $region76: #{multi_res_mlp_heads_forward.1} parent=1 // pred_region
      %212 = dma.done [#allocation9], 65536
    $region77: #{multi_res_mlp_heads_forward.1} parent=1 // pred_fallthru
      _
    // Predicated region
    $region78: #{multi_res_mlp_heads_forward.1} parent=1 // pred_check
      _
    $region79: #{multi_res_mlp_heads_forward.1} parent=1 // pred_check_branch
      %214 = sbr.rel (0) target = $region81
    $region80: #{multi_res_mlp_heads_forward.1} parent=1 // pred_region
      %215 = dma.done [#allocation9], 32
    $region81: #{multi_res_mlp_heads_forward.1} parent=1 // pred_fallthru
      _
    // Predicated region
    $region82: #{multi_res_mlp_heads_forward.1} parent=1 // pred_check
      _
    $region83: #{multi_res_mlp_heads_forward.1} parent=1 // pred_check_branch
      %217 = sbr.rel (0) target = $region85
    $region84: #{multi_res_mlp_heads_forward.1} parent=1 // pred_region
      %218 = dma.done [#allocation12], 2048
    $region85: #{multi_res_mlp_heads_forward.1} parent=1 // pred_fallthru
      _
    // Predicated region
    $region86: #{multi_res_mlp_heads_forward.1} parent=1 // pred_check
      _
    $region87: #{multi_res_mlp_heads_forward.1} parent=1 // pred_check_branch
      %220 = sbr.rel (0) target = $region89
    $region88: #{multi_res_mlp_heads_forward.1} parent=1 // pred_region
      %221 = dma.done [#allocation12], 16
    $region89: #{multi_res_mlp_heads_forward.1} parent=1 // pred_fallthru
      _
    // Predicated region
    $region90: #{multi_res_mlp_heads_forward.1} parent=1 // pred_check
      _
    $region91: #{multi_res_mlp_heads_forward.1} parent=1 // pred_check_branch
      %223 = sbr.rel (0) target = $region93
    $region92: #{multi_res_mlp_heads_forward.1} parent=1 // pred_region
      %224 = dma.done [#allocation15], 16384
    $region93: #{multi_res_mlp_heads_forward.1} parent=1 // pred_fallthru
      _
    // Predicated region
    $region94: #{multi_res_mlp_heads_forward.1} parent=1 // pred_check
      _
    $region95: #{multi_res_mlp_heads_forward.1} parent=1 // pred_check_branch
      %226 = sbr.rel (0) target = $region97
    $region96: #{multi_res_mlp_heads_forward.1} parent=1 // pred_region
      %227 = dma.done [#allocation15], 32
    $region97: #{multi_res_mlp_heads_forward.1} parent=1 // pred_fallthru
      _
    // Predicated region
    $region98: #{multi_res_mlp_heads_forward.1} parent=1 // pred_check
      _
    $region99: #{multi_res_mlp_heads_forward.1} parent=1 // pred_check_branch
      %229 = sbr.rel (0) target = $region101
    $region100: #{multi_res_mlp_heads_forward.1} parent=1 // pred_region
      %230 = dma.done [#allocation18], 2048
    $region101: #{multi_res_mlp_heads_forward.1} parent=1 // pred_fallthru
      _
    // Predicated region
    $region102: #{multi_res_mlp_heads_forward.1} parent=1 // pred_check
      _
    $region103: #{multi_res_mlp_heads_forward.1} parent=1 // pred_check_branch
      %232 = sbr.rel (0) target = $region105
    $region104: #{multi_res_mlp_heads_forward.1} parent=1 // pred_region
      %233 = dma.done [#allocation18], 16
    $region105: #{multi_res_mlp_heads_forward.1} parent=1 // pred_fallthru
      _
    // Predicated region
    $region106: #{multi_res_mlp_heads_forward.1} parent=1 // pred_check
      _
    $region107: #{multi_res_mlp_heads_forward.1} parent=1 // pred_check_branch
      %235 = sbr.rel (0) target = $region109
    $region108: #{multi_res_mlp_heads_forward.1} parent=1 // pred_region
      %236 = dma.done [#allocation21], 6144
    $region109: #{multi_res_mlp_heads_forward.1} parent=1 // pred_fallthru
      _
    // Predicated region
    $region110: #{multi_res_mlp_heads_forward.1} parent=1 // pred_check
      _
    $region111: #{multi_res_mlp_heads_forward.1} parent=1 // pred_check_branch
      %238 = sbr.rel (0) target = $region113
    $region112: #{multi_res_mlp_heads_forward.1} parent=1 // pred_region
      %239 = dma.done [#allocation21], 32
    $region113: #{multi_res_mlp_heads_forward.1} parent=1 // pred_fallthru
      _
    // Predicated region
    $region114: #{multi_res_mlp_heads_forward.1} parent=1 // pred_check
      _
    $region115: #{multi_res_mlp_heads_forward.1} parent=1 // pred_check_branch
      %241 = sbr.rel (0) target = $region117
    $region116: #{multi_res_mlp_heads_forward.1} parent=1 // pred_region
      %242 = dma.done [#allocation24], 2048
    $region117: #{multi_res_mlp_heads_forward.1} parent=1 // pred_fallthru
      _
    // Predicated region
    $region118: #{multi_res_mlp_heads_forward.1} parent=1 // pred_check
      _
    $region119: #{multi_res_mlp_heads_forward.1} parent=1 // pred_check_branch
      %244 = sbr.rel (0) target = $region121
    $region120: #{multi_res_mlp_heads_forward.1} parent=1 // pred_region
      %245 = dma.done [#allocation24], 16
    $region121: #{multi_res_mlp_heads_forward.1} parent=1 // pred_fallthru
      _
    %v247 = vld [vmem:[#allocation2] sm:$0xff]
    %v248 = vld [vmem:[#allocation2 + $0x8] sm:$0xff]
    %v249 = vld [vmem:[#allocation2 + $0x10] sm:$0xff]
    %v250 = vld [vmem:[#allocation2 + $0x18] sm:$0xff]
    %v251 = vld [vmem:[#allocation2 + $0x20] sm:$0xff]
    %v252 = vld [vmem:[#allocation2 + $0x28] sm:$0xff]
    %v253 = vld [vmem:[#allocation2 + $0x30] sm:$0xff]
    %v254 = vld [vmem:[#allocation2 + $0x38] sm:$0xff]
    %v255 = vld [vmem:[#allocation2 + $0x40] sm:$0xff]
    %v256 = vld [vmem:[#allocation2 + $0x48] sm:$0xff]
    %v257 = vld [vmem:[#allocation2 + $0x50] sm:$0xff]
    %v258 = vld [vmem:[#allocation2 + $0x58] sm:$0xff]
    %v259 = vld [vmem:[#allocation2 + $0x60] sm:$0xff]
    %v260 = vld [vmem:[#allocation2 + $0x68] sm:$0xff]
    %v261 = vld [vmem:[#allocation2 + $0x70] sm:$0xff]
    %v262 = vld [vmem:[#allocation2 + $0x78] sm:$0xff]
    %v263 = vld [vmem:[#allocation2 + $0x80] sm:$0xff]
    %v264 = vld [vmem:[#allocation2 + $0x88] sm:$0xff]
    %v265 = vld [vmem:[#allocation2 + $0x90] sm:$0xff]
    %v266 = vld [vmem:[#allocation2 + $0x98] sm:$0xff]
    %v267 = vld [vmem:[#allocation2 + $0xa0] sm:$0xff]
    %v268 = vld [vmem:[#allocation2 + $0xa8] sm:$0xff]
    %v269 = vld [vmem:[#allocation2 + $0xb0] sm:$0xff]
    %v270 = vld [vmem:[#allocation2 + $0xb8] sm:$0xff]
    %v271 = vld [vmem:[#allocation2 + $0xc0] sm:$0xff]
    %v272 = vld [vmem:[#allocation2 + $0xc8] sm:$0xff]
    %v273 = vld [vmem:[#allocation2 + $0xd0] sm:$0xff]
    %v274 = vld [vmem:[#allocation2 + $0xd8] sm:$0xff]
    %v275 = vld [vmem:[#allocation2 + $0xe0] sm:$0xff]
    %v276 = vld [vmem:[#allocation2 + $0xe8] sm:$0xff]
    %v277 = vld [vmem:[#allocation2 + $0xf0] sm:$0xff]
    %v278 = vld [vmem:[#allocation2 + $0xf8] sm:$0xff]
    %v279 = vld [vmem:[#allocation2 + $0x100] sm:$0xff]
    %v280 = vld [vmem:[#allocation2 + $0x108] sm:$0xff]
    %v281 = vld [vmem:[#allocation2 + $0x110] sm:$0xff]
    %v282 = vld [vmem:[#allocation2 + $0x118] sm:$0xff]
    %v283 = vld [vmem:[#allocation2 + $0x120] sm:$0xff]
    %v284 = vld [vmem:[#allocation2 + $0x128] sm:$0xff]
    %v285 = vld [vmem:[#allocation2 + $0x130] sm:$0xff]
    %v286 = vld [vmem:[#allocation2 + $0x138] sm:$0xff]
    %v287 = vld [vmem:[#allocation2 + $0x140] sm:$0xff]
    %v288 = vld [vmem:[#allocation2 + $0x148] sm:$0xff]
    %v289 = vld [vmem:[#allocation2 + $0x150] sm:$0xff]
    %v290 = vld [vmem:[#allocation2 + $0x158] sm:$0xff]
    %v291 = vld [vmem:[#allocation2 + $0x160] sm:$0xff]
    %v292 = vld [vmem:[#allocation2 + $0x168] sm:$0xff]
    %v293 = vld [vmem:[#allocation2 + $0x170] sm:$0xff]
    %v294 = vld [vmem:[#allocation2 + $0x178] sm:$0xff]
    %v295 = vld [vmem:[#allocation2 + $0x180] sm:$0xff]
    %v296 = vld [vmem:[#allocation2 + $0x188] sm:$0xff]
    %v297 = vld [vmem:[#allocation2 + $0x190] sm:$0xff]
    %v298 = vld [vmem:[#allocation2 + $0x198] sm:$0xff]
    %v299 = vld [vmem:[#allocation2 + $0x1a0] sm:$0xff]
    %v300 = vld [vmem:[#allocation2 + $0x1a8] sm:$0xff]
    %v301 = vld [vmem:[#allocation2 + $0x1b0] sm:$0xff]
    %v302 = vld [vmem:[#allocation2 + $0x1b8] sm:$0xff]
    %v303 = vld [vmem:[#allocation2 + $0x1c0] sm:$0xff]
    %v304 = vld [vmem:[#allocation2 + $0x1c8] sm:$0xff]
    %v305 = vld [vmem:[#allocation2 + $0x1d0] sm:$0xff]
    %v306 = vld [vmem:[#allocation2 + $0x1d8] sm:$0xff]
    %v307 = vld [vmem:[#allocation2 + $0x1e0] sm:$0xff]
    %v308 = vld [vmem:[#allocation2 + $0x1e8] sm:$0xff]
    %v309 = vld [vmem:[#allocation2 + $0x1f0] sm:$0xff]
    %v310 = vld [vmem:[#allocation2 + $0x1f8] sm:$0xff]
    %v311 = vpack.c.bf16 %v279, %v247
    %v312 = vpack.c.bf16 %v280, %v248
    %v313 = vpack.c.bf16 %v281, %v249
    %v314 = vpack.c.bf16 %v282, %v250
    %v315 = vpack.c.bf16 %v283, %v251
    %v316 = vpack.c.bf16 %v284, %v252
    %v317 = vpack.c.bf16 %v285, %v253
    %v318 = vpack.c.bf16 %v286, %v254
    %v319 = vpack.c.bf16 %v287, %v255
    %v320 = vpack.c.bf16 %v288, %v256
    %v321 = vpack.c.bf16 %v289, %v257
    %v322 = vpack.c.bf16 %v290, %v258
    %v323 = vpack.c.bf16 %v291, %v259
    %v324 = vpack.c.bf16 %v292, %v260
    %v325 = vpack.c.bf16 %v293, %v261
    %v326 = vpack.c.bf16 %v294, %v262
    %v327 = vpack.c.bf16 %v295, %v263
    %v328 = vpack.c.bf16 %v296, %v264
    %v329 = vpack.c.bf16 %v297, %v265
    %v330 = vpack.c.bf16 %v298, %v266
    %v331 = vpack.c.bf16 %v299, %v267
    %v332 = vpack.c.bf16 %v300, %v268
    %v333 = vpack.c.bf16 %v301, %v269
    %v334 = vpack.c.bf16 %v302, %v270
    %v335 = vpack.c.bf16 %v303, %v271
    %v336 = vpack.c.bf16 %v304, %v272
    %v337 = vpack.c.bf16 %v305, %v273
    %v338 = vpack.c.bf16 %v306, %v274
    %v339 = vpack.c.bf16 %v307, %v275
    %v340 = vpack.c.bf16 %v308, %v276
    %v341 = vpack.c.bf16 %v309, %v277
    %v342 = vpack.c.bf16 %v310, %v278
    %v343 = vld [vmem:[#allocation8] sm:$0xff]
    %v344 = vld [vmem:[#allocation8 + $0x8] sm:$0xff]
    %v345 = vld [vmem:[#allocation8 + $0x10] sm:$0xff]
    %v346 = vld [vmem:[#allocation8 + $0x18] sm:$0xff]
    %v347 = vld [vmem:[#allocation8 + $0x20] sm:$0xff]
    %v348 = vld [vmem:[#allocation8 + $0x28] sm:$0xff]
    %v349 = vld [vmem:[#allocation8 + $0x30] sm:$0xff]
    %v350 = vld [vmem:[#allocation8 + $0x38] sm:$0xff]
    %v351 = vld [vmem:[#allocation8 + $0x40] sm:$0xff]
    %v352 = vld [vmem:[#allocation8 + $0x48] sm:$0xff]
    %v353 = vld [vmem:[#allocation8 + $0x50] sm:$0xff]
    %v354 = vld [vmem:[#allocation8 + $0x58] sm:$0xff]
    %v355 = vld [vmem:[#allocation8 + $0x60] sm:$0xff]
    %v356 = vld [vmem:[#allocation8 + $0x68] sm:$0xff]
    %v357 = vld [vmem:[#allocation8 + $0x70] sm:$0xff]
    %v358 = vld [vmem:[#allocation8 + $0x78] sm:$0xff]
    %v359 = vld [vmem:[#allocation8 + $0x80] sm:$0xff]
    %v360 = vld [vmem:[#allocation8 + $0x88] sm:$0xff]
    %v361 = vld [vmem:[#allocation8 + $0x90] sm:$0xff]
    %v362 = vld [vmem:[#allocation8 + $0x98] sm:$0xff]
    %v363 = vld [vmem:[#allocation8 + $0xa0] sm:$0xff]
    %v364 = vld [vmem:[#allocation8 + $0xa8] sm:$0xff]
    %v365 = vld [vmem:[#allocation8 + $0xb0] sm:$0xff]
    %v366 = vld [vmem:[#allocation8 + $0xb8] sm:$0xff]
    %v367 = vld [vmem:[#allocation8 + $0xc0] sm:$0xff]
    %v368 = vld [vmem:[#allocation8 + $0xc8] sm:$0xff]
    %v369 = vld [vmem:[#allocation8 + $0xd0] sm:$0xff]
    %v370 = vld [vmem:[#allocation8 + $0xd8] sm:$0xff]
    %v371 = vld [vmem:[#allocation8 + $0xe0] sm:$0xff]
    %v372 = vld [vmem:[#allocation8 + $0xe8] sm:$0xff]
    %v373 = vld [vmem:[#allocation8 + $0xf0] sm:$0xff]
    %v374 = vld [vmem:[#allocation8 + $0xf8] sm:$0xff]
    %v375 = vld [vmem:[#allocation8 + $0x100] sm:$0xff]
    %v376 = vld [vmem:[#allocation8 + $0x108] sm:$0xff]
    %v377 = vld [vmem:[#allocation8 + $0x110] sm:$0xff]
    %v378 = vld [vmem:[#allocation8 + $0x118] sm:$0xff]
    %v379 = vld [vmem:[#allocation8 + $0x120] sm:$0xff]
    %v380 = vld [vmem:[#allocation8 + $0x128] sm:$0xff]
    %v381 = vld [vmem:[#allocation8 + $0x130] sm:$0xff]
    %v382 = vld [vmem:[#allocation8 + $0x138] sm:$0xff]
    %v383 = vld [vmem:[#allocation8 + $0x140] sm:$0xff]
    %v384 = vld [vmem:[#allocation8 + $0x148] sm:$0xff]
    %v385 = vld [vmem:[#allocation8 + $0x150] sm:$0xff]
    %v386 = vld [vmem:[#allocation8 + $0x158] sm:$0xff]
    %v387 = vld [vmem:[#allocation8 + $0x160] sm:$0xff]
    %v388 = vld [vmem:[#allocation8 + $0x168] sm:$0xff]
    %v389 = vld [vmem:[#allocation8 + $0x170] sm:$0xff]
    %v390 = vld [vmem:[#allocation8 + $0x178] sm:$0xff]
    %v391 = vld [vmem:[#allocation8 + $0x180] sm:$0xff]
    %v392 = vld [vmem:[#allocation8 + $0x188] sm:$0xff]
    %v393 = vld [vmem:[#allocation8 + $0x190] sm:$0xff]
    %v394 = vld [vmem:[#allocation8 + $0x198] sm:$0xff]
    %v395 = vld [vmem:[#allocation8 + $0x1a0] sm:$0xff]
    %v396 = vld [vmem:[#allocation8 + $0x1a8] sm:$0xff]
    %v397 = vld [vmem:[#allocation8 + $0x1b0] sm:$0xff]
    %v398 = vld [vmem:[#allocation8 + $0x1b8] sm:$0xff]
    %v399 = vld [vmem:[#allocation8 + $0x1c0] sm:$0xff]
    %v400 = vld [vmem:[#allocation8 + $0x1c8] sm:$0xff]
    %v401 = vld [vmem:[#allocation8 + $0x1d0] sm:$0xff]
    %v402 = vld [vmem:[#allocation8 + $0x1d8] sm:$0xff]
    %v403 = vld [vmem:[#allocation8 + $0x1e0] sm:$0xff]
    %v404 = vld [vmem:[#allocation8 + $0x1e8] sm:$0xff]
    %v405 = vld [vmem:[#allocation8 + $0x1f0] sm:$0xff]
    %v406 = vld [vmem:[#allocation8 + $0x1f8] sm:$0xff]
    %v407 = vld [vmem:[#allocation8 + $0x200] sm:$0xff]
    %v408 = vld [vmem:[#allocation8 + $0x208] sm:$0xff]
    %v409 = vld [vmem:[#allocation8 + $0x210] sm:$0xff]
    %v410 = vld [vmem:[#allocation8 + $0x218] sm:$0xff]
    %v411 = vld [vmem:[#allocation8 + $0x220] sm:$0xff]
    %v412 = vld [vmem:[#allocation8 + $0x228] sm:$0xff]
    %v413 = vld [vmem:[#allocation8 + $0x230] sm:$0xff]
    %v414 = vld [vmem:[#allocation8 + $0x238] sm:$0xff]
    %v415 = vld [vmem:[#allocation8 + $0x240] sm:$0xff]
    %v416 = vld [vmem:[#allocation8 + $0x248] sm:$0xff]
    %v417 = vld [vmem:[#allocation8 + $0x250] sm:$0xff]
    %v418 = vld [vmem:[#allocation8 + $0x258] sm:$0xff]
    %v419 = vld [vmem:[#allocation8 + $0x260] sm:$0xff]
    %v420 = vld [vmem:[#allocation8 + $0x268] sm:$0xff]
    %v421 = vld [vmem:[#allocation8 + $0x270] sm:$0xff]
    %v422 = vld [vmem:[#allocation8 + $0x278] sm:$0xff]
    %v423 = vld [vmem:[#allocation8 + $0x280] sm:$0xff]
    %v424 = vld [vmem:[#allocation8 + $0x288] sm:$0xff]
    %v425 = vld [vmem:[#allocation8 + $0x290] sm:$0xff]
    %v426 = vld [vmem:[#allocation8 + $0x298] sm:$0xff]
    %v427 = vld [vmem:[#allocation8 + $0x2a0] sm:$0xff]
    %v428 = vld [vmem:[#allocation8 + $0x2a8] sm:$0xff]
    %v429 = vld [vmem:[#allocation8 + $0x2b0] sm:$0xff]
    %v430 = vld [vmem:[#allocation8 + $0x2b8] sm:$0xff]
    %v431 = vld [vmem:[#allocation8 + $0x2c0] sm:$0xff]
    %v432 = vld [vmem:[#allocation8 + $0x2c8] sm:$0xff]
    %v433 = vld [vmem:[#allocation8 + $0x2d0] sm:$0xff]
    %v434 = vld [vmem:[#allocation8 + $0x2d8] sm:$0xff]
    %v435 = vld [vmem:[#allocation8 + $0x2e0] sm:$0xff]
    %v436 = vld [vmem:[#allocation8 + $0x2e8] sm:$0xff]
    %v437 = vld [vmem:[#allocation8 + $0x2f0] sm:$0xff]
    %v438 = vld [vmem:[#allocation8 + $0x2f8] sm:$0xff]
    %v439 = vld [vmem:[#allocation8 + $0x300] sm:$0xff]
    %v440 = vld [vmem:[#allocation8 + $0x308] sm:$0xff]
    %v441 = vld [vmem:[#allocation8 + $0x310] sm:$0xff]
    %v442 = vld [vmem:[#allocation8 + $0x318] sm:$0xff]
    %v443 = vld [vmem:[#allocation8 + $0x320] sm:$0xff]
    %v444 = vld [vmem:[#allocation8 + $0x328] sm:$0xff]
    %v445 = vld [vmem:[#allocation8 + $0x330] sm:$0xff]
    %v446 = vld [vmem:[#allocation8 + $0x338] sm:$0xff]
    %v447 = vld [vmem:[#allocation8 + $0x340] sm:$0xff]
    %v448 = vld [vmem:[#allocation8 + $0x348] sm:$0xff]
    %v449 = vld [vmem:[#allocation8 + $0x350] sm:$0xff]
    %v450 = vld [vmem:[#allocation8 + $0x358] sm:$0xff]
    %v451 = vld [vmem:[#allocation8 + $0x360] sm:$0xff]
    %v452 = vld [vmem:[#allocation8 + $0x368] sm:$0xff]
    %v453 = vld [vmem:[#allocation8 + $0x370] sm:$0xff]
    %v454 = vld [vmem:[#allocation8 + $0x378] sm:$0xff]
    %v455 = vld [vmem:[#allocation8 + $0x380] sm:$0xff]
    %v456 = vld [vmem:[#allocation8 + $0x388] sm:$0xff]
    %v457 = vld [vmem:[#allocation8 + $0x390] sm:$0xff]
    %v458 = vld [vmem:[#allocation8 + $0x398] sm:$0xff]
    %v459 = vld [vmem:[#allocation8 + $0x3a0] sm:$0xff]
    %v460 = vld [vmem:[#allocation8 + $0x3a8] sm:$0xff]
    %v461 = vld [vmem:[#allocation8 + $0x3b0] sm:$0xff]
    %v462 = vld [vmem:[#allocation8 + $0x3b8] sm:$0xff]
    %v463 = vld [vmem:[#allocation8 + $0x3c0] sm:$0xff]
    %v464 = vld [vmem:[#allocation8 + $0x3c8] sm:$0xff]
    %v465 = vld [vmem:[#allocation8 + $0x3d0] sm:$0xff]
    %v466 = vld [vmem:[#allocation8 + $0x3d8] sm:$0xff]
    %v467 = vld [vmem:[#allocation8 + $0x3e0] sm:$0xff]
    %v468 = vld [vmem:[#allocation8 + $0x3e8] sm:$0xff]
    %v469 = vld [vmem:[#allocation8 + $0x3f0] sm:$0xff]
    %v470 = vld [vmem:[#allocation8 + $0x3f8] sm:$0xff]
    %v471 = vld [vmem:[#allocation8 + $0x400] sm:$0xff]
    %v472 = vld [vmem:[#allocation8 + $0x408] sm:$0xff]
    %v473 = vld [vmem:[#allocation8 + $0x410] sm:$0xff]
    %v474 = vld [vmem:[#allocation8 + $0x418] sm:$0xff]
    %v475 = vld [vmem:[#allocation8 + $0x420] sm:$0xff]
    %v476 = vld [vmem:[#allocation8 + $0x428] sm:$0xff]
    %v477 = vld [vmem:[#allocation8 + $0x430] sm:$0xff]
    %v478 = vld [vmem:[#allocation8 + $0x438] sm:$0xff]
    %v479 = vld [vmem:[#allocation8 + $0x440] sm:$0xff]
    %v480 = vld [vmem:[#allocation8 + $0x448] sm:$0xff]
    %v481 = vld [vmem:[#allocation8 + $0x450] sm:$0xff]
    %v482 = vld [vmem:[#allocation8 + $0x458] sm:$0xff]
    %v483 = vld [vmem:[#allocation8 + $0x460] sm:$0xff]
    %v484 = vld [vmem:[#allocation8 + $0x468] sm:$0xff]
    %v485 = vld [vmem:[#allocation8 + $0x470] sm:$0xff]
    %v486 = vld [vmem:[#allocation8 + $0x478] sm:$0xff]
    %v487 = vld [vmem:[#allocation8 + $0x480] sm:$0xff]
    %v488 = vld [vmem:[#allocation8 + $0x488] sm:$0xff]
    %v489 = vld [vmem:[#allocation8 + $0x490] sm:$0xff]
    %v490 = vld [vmem:[#allocation8 + $0x498] sm:$0xff]
    %v491 = vld [vmem:[#allocation8 + $0x4a0] sm:$0xff]
    %v492 = vld [vmem:[#allocation8 + $0x4a8] sm:$0xff]
    %v493 = vld [vmem:[#allocation8 + $0x4b0] sm:$0xff]
    %v494 = vld [vmem:[#allocation8 + $0x4b8] sm:$0xff]
    %v495 = vld [vmem:[#allocation8 + $0x4c0] sm:$0xff]
    %v496 = vld [vmem:[#allocation8 + $0x4c8] sm:$0xff]
    %v497 = vld [vmem:[#allocation8 + $0x4d0] sm:$0xff]
    %v498 = vld [vmem:[#allocation8 + $0x4d8] sm:$0xff]
    %v499 = vld [vmem:[#allocation8 + $0x4e0] sm:$0xff]
    %v500 = vld [vmem:[#allocation8 + $0x4e8] sm:$0xff]
    %v501 = vld [vmem:[#allocation8 + $0x4f0] sm:$0xff]
    %v502 = vld [vmem:[#allocation8 + $0x4f8] sm:$0xff]
    %v503 = vld [vmem:[#allocation8 + $0x500] sm:$0xff]
    %v504 = vld [vmem:[#allocation8 + $0x508] sm:$0xff]
    %v505 = vld [vmem:[#allocation8 + $0x510] sm:$0xff]
    %v506 = vld [vmem:[#allocation8 + $0x518] sm:$0xff]
    %v507 = vld [vmem:[#allocation8 + $0x520] sm:$0xff]
    %v508 = vld [vmem:[#allocation8 + $0x528] sm:$0xff]
    %v509 = vld [vmem:[#allocation8 + $0x530] sm:$0xff]
    %v510 = vld [vmem:[#allocation8 + $0x538] sm:$0xff]
    %v511 = vld [vmem:[#allocation8 + $0x540] sm:$0xff]
    %v512 = vld [vmem:[#allocation8 + $0x548] sm:$0xff]
    %v513 = vld [vmem:[#allocation8 + $0x550] sm:$0xff]
    %v514 = vld [vmem:[#allocation8 + $0x558] sm:$0xff]
    %v515 = vld [vmem:[#allocation8 + $0x560] sm:$0xff]
    %v516 = vld [vmem:[#allocation8 + $0x568] sm:$0xff]
    %v517 = vld [vmem:[#allocation8 + $0x570] sm:$0xff]
    %v518 = vld [vmem:[#allocation8 + $0x578] sm:$0xff]
    %v519 = vld [vmem:[#allocation8 + $0x580] sm:$0xff]
    %v520 = vld [vmem:[#allocation8 + $0x588] sm:$0xff]
    %v521 = vld [vmem:[#allocation8 + $0x590] sm:$0xff]
    %v522 = vld [vmem:[#allocation8 + $0x598] sm:$0xff]
    %v523 = vld [vmem:[#allocation8 + $0x5a0] sm:$0xff]
    %v524 = vld [vmem:[#allocation8 + $0x5a8] sm:$0xff]
    %v525 = vld [vmem:[#allocation8 + $0x5b0] sm:$0xff]
    %v526 = vld [vmem:[#allocation8 + $0x5b8] sm:$0xff]
    %v527 = vld [vmem:[#allocation8 + $0x5c0] sm:$0xff]
    %v528 = vld [vmem:[#allocation8 + $0x5c8] sm:$0xff]
    %v529 = vld [vmem:[#allocation8 + $0x5d0] sm:$0xff]
    %v530 = vld [vmem:[#allocation8 + $0x5d8] sm:$0xff]
    %v531 = vld [vmem:[#allocation8 + $0x5e0] sm:$0xff]
    %v532 = vld [vmem:[#allocation8 + $0x5e8] sm:$0xff]
    %v533 = vld [vmem:[#allocation8 + $0x5f0] sm:$0xff]
    %v534 = vld [vmem:[#allocation8 + $0x5f8] sm:$0xff]
    %v535 = vld [vmem:[#allocation8 + $0x600] sm:$0xff]
    %v536 = vld [vmem:[#allocation8 + $0x608] sm:$0xff]
    %v537 = vld [vmem:[#allocation8 + $0x610] sm:$0xff]
    %v538 = vld [vmem:[#allocation8 + $0x618] sm:$0xff]
    %v539 = vld [vmem:[#allocation8 + $0x620] sm:$0xff]
    %v540 = vld [vmem:[#allocation8 + $0x628] sm:$0xff]
    %v541 = vld [vmem:[#allocation8 + $0x630] sm:$0xff]
    %v542 = vld [vmem:[#allocation8 + $0x638] sm:$0xff]
    %v543 = vld [vmem:[#allocation8 + $0x640] sm:$0xff]
    %v544 = vld [vmem:[#allocation8 + $0x648] sm:$0xff]
    %v545 = vld [vmem:[#allocation8 + $0x650] sm:$0xff]
    %v546 = vld [vmem:[#allocation8 + $0x658] sm:$0xff]
    %v547 = vld [vmem:[#allocation8 + $0x660] sm:$0xff]
    %v548 = vld [vmem:[#allocation8 + $0x668] sm:$0xff]
    %v549 = vld [vmem:[#allocation8 + $0x670] sm:$0xff]
    %v550 = vld [vmem:[#allocation8 + $0x678] sm:$0xff]
    %v551 = vld [vmem:[#allocation8 + $0x680] sm:$0xff]
    %v552 = vld [vmem:[#allocation8 + $0x688] sm:$0xff]
    %v553 = vld [vmem:[#allocation8 + $0x690] sm:$0xff]
    %v554 = vld [vmem:[#allocation8 + $0x698] sm:$0xff]
    %v555 = vld [vmem:[#allocation8 + $0x6a0] sm:$0xff]
    %v556 = vld [vmem:[#allocation8 + $0x6a8] sm:$0xff]
    %v557 = vld [vmem:[#allocation8 + $0x6b0] sm:$0xff]
    %v558 = vld [vmem:[#allocation8 + $0x6b8] sm:$0xff]
    %v559 = vld [vmem:[#allocation8 + $0x6c0] sm:$0xff]
    %v560 = vld [vmem:[#allocation8 + $0x6c8] sm:$0xff]
    %v561 = vld [vmem:[#allocation8 + $0x6d0] sm:$0xff]
    %v562 = vld [vmem:[#allocation8 + $0x6d8] sm:$0xff]
    %v563 = vld [vmem:[#allocation8 + $0x6e0] sm:$0xff]
    %v564 = vld [vmem:[#allocation8 + $0x6e8] sm:$0xff]
    %v565 = vld [vmem:[#allocation8 + $0x6f0] sm:$0xff]
    %v566 = vld [vmem:[#allocation8 + $0x6f8] sm:$0xff]
    %v567 = vld [vmem:[#allocation8 + $0x700] sm:$0xff]
    %v568 = vld [vmem:[#allocation8 + $0x708] sm:$0xff]
    %v569 = vld [vmem:[#allocation8 + $0x710] sm:$0xff]
    %v570 = vld [vmem:[#allocation8 + $0x718] sm:$0xff]
    %v571 = vld [vmem:[#allocation8 + $0x720] sm:$0xff]
    %v572 = vld [vmem:[#allocation8 + $0x728] sm:$0xff]
    %v573 = vld [vmem:[#allocation8 + $0x730] sm:$0xff]
    %v574 = vld [vmem:[#allocation8 + $0x738] sm:$0xff]
    %v575 = vld [vmem:[#allocation8 + $0x740] sm:$0xff]
    %v576 = vld [vmem:[#allocation8 + $0x748] sm:$0xff]
    %v577 = vld [vmem:[#allocation8 + $0x750] sm:$0xff]
    %v578 = vld [vmem:[#allocation8 + $0x758] sm:$0xff]
    %v579 = vld [vmem:[#allocation8 + $0x760] sm:$0xff]
    %v580 = vld [vmem:[#allocation8 + $0x768] sm:$0xff]
    %v581 = vld [vmem:[#allocation8 + $0x770] sm:$0xff]
    %v582 = vld [vmem:[#allocation8 + $0x778] sm:$0xff]
    %v583 = vld [vmem:[#allocation8 + $0x780] sm:$0xff]
    %v584 = vld [vmem:[#allocation8 + $0x788] sm:$0xff]
    %v585 = vld [vmem:[#allocation8 + $0x790] sm:$0xff]
    %v586 = vld [vmem:[#allocation8 + $0x798] sm:$0xff]
    %v587 = vld [vmem:[#allocation8 + $0x7a0] sm:$0xff]
    %v588 = vld [vmem:[#allocation8 + $0x7a8] sm:$0xff]
    %v589 = vld [vmem:[#allocation8 + $0x7b0] sm:$0xff]
    %v590 = vld [vmem:[#allocation8 + $0x7b8] sm:$0xff]
    %v591 = vld [vmem:[#allocation8 + $0x7c0] sm:$0xff]
    %v592 = vld [vmem:[#allocation8 + $0x7c8] sm:$0xff]
    %v593 = vld [vmem:[#allocation8 + $0x7d0] sm:$0xff]
    %v594 = vld [vmem:[#allocation8 + $0x7d8] sm:$0xff]
    %v595 = vld [vmem:[#allocation8 + $0x7e0] sm:$0xff]
    %v596 = vld [vmem:[#allocation8 + $0x7e8] sm:$0xff]
    %v597 = vld [vmem:[#allocation8 + $0x7f0] sm:$0xff]
    %v598 = vld [vmem:[#allocation8 + $0x7f8] sm:$0xff]
    %v599 = vld [vmem:[#allocation8 + $0x800] sm:$0xff]
    %v600 = vld [vmem:[#allocation8 + $0x808] sm:$0xff]
    %v601 = vld [vmem:[#allocation8 + $0x810] sm:$0xff]
    %v602 = vld [vmem:[#allocation8 + $0x818] sm:$0xff]
    %v603 = vld [vmem:[#allocation8 + $0x820] sm:$0xff]
    %v604 = vld [vmem:[#allocation8 + $0x828] sm:$0xff]
    %v605 = vld [vmem:[#allocation8 + $0x830] sm:$0xff]
    %v606 = vld [vmem:[#allocation8 + $0x838] sm:$0xff]
    %v607 = vld [vmem:[#allocation8 + $0x840] sm:$0xff]
    %v608 = vld [vmem:[#allocation8 + $0x848] sm:$0xff]
    %v609 = vld [vmem:[#allocation8 + $0x850] sm:$0xff]
    %v610 = vld [vmem:[#allocation8 + $0x858] sm:$0xff]
    %v611 = vld [vmem:[#allocation8 + $0x860] sm:$0xff]
    %v612 = vld [vmem:[#allocation8 + $0x868] sm:$0xff]
    %v613 = vld [vmem:[#allocation8 + $0x870] sm:$0xff]
    %v614 = vld [vmem:[#allocation8 + $0x878] sm:$0xff]
    %v615 = vld [vmem:[#allocation8 + $0x880] sm:$0xff]
    %v616 = vld [vmem:[#allocation8 + $0x888] sm:$0xff]
    %v617 = vld [vmem:[#allocation8 + $0x890] sm:$0xff]
    %v618 = vld [vmem:[#allocation8 + $0x898] sm:$0xff]
    %v619 = vld [vmem:[#allocation8 + $0x8a0] sm:$0xff]
    %v620 = vld [vmem:[#allocation8 + $0x8a8] sm:$0xff]
    %v621 = vld [vmem:[#allocation8 + $0x8b0] sm:$0xff]
    %v622 = vld [vmem:[#allocation8 + $0x8b8] sm:$0xff]
    %v623 = vld [vmem:[#allocation8 + $0x8c0] sm:$0xff]
    %v624 = vld [vmem:[#allocation8 + $0x8c8] sm:$0xff]
    %v625 = vld [vmem:[#allocation8 + $0x8d0] sm:$0xff]
    %v626 = vld [vmem:[#allocation8 + $0x8d8] sm:$0xff]
    %v627 = vld [vmem:[#allocation8 + $0x8e0] sm:$0xff]
    %v628 = vld [vmem:[#allocation8 + $0x8e8] sm:$0xff]
    %v629 = vld [vmem:[#allocation8 + $0x8f0] sm:$0xff]
    %v630 = vld [vmem:[#allocation8 + $0x8f8] sm:$0xff]
    %v631 = vld [vmem:[#allocation8 + $0x900] sm:$0xff]
    %v632 = vld [vmem:[#allocation8 + $0x908] sm:$0xff]
    %v633 = vld [vmem:[#allocation8 + $0x910] sm:$0xff]
    %v634 = vld [vmem:[#allocation8 + $0x918] sm:$0xff]
    %v635 = vld [vmem:[#allocation8 + $0x920] sm:$0xff]
    %v636 = vld [vmem:[#allocation8 + $0x928] sm:$0xff]
    %v637 = vld [vmem:[#allocation8 + $0x930] sm:$0xff]
    %v638 = vld [vmem:[#allocation8 + $0x938] sm:$0xff]
    %v639 = vld [vmem:[#allocation8 + $0x940] sm:$0xff]
    %v640 = vld [vmem:[#allocation8 + $0x948] sm:$0xff]
    %v641 = vld [vmem:[#allocation8 + $0x950] sm:$0xff]
    %v642 = vld [vmem:[#allocation8 + $0x958] sm:$0xff]
    %v643 = vld [vmem:[#allocation8 + $0x960] sm:$0xff]
    %v644 = vld [vmem:[#allocation8 + $0x968] sm:$0xff]
    %v645 = vld [vmem:[#allocation8 + $0x970] sm:$0xff]
    %v646 = vld [vmem:[#allocation8 + $0x978] sm:$0xff]
    %v647 = vld [vmem:[#allocation8 + $0x980] sm:$0xff]
    %v648 = vld [vmem:[#allocation8 + $0x988] sm:$0xff]
    %v649 = vld [vmem:[#allocation8 + $0x990] sm:$0xff]
    %v650 = vld [vmem:[#allocation8 + $0x998] sm:$0xff]
    %v651 = vld [vmem:[#allocation8 + $0x9a0] sm:$0xff]
    %v652 = vld [vmem:[#allocation8 + $0x9a8] sm:$0xff]
    %v653 = vld [vmem:[#allocation8 + $0x9b0] sm:$0xff]
    %v654 = vld [vmem:[#allocation8 + $0x9b8] sm:$0xff]
    %v655 = vld [vmem:[#allocation8 + $0x9c0] sm:$0xff]
    %v656 = vld [vmem:[#allocation8 + $0x9c8] sm:$0xff]
    %v657 = vld [vmem:[#allocation8 + $0x9d0] sm:$0xff]
    %v658 = vld [vmem:[#allocation8 + $0x9d8] sm:$0xff]
    %v659 = vld [vmem:[#allocation8 + $0x9e0] sm:$0xff]
    %v660 = vld [vmem:[#allocation8 + $0x9e8] sm:$0xff]
    %v661 = vld [vmem:[#allocation8 + $0x9f0] sm:$0xff]
    %v662 = vld [vmem:[#allocation8 + $0x9f8] sm:$0xff]
    %v663 = vld [vmem:[#allocation8 + $0xa00] sm:$0xff]
    %v664 = vld [vmem:[#allocation8 + $0xa08] sm:$0xff]
    %v665 = vld [vmem:[#allocation8 + $0xa10] sm:$0xff]
    %v666 = vld [vmem:[#allocation8 + $0xa18] sm:$0xff]
    %v667 = vld [vmem:[#allocation8 + $0xa20] sm:$0xff]
    %v668 = vld [vmem:[#allocation8 + $0xa28] sm:$0xff]
    %v669 = vld [vmem:[#allocation8 + $0xa30] sm:$0xff]
    %v670 = vld [vmem:[#allocation8 + $0xa38] sm:$0xff]
    %v671 = vld [vmem:[#allocation8 + $0xa40] sm:$0xff]
    %v672 = vld [vmem:[#allocation8 + $0xa48] sm:$0xff]
    %v673 = vld [vmem:[#allocation8 + $0xa50] sm:$0xff]
    %v674 = vld [vmem:[#allocation8 + $0xa58] sm:$0xff]
    %v675 = vld [vmem:[#allocation8 + $0xa60] sm:$0xff]
    %v676 = vld [vmem:[#allocation8 + $0xa68] sm:$0xff]
    %v677 = vld [vmem:[#allocation8 + $0xa70] sm:$0xff]
    %v678 = vld [vmem:[#allocation8 + $0xa78] sm:$0xff]
    %v679 = vld [vmem:[#allocation8 + $0xa80] sm:$0xff]
    %v680 = vld [vmem:[#allocation8 + $0xa88] sm:$0xff]
    %v681 = vld [vmem:[#allocation8 + $0xa90] sm:$0xff]
    %v682 = vld [vmem:[#allocation8 + $0xa98] sm:$0xff]
    %v683 = vld [vmem:[#allocation8 + $0xaa0] sm:$0xff]
    %v684 = vld [vmem:[#allocation8 + $0xaa8] sm:$0xff]
    %v685 = vld [vmem:[#allocation8 + $0xab0] sm:$0xff]
    %v686 = vld [vmem:[#allocation8 + $0xab8] sm:$0xff]
    %v687 = vld [vmem:[#allocation8 + $0xac0] sm:$0xff]
    %v688 = vld [vmem:[#allocation8 + $0xac8] sm:$0xff]
    %v689 = vld [vmem:[#allocation8 + $0xad0] sm:$0xff]
    %v690 = vld [vmem:[#allocation8 + $0xad8] sm:$0xff]
    %v691 = vld [vmem:[#allocation8 + $0xae0] sm:$0xff]
    %v692 = vld [vmem:[#allocation8 + $0xae8] sm:$0xff]
    %v693 = vld [vmem:[#allocation8 + $0xaf0] sm:$0xff]
    %v694 = vld [vmem:[#allocation8 + $0xaf8] sm:$0xff]
    %v695 = vld [vmem:[#allocation8 + $0xb00] sm:$0xff]
    %v696 = vld [vmem:[#allocation8 + $0xb08] sm:$0xff]
    %v697 = vld [vmem:[#allocation8 + $0xb10] sm:$0xff]
    %v698 = vld [vmem:[#allocation8 + $0xb18] sm:$0xff]
    %v699 = vld [vmem:[#allocation8 + $0xb20] sm:$0xff]
    %v700 = vld [vmem:[#allocation8 + $0xb28] sm:$0xff]
    %v701 = vld [vmem:[#allocation8 + $0xb30] sm:$0xff]
    %v702 = vld [vmem:[#allocation8 + $0xb38] sm:$0xff]
    %v703 = vld [vmem:[#allocation8 + $0xb40] sm:$0xff]
    %v704 = vld [vmem:[#allocation8 + $0xb48] sm:$0xff]
    %v705 = vld [vmem:[#allocation8 + $0xb50] sm:$0xff]
    %v706 = vld [vmem:[#allocation8 + $0xb58] sm:$0xff]
    %v707 = vld [vmem:[#allocation8 + $0xb60] sm:$0xff]
    %v708 = vld [vmem:[#allocation8 + $0xb68] sm:$0xff]
    %v709 = vld [vmem:[#allocation8 + $0xb70] sm:$0xff]
    %v710 = vld [vmem:[#allocation8 + $0xb78] sm:$0xff]
    %v711 = vld [vmem:[#allocation8 + $0xb80] sm:$0xff]
    %v712 = vld [vmem:[#allocation8 + $0xb88] sm:$0xff]
    %v713 = vld [vmem:[#allocation8 + $0xb90] sm:$0xff]
    %v714 = vld [vmem:[#allocation8 + $0xb98] sm:$0xff]
    %v715 = vld [vmem:[#allocation8 + $0xba0] sm:$0xff]
    %v716 = vld [vmem:[#allocation8 + $0xba8] sm:$0xff]
    %v717 = vld [vmem:[#allocation8 + $0xbb0] sm:$0xff]
    %v718 = vld [vmem:[#allocation8 + $0xbb8] sm:$0xff]
    %v719 = vld [vmem:[#allocation8 + $0xbc0] sm:$0xff]
    %v720 = vld [vmem:[#allocation8 + $0xbc8] sm:$0xff]
    %v721 = vld [vmem:[#allocation8 + $0xbd0] sm:$0xff]
    %v722 = vld [vmem:[#allocation8 + $0xbd8] sm:$0xff]
    %v723 = vld [vmem:[#allocation8 + $0xbe0] sm:$0xff]
    %v724 = vld [vmem:[#allocation8 + $0xbe8] sm:$0xff]
    %v725 = vld [vmem:[#allocation8 + $0xbf0] sm:$0xff]
    %v726 = vld [vmem:[#allocation8 + $0xbf8] sm:$0xff]
    %v727 = vld [vmem:[#allocation8 + $0xc00] sm:$0xff]
    %v728 = vld [vmem:[#allocation8 + $0xc08] sm:$0xff]
    %v729 = vld [vmem:[#allocation8 + $0xc10] sm:$0xff]
    %v730 = vld [vmem:[#allocation8 + $0xc18] sm:$0xff]
    %v731 = vld [vmem:[#allocation8 + $0xc20] sm:$0xff]
    %v732 = vld [vmem:[#allocation8 + $0xc28] sm:$0xff]
    %v733 = vld [vmem:[#allocation8 + $0xc30] sm:$0xff]
    %v734 = vld [vmem:[#allocation8 + $0xc38] sm:$0xff]
    %v735 = vld [vmem:[#allocation8 + $0xc40] sm:$0xff]
    %v736 = vld [vmem:[#allocation8 + $0xc48] sm:$0xff]
    %v737 = vld [vmem:[#allocation8 + $0xc50] sm:$0xff]
    %v738 = vld [vmem:[#allocation8 + $0xc58] sm:$0xff]
    %v739 = vld [vmem:[#allocation8 + $0xc60] sm:$0xff]
    %v740 = vld [vmem:[#allocation8 + $0xc68] sm:$0xff]
    %v741 = vld [vmem:[#allocation8 + $0xc70] sm:$0xff]
    %v742 = vld [vmem:[#allocation8 + $0xc78] sm:$0xff]
    %v743 = vld [vmem:[#allocation8 + $0xc80] sm:$0xff]
    %v744 = vld [vmem:[#allocation8 + $0xc88] sm:$0xff]
    %v745 = vld [vmem:[#allocation8 + $0xc90] sm:$0xff]
    %v746 = vld [vmem:[#allocation8 + $0xc98] sm:$0xff]
    %v747 = vld [vmem:[#allocation8 + $0xca0] sm:$0xff]
    %v748 = vld [vmem:[#allocation8 + $0xca8] sm:$0xff]
    %v749 = vld [vmem:[#allocation8 + $0xcb0] sm:$0xff]
    %v750 = vld [vmem:[#allocation8 + $0xcb8] sm:$0xff]
    %v751 = vld [vmem:[#allocation8 + $0xcc0] sm:$0xff]
    %v752 = vld [vmem:[#allocation8 + $0xcc8] sm:$0xff]
    %v753 = vld [vmem:[#allocation8 + $0xcd0] sm:$0xff]
    %v754 = vld [vmem:[#allocation8 + $0xcd8] sm:$0xff]
    %v755 = vld [vmem:[#allocation8 + $0xce0] sm:$0xff]
    %v756 = vld [vmem:[#allocation8 + $0xce8] sm:$0xff]
    %v757 = vld [vmem:[#allocation8 + $0xcf0] sm:$0xff]
    %v758 = vld [vmem:[#allocation8 + $0xcf8] sm:$0xff]
    %v759 = vld [vmem:[#allocation8 + $0xd00] sm:$0xff]
    %v760 = vld [vmem:[#allocation8 + $0xd08] sm:$0xff]
    %v761 = vld [vmem:[#allocation8 + $0xd10] sm:$0xff]
    %v762 = vld [vmem:[#allocation8 + $0xd18] sm:$0xff]
    %v763 = vld [vmem:[#allocation8 + $0xd20] sm:$0xff]
    %v764 = vld [vmem:[#allocation8 + $0xd28] sm:$0xff]
    %v765 = vld [vmem:[#allocation8 + $0xd30] sm:$0xff]
    %v766 = vld [vmem:[#allocation8 + $0xd38] sm:$0xff]
    %v767 = vld [vmem:[#allocation8 + $0xd40] sm:$0xff]
    %v768 = vld [vmem:[#allocation8 + $0xd48] sm:$0xff]
    %v769 = vld [vmem:[#allocation8 + $0xd50] sm:$0xff]
    %v770 = vld [vmem:[#allocation8 + $0xd58] sm:$0xff]
    %v771 = vld [vmem:[#allocation8 + $0xd60] sm:$0xff]
    %v772 = vld [vmem:[#allocation8 + $0xd68] sm:$0xff]
    %v773 = vld [vmem:[#allocation8 + $0xd70] sm:$0xff]
    %v774 = vld [vmem:[#allocation8 + $0xd78] sm:$0xff]
    %v775 = vld [vmem:[#allocation8 + $0xd80] sm:$0xff]
    %v776 = vld [vmem:[#allocation8 + $0xd88] sm:$0xff]
    %v777 = vld [vmem:[#allocation8 + $0xd90] sm:$0xff]
    %v778 = vld [vmem:[#allocation8 + $0xd98] sm:$0xff]
    %v779 = vld [vmem:[#allocation8 + $0xda0] sm:$0xff]
    %v780 = vld [vmem:[#allocation8 + $0xda8] sm:$0xff]
    %v781 = vld [vmem:[#allocation8 + $0xdb0] sm:$0xff]
    %v782 = vld [vmem:[#allocation8 + $0xdb8] sm:$0xff]
    %v783 = vld [vmem:[#allocation8 + $0xdc0] sm:$0xff]
    %v784 = vld [vmem:[#allocation8 + $0xdc8] sm:$0xff]
    %v785 = vld [vmem:[#allocation8 + $0xdd0] sm:$0xff]
    %v786 = vld [vmem:[#allocation8 + $0xdd8] sm:$0xff]
    %v787 = vld [vmem:[#allocation8 + $0xde0] sm:$0xff]
    %v788 = vld [vmem:[#allocation8 + $0xde8] sm:$0xff]
    %v789 = vld [vmem:[#allocation8 + $0xdf0] sm:$0xff]
    %v790 = vld [vmem:[#allocation8 + $0xdf8] sm:$0xff]
    %v791 = vld [vmem:[#allocation8 + $0xe00] sm:$0xff]
    %v792 = vld [vmem:[#allocation8 + $0xe08] sm:$0xff]
    %v793 = vld [vmem:[#allocation8 + $0xe10] sm:$0xff]
    %v794 = vld [vmem:[#allocation8 + $0xe18] sm:$0xff]
    %v795 = vld [vmem:[#allocation8 + $0xe20] sm:$0xff]
    %v796 = vld [vmem:[#allocation8 + $0xe28] sm:$0xff]
    %v797 = vld [vmem:[#allocation8 + $0xe30] sm:$0xff]
    %v798 = vld [vmem:[#allocation8 + $0xe38] sm:$0xff]
    %v799 = vld [vmem:[#allocation8 + $0xe40] sm:$0xff]
    %v800 = vld [vmem:[#allocation8 + $0xe48] sm:$0xff]
    %v801 = vld [vmem:[#allocation8 + $0xe50] sm:$0xff]
    %v802 = vld [vmem:[#allocation8 + $0xe58] sm:$0xff]
    %v803 = vld [vmem:[#allocation8 + $0xe60] sm:$0xff]
    %v804 = vld [vmem:[#allocation8 + $0xe68] sm:$0xff]
    %v805 = vld [vmem:[#allocation8 + $0xe70] sm:$0xff]
    %v806 = vld [vmem:[#allocation8 + $0xe78] sm:$0xff]
    %v807 = vld [vmem:[#allocation8 + $0xe80] sm:$0xff]
    %v808 = vld [vmem:[#allocation8 + $0xe88] sm:$0xff]
    %v809 = vld [vmem:[#allocation8 + $0xe90] sm:$0xff]
    %v810 = vld [vmem:[#allocation8 + $0xe98] sm:$0xff]
    %v811 = vld [vmem:[#allocation8 + $0xea0] sm:$0xff]
    %v812 = vld [vmem:[#allocation8 + $0xea8] sm:$0xff]
    %v813 = vld [vmem:[#allocation8 + $0xeb0] sm:$0xff]
    %v814 = vld [vmem:[#allocation8 + $0xeb8] sm:$0xff]
    %v815 = vld [vmem:[#allocation8 + $0xec0] sm:$0xff]
    %v816 = vld [vmem:[#allocation8 + $0xec8] sm:$0xff]
    %v817 = vld [vmem:[#allocation8 + $0xed0] sm:$0xff]
    %v818 = vld [vmem:[#allocation8 + $0xed8] sm:$0xff]
    %v819 = vld [vmem:[#allocation8 + $0xee0] sm:$0xff]
    %v820 = vld [vmem:[#allocation8 + $0xee8] sm:$0xff]
    %v821 = vld [vmem:[#allocation8 + $0xef0] sm:$0xff]
    %v822 = vld [vmem:[#allocation8 + $0xef8] sm:$0xff]
    %v823 = vld [vmem:[#allocation8 + $0xf00] sm:$0xff]
    %v824 = vld [vmem:[#allocation8 + $0xf08] sm:$0xff]
    %v825 = vld [vmem:[#allocation8 + $0xf10] sm:$0xff]
    %v826 = vld [vmem:[#allocation8 + $0xf18] sm:$0xff]
    %v827 = vld [vmem:[#allocation8 + $0xf20] sm:$0xff]
    %v828 = vld [vmem:[#allocation8 + $0xf28] sm:$0xff]
    %v829 = vld [vmem:[#allocation8 + $0xf30] sm:$0xff]
    %v830 = vld [vmem:[#allocation8 + $0xf38] sm:$0xff]
    %v831 = vld [vmem:[#allocation8 + $0xf40] sm:$0xff]
    %v832 = vld [vmem:[#allocation8 + $0xf48] sm:$0xff]
    %v833 = vld [vmem:[#allocation8 + $0xf50] sm:$0xff]
    %v834 = vld [vmem:[#allocation8 + $0xf58] sm:$0xff]
    %v835 = vld [vmem:[#allocation8 + $0xf60] sm:$0xff]
    %v836 = vld [vmem:[#allocation8 + $0xf68] sm:$0xff]
    %v837 = vld [vmem:[#allocation8 + $0xf70] sm:$0xff]
    %v838 = vld [vmem:[#allocation8 + $0xf78] sm:$0xff]
    %v839 = vld [vmem:[#allocation8 + $0xf80] sm:$0xff]
    %v840 = vld [vmem:[#allocation8 + $0xf88] sm:$0xff]
    %v841 = vld [vmem:[#allocation8 + $0xf90] sm:$0xff]
    %v842 = vld [vmem:[#allocation8 + $0xf98] sm:$0xff]
    %v843 = vld [vmem:[#allocation8 + $0xfa0] sm:$0xff]
    %v844 = vld [vmem:[#allocation8 + $0xfa8] sm:$0xff]
    %v845 = vld [vmem:[#allocation8 + $0xfb0] sm:$0xff]
    %v846 = vld [vmem:[#allocation8 + $0xfb8] sm:$0xff]
    %v847 = vld [vmem:[#allocation8 + $0xfc0] sm:$0xff]
    %v848 = vld [vmem:[#allocation8 + $0xfc8] sm:$0xff]
    %v849 = vld [vmem:[#allocation8 + $0xfd0] sm:$0xff]
    %v850 = vld [vmem:[#allocation8 + $0xfd8] sm:$0xff]
    %v851 = vld [vmem:[#allocation8 + $0xfe0] sm:$0xff]
    %v852 = vld [vmem:[#allocation8 + $0xfe8] sm:$0xff]
    %v853 = vld [vmem:[#allocation8 + $0xff0] sm:$0xff]
    %v854 = vld [vmem:[#allocation8 + $0xff8] sm:$0xff]
    %v855 = vld [vmem:[#allocation10] sm:$0x3]
    %v857 = vlaneseq
    %v858 = vshrl.u32 %v857, 7
    %v859 = vsub.s32 0, %v858
    %v860 = vrot.slane %v855, %v859
    %v861 = vlaneseq
    %v862 = vshrl.u32 %v861, 7
    %v863 = vsub.s32 1, %v862
    %v864 = vrot.slane %v855, %v863
    %v1379 = vunpack.c.l.b16 %v343
    %v1380 = vunpack.c.h.b16 %v343
    %v1381 = vunpack.c.l.b16 %v344
    %v1382 = vunpack.c.h.b16 %v344
    %v1383 = vunpack.c.l.b16 %v345
    %v1384 = vunpack.c.h.b16 %v345
    %v1385 = vunpack.c.l.b16 %v346
    %v1386 = vunpack.c.h.b16 %v346
    %v1387 = vunpack.c.l.b16 %v347
    %v1388 = vunpack.c.h.b16 %v347
    %v1389 = vunpack.c.l.b16 %v348
    %v1390 = vunpack.c.h.b16 %v348
    %v1391 = vunpack.c.l.b16 %v349
    %v1392 = vunpack.c.h.b16 %v349
    %v1393 = vunpack.c.l.b16 %v350
    %v1394 = vunpack.c.h.b16 %v350
    %v1395 = vunpack.c.l.b16 %v351
    %v1396 = vunpack.c.h.b16 %v351
    %v1397 = vunpack.c.l.b16 %v352
    %v1398 = vunpack.c.h.b16 %v352
    %v1399 = vunpack.c.l.b16 %v353
    %v1400 = vunpack.c.h.b16 %v353
    %v1401 = vunpack.c.l.b16 %v354
    %v1402 = vunpack.c.h.b16 %v354
    %v1403 = vunpack.c.l.b16 %v355
    %v1404 = vunpack.c.h.b16 %v355
    %v1405 = vunpack.c.l.b16 %v356
    %v1406 = vunpack.c.h.b16 %v356
    %v1407 = vunpack.c.l.b16 %v357
    %v1408 = vunpack.c.h.b16 %v357
    %v1409 = vunpack.c.l.b16 %v358
    %v1410 = vunpack.c.h.b16 %v358
    %v1411 = vunpack.c.l.b16 %v359
    %v1412 = vunpack.c.h.b16 %v359
    %v1413 = vunpack.c.l.b16 %v360
    %v1414 = vunpack.c.h.b16 %v360
    %v1415 = vunpack.c.l.b16 %v361
    %v1416 = vunpack.c.h.b16 %v361
    %v1417 = vunpack.c.l.b16 %v362
    %v1418 = vunpack.c.h.b16 %v362
    %v1419 = vunpack.c.l.b16 %v363
    %v1420 = vunpack.c.h.b16 %v363
    %v1421 = vunpack.c.l.b16 %v364
    %v1422 = vunpack.c.h.b16 %v364
    %v1423 = vunpack.c.l.b16 %v365
    %v1424 = vunpack.c.h.b16 %v365
    %v1425 = vunpack.c.l.b16 %v366
    %v1426 = vunpack.c.h.b16 %v366
    %v1427 = vunpack.c.l.b16 %v367
    %v1428 = vunpack.c.h.b16 %v367
    %v1429 = vunpack.c.l.b16 %v368
    %v1430 = vunpack.c.h.b16 %v368
    %v1431 = vunpack.c.l.b16 %v369
    %v1432 = vunpack.c.h.b16 %v369
    %v1433 = vunpack.c.l.b16 %v370
    %v1434 = vunpack.c.h.b16 %v370
    %v1435 = vunpack.c.l.b16 %v371
    %v1436 = vunpack.c.h.b16 %v371
    %v1437 = vunpack.c.l.b16 %v372
    %v1438 = vunpack.c.h.b16 %v372
    %v1439 = vunpack.c.l.b16 %v373
    %v1440 = vunpack.c.h.b16 %v373
    %v1441 = vunpack.c.l.b16 %v374
    %v1442 = vunpack.c.h.b16 %v374
    %v1443 = vunpack.c.l.b16 %v375
    %v1444 = vunpack.c.h.b16 %v375
    %v1445 = vunpack.c.l.b16 %v376
    %v1446 = vunpack.c.h.b16 %v376
    %v1447 = vunpack.c.l.b16 %v377
    %v1448 = vunpack.c.h.b16 %v377
    %v1449 = vunpack.c.l.b16 %v378
    %v1450 = vunpack.c.h.b16 %v378
    %v1451 = vunpack.c.l.b16 %v379
    %v1452 = vunpack.c.h.b16 %v379
    %v1453 = vunpack.c.l.b16 %v380
    %v1454 = vunpack.c.h.b16 %v380
    %v1455 = vunpack.c.l.b16 %v381
    %v1456 = vunpack.c.h.b16 %v381
    %v1457 = vunpack.c.l.b16 %v382
    %v1458 = vunpack.c.h.b16 %v382
    %v1459 = vunpack.c.l.b16 %v383
    %v1460 = vunpack.c.h.b16 %v383
    %v1461 = vunpack.c.l.b16 %v384
    %v1462 = vunpack.c.h.b16 %v384
    %v1463 = vunpack.c.l.b16 %v385
    %v1464 = vunpack.c.h.b16 %v385
    %v1465 = vunpack.c.l.b16 %v386
    %v1466 = vunpack.c.h.b16 %v386
    %v1467 = vunpack.c.l.b16 %v387
    %v1468 = vunpack.c.h.b16 %v387
    %v1469 = vunpack.c.l.b16 %v388
    %v1470 = vunpack.c.h.b16 %v388
    %v1471 = vunpack.c.l.b16 %v389
    %v1472 = vunpack.c.h.b16 %v389
    %v1473 = vunpack.c.l.b16 %v390
    %v1474 = vunpack.c.h.b16 %v390
    %v1475 = vunpack.c.l.b16 %v391
    %v1476 = vunpack.c.h.b16 %v391
    %v1477 = vunpack.c.l.b16 %v392
    %v1478 = vunpack.c.h.b16 %v392
    %v1479 = vunpack.c.l.b16 %v393
    %v1480 = vunpack.c.h.b16 %v393
    %v1481 = vunpack.c.l.b16 %v394
    %v1482 = vunpack.c.h.b16 %v394
    %v1483 = vunpack.c.l.b16 %v395
    %v1484 = vunpack.c.h.b16 %v395
    %v1485 = vunpack.c.l.b16 %v396
    %v1486 = vunpack.c.h.b16 %v396
    %v1487 = vunpack.c.l.b16 %v397
    %v1488 = vunpack.c.h.b16 %v397
    %v1489 = vunpack.c.l.b16 %v398
    %v1490 = vunpack.c.h.b16 %v398
    %v1491 = vunpack.c.l.b16 %v399
    %v1492 = vunpack.c.h.b16 %v399
    %v1493 = vunpack.c.l.b16 %v400
    %v1494 = vunpack.c.h.b16 %v400
    %v1495 = vunpack.c.l.b16 %v401
    %v1496 = vunpack.c.h.b16 %v401
    %v1497 = vunpack.c.l.b16 %v402
    %v1498 = vunpack.c.h.b16 %v402
    %v1499 = vunpack.c.l.b16 %v403
    %v1500 = vunpack.c.h.b16 %v403
    %v1501 = vunpack.c.l.b16 %v404
    %v1502 = vunpack.c.h.b16 %v404
    %v1503 = vunpack.c.l.b16 %v405
    %v1504 = vunpack.c.h.b16 %v405
    %v1505 = vunpack.c.l.b16 %v406
    %v1506 = vunpack.c.h.b16 %v406
    %v1507 = vunpack.c.l.b16 %v407
    %v1508 = vunpack.c.h.b16 %v407
    %v1509 = vunpack.c.l.b16 %v408
    %v1510 = vunpack.c.h.b16 %v408
    %v1511 = vunpack.c.l.b16 %v409
    %v1512 = vunpack.c.h.b16 %v409
    %v1513 = vunpack.c.l.b16 %v410
    %v1514 = vunpack.c.h.b16 %v410
    %v1515 = vunpack.c.l.b16 %v411
    %v1516 = vunpack.c.h.b16 %v411
    %v1517 = vunpack.c.l.b16 %v412
    %v1518 = vunpack.c.h.b16 %v412
    %v1519 = vunpack.c.l.b16 %v413
    %v1520 = vunpack.c.h.b16 %v413
    %v1521 = vunpack.c.l.b16 %v414
    %v1522 = vunpack.c.h.b16 %v414
    %v1523 = vunpack.c.l.b16 %v415
    %v1524 = vunpack.c.h.b16 %v415
    %v1525 = vunpack.c.l.b16 %v416
    %v1526 = vunpack.c.h.b16 %v416
    %v1527 = vunpack.c.l.b16 %v417
    %v1528 = vunpack.c.h.b16 %v417
    %v1529 = vunpack.c.l.b16 %v418
    %v1530 = vunpack.c.h.b16 %v418
    %v1531 = vunpack.c.l.b16 %v419
    %v1532 = vunpack.c.h.b16 %v419
    %v1533 = vunpack.c.l.b16 %v420
    %v1534 = vunpack.c.h.b16 %v420
    %v1535 = vunpack.c.l.b16 %v421
    %v1536 = vunpack.c.h.b16 %v421
    %v1537 = vunpack.c.l.b16 %v422
    %v1538 = vunpack.c.h.b16 %v422
    %v1539 = vunpack.c.l.b16 %v423
    %v1540 = vunpack.c.h.b16 %v423
    %v1541 = vunpack.c.l.b16 %v424
    %v1542 = vunpack.c.h.b16 %v424
    %v1543 = vunpack.c.l.b16 %v425
    %v1544 = vunpack.c.h.b16 %v425
    %v1545 = vunpack.c.l.b16 %v426
    %v1546 = vunpack.c.h.b16 %v426
    %v1547 = vunpack.c.l.b16 %v427
    %v1548 = vunpack.c.h.b16 %v427
    %v1549 = vunpack.c.l.b16 %v428
    %v1550 = vunpack.c.h.b16 %v428
    %v1551 = vunpack.c.l.b16 %v429
    %v1552 = vunpack.c.h.b16 %v429
    %v1553 = vunpack.c.l.b16 %v430
    %v1554 = vunpack.c.h.b16 %v430
    %v1555 = vunpack.c.l.b16 %v431
    %v1556 = vunpack.c.h.b16 %v431
    %v1557 = vunpack.c.l.b16 %v432
    %v1558 = vunpack.c.h.b16 %v432
    %v1559 = vunpack.c.l.b16 %v433
    %v1560 = vunpack.c.h.b16 %v433
    %v1561 = vunpack.c.l.b16 %v434
    %v1562 = vunpack.c.h.b16 %v434
    %v1563 = vunpack.c.l.b16 %v435
    %v1564 = vunpack.c.h.b16 %v435
    %v1565 = vunpack.c.l.b16 %v436
    %v1566 = vunpack.c.h.b16 %v436
    %v1567 = vunpack.c.l.b16 %v437
    %v1568 = vunpack.c.h.b16 %v437
    %v1569 = vunpack.c.l.b16 %v438
    %v1570 = vunpack.c.h.b16 %v438
    %v1571 = vunpack.c.l.b16 %v439
    %v1572 = vunpack.c.h.b16 %v439
    %v1573 = vunpack.c.l.b16 %v440
    %v1574 = vunpack.c.h.b16 %v440
    %v1575 = vunpack.c.l.b16 %v441
    %v1576 = vunpack.c.h.b16 %v441
    %v1577 = vunpack.c.l.b16 %v442
    %v1578 = vunpack.c.h.b16 %v442
    %v1579 = vunpack.c.l.b16 %v443
    %v1580 = vunpack.c.h.b16 %v443
    %v1581 = vunpack.c.l.b16 %v444
    %v1582 = vunpack.c.h.b16 %v444
    %v1583 = vunpack.c.l.b16 %v445
    %v1584 = vunpack.c.h.b16 %v445
    %v1585 = vunpack.c.l.b16 %v446
    %v1586 = vunpack.c.h.b16 %v446
    %v1587 = vunpack.c.l.b16 %v447
    %v1588 = vunpack.c.h.b16 %v447
    %v1589 = vunpack.c.l.b16 %v448
    %v1590 = vunpack.c.h.b16 %v448
    %v1591 = vunpack.c.l.b16 %v449
    %v1592 = vunpack.c.h.b16 %v449
    %v1593 = vunpack.c.l.b16 %v450
    %v1594 = vunpack.c.h.b16 %v450
    %v1595 = vunpack.c.l.b16 %v451
    %v1596 = vunpack.c.h.b16 %v451
    %v1597 = vunpack.c.l.b16 %v452
    %v1598 = vunpack.c.h.b16 %v452
    %v1599 = vunpack.c.l.b16 %v453
    %v1600 = vunpack.c.h.b16 %v453
    %v1601 = vunpack.c.l.b16 %v454
    %v1602 = vunpack.c.h.b16 %v454
    %v1603 = vunpack.c.l.b16 %v455
    %v1604 = vunpack.c.h.b16 %v455
    %v1605 = vunpack.c.l.b16 %v456
    %v1606 = vunpack.c.h.b16 %v456
    %v1607 = vunpack.c.l.b16 %v457
    %v1608 = vunpack.c.h.b16 %v457
    %v1609 = vunpack.c.l.b16 %v458
    %v1610 = vunpack.c.h.b16 %v458
    %v1611 = vunpack.c.l.b16 %v459
    %v1612 = vunpack.c.h.b16 %v459
    %v1613 = vunpack.c.l.b16 %v460
    %v1614 = vunpack.c.h.b16 %v460
    %v1615 = vunpack.c.l.b16 %v461
    %v1616 = vunpack.c.h.b16 %v461
    %v1617 = vunpack.c.l.b16 %v462
    %v1618 = vunpack.c.h.b16 %v462
    %v1619 = vunpack.c.l.b16 %v463
    %v1620 = vunpack.c.h.b16 %v463
    %v1621 = vunpack.c.l.b16 %v464
    %v1622 = vunpack.c.h.b16 %v464
    %v1623 = vunpack.c.l.b16 %v465
    %v1624 = vunpack.c.h.b16 %v465
    %v1625 = vunpack.c.l.b16 %v466
    %v1626 = vunpack.c.h.b16 %v466
    %v1627 = vunpack.c.l.b16 %v467
    %v1628 = vunpack.c.h.b16 %v467
    %v1629 = vunpack.c.l.b16 %v468
    %v1630 = vunpack.c.h.b16 %v468
    %v1631 = vunpack.c.l.b16 %v469
    %v1632 = vunpack.c.h.b16 %v469
    %v1633 = vunpack.c.l.b16 %v470
    %v1634 = vunpack.c.h.b16 %v470
    %v1635 = vunpack.c.l.b16 %v471
    %v1636 = vunpack.c.h.b16 %v471
    %v1637 = vunpack.c.l.b16 %v472
    %v1638 = vunpack.c.h.b16 %v472
    %v1639 = vunpack.c.l.b16 %v473
    %v1640 = vunpack.c.h.b16 %v473
    %v1641 = vunpack.c.l.b16 %v474
    %v1642 = vunpack.c.h.b16 %v474
    %v1643 = vunpack.c.l.b16 %v475
    %v1644 = vunpack.c.h.b16 %v475
    %v1645 = vunpack.c.l.b16 %v476
    %v1646 = vunpack.c.h.b16 %v476
    %v1647 = vunpack.c.l.b16 %v477
    %v1648 = vunpack.c.h.b16 %v477
    %v1649 = vunpack.c.l.b16 %v478
    %v1650 = vunpack.c.h.b16 %v478
    %v1651 = vunpack.c.l.b16 %v479
    %v1652 = vunpack.c.h.b16 %v479
    %v1653 = vunpack.c.l.b16 %v480
    %v1654 = vunpack.c.h.b16 %v480
    %v1655 = vunpack.c.l.b16 %v481
    %v1656 = vunpack.c.h.b16 %v481
    %v1657 = vunpack.c.l.b16 %v482
    %v1658 = vunpack.c.h.b16 %v482
    %v1659 = vunpack.c.l.b16 %v483
    %v1660 = vunpack.c.h.b16 %v483
    %v1661 = vunpack.c.l.b16 %v484
    %v1662 = vunpack.c.h.b16 %v484
    %v1663 = vunpack.c.l.b16 %v485
    %v1664 = vunpack.c.h.b16 %v485
    %v1665 = vunpack.c.l.b16 %v486
    %v1666 = vunpack.c.h.b16 %v486
    %v1667 = vunpack.c.l.b16 %v487
    %v1668 = vunpack.c.h.b16 %v487
    %v1669 = vunpack.c.l.b16 %v488
    %v1670 = vunpack.c.h.b16 %v488
    %v1671 = vunpack.c.l.b16 %v489
    %v1672 = vunpack.c.h.b16 %v489
    %v1673 = vunpack.c.l.b16 %v490
    %v1674 = vunpack.c.h.b16 %v490
    %v1675 = vunpack.c.l.b16 %v491
    %v1676 = vunpack.c.h.b16 %v491
    %v1677 = vunpack.c.l.b16 %v492
    %v1678 = vunpack.c.h.b16 %v492
    %v1679 = vunpack.c.l.b16 %v493
    %v1680 = vunpack.c.h.b16 %v493
    %v1681 = vunpack.c.l.b16 %v494
    %v1682 = vunpack.c.h.b16 %v494
    %v1683 = vunpack.c.l.b16 %v495
    %v1684 = vunpack.c.h.b16 %v495
    %v1685 = vunpack.c.l.b16 %v496
    %v1686 = vunpack.c.h.b16 %v496
    %v1687 = vunpack.c.l.b16 %v497
    %v1688 = vunpack.c.h.b16 %v497
    %v1689 = vunpack.c.l.b16 %v498
    %v1690 = vunpack.c.h.b16 %v498
    %v1691 = vunpack.c.l.b16 %v499
    %v1692 = vunpack.c.h.b16 %v499
    %v1693 = vunpack.c.l.b16 %v500
    %v1694 = vunpack.c.h.b16 %v500
    %v1695 = vunpack.c.l.b16 %v501
    %v1696 = vunpack.c.h.b16 %v501
    %v1697 = vunpack.c.l.b16 %v502
    %v1698 = vunpack.c.h.b16 %v502
    %v1699 = vunpack.c.l.b16 %v503
    %v1700 = vunpack.c.h.b16 %v503
    %v1701 = vunpack.c.l.b16 %v504
    %v1702 = vunpack.c.h.b16 %v504
    %v1703 = vunpack.c.l.b16 %v505
    %v1704 = vunpack.c.h.b16 %v505
    %v1705 = vunpack.c.l.b16 %v506
    %v1706 = vunpack.c.h.b16 %v506
    %v1707 = vunpack.c.l.b16 %v507
    %v1708 = vunpack.c.h.b16 %v507
    %v1709 = vunpack.c.l.b16 %v508
    %v1710 = vunpack.c.h.b16 %v508
    %v1711 = vunpack.c.l.b16 %v509
    %v1712 = vunpack.c.h.b16 %v509
    %v1713 = vunpack.c.l.b16 %v510
    %v1714 = vunpack.c.h.b16 %v510
    %v1715 = vunpack.c.l.b16 %v511
    %v1716 = vunpack.c.h.b16 %v511
    %v1717 = vunpack.c.l.b16 %v512
    %v1718 = vunpack.c.h.b16 %v512
    %v1719 = vunpack.c.l.b16 %v513
    %v1720 = vunpack.c.h.b16 %v513
    %v1721 = vunpack.c.l.b16 %v514
    %v1722 = vunpack.c.h.b16 %v514
    %v1723 = vunpack.c.l.b16 %v515
    %v1724 = vunpack.c.h.b16 %v515
    %v1725 = vunpack.c.l.b16 %v516
    %v1726 = vunpack.c.h.b16 %v516
    %v1727 = vunpack.c.l.b16 %v517
    %v1728 = vunpack.c.h.b16 %v517
    %v1729 = vunpack.c.l.b16 %v518
    %v1730 = vunpack.c.h.b16 %v518
    %v1731 = vunpack.c.l.b16 %v519
    %v1732 = vunpack.c.h.b16 %v519
    %v1733 = vunpack.c.l.b16 %v520
    %v1734 = vunpack.c.h.b16 %v520
    %v1735 = vunpack.c.l.b16 %v521
    %v1736 = vunpack.c.h.b16 %v521
    %v1737 = vunpack.c.l.b16 %v522
    %v1738 = vunpack.c.h.b16 %v522
    %v1739 = vunpack.c.l.b16 %v523
    %v1740 = vunpack.c.h.b16 %v523
    %v1741 = vunpack.c.l.b16 %v524
    %v1742 = vunpack.c.h.b16 %v524
    %v1743 = vunpack.c.l.b16 %v525
    %v1744 = vunpack.c.h.b16 %v525
    %v1745 = vunpack.c.l.b16 %v526
    %v1746 = vunpack.c.h.b16 %v526
    %v1747 = vunpack.c.l.b16 %v527
    %v1748 = vunpack.c.h.b16 %v527
    %v1749 = vunpack.c.l.b16 %v528
    %v1750 = vunpack.c.h.b16 %v528
    %v1751 = vunpack.c.l.b16 %v529
    %v1752 = vunpack.c.h.b16 %v529
    %v1753 = vunpack.c.l.b16 %v530
    %v1754 = vunpack.c.h.b16 %v530
    %v1755 = vunpack.c.l.b16 %v531
    %v1756 = vunpack.c.h.b16 %v531
    %v1757 = vunpack.c.l.b16 %v532
    %v1758 = vunpack.c.h.b16 %v532
    %v1759 = vunpack.c.l.b16 %v533
    %v1760 = vunpack.c.h.b16 %v533
    %v1761 = vunpack.c.l.b16 %v534
    %v1762 = vunpack.c.h.b16 %v534
    %v1763 = vunpack.c.l.b16 %v535
    %v1764 = vunpack.c.h.b16 %v535
    %v1765 = vunpack.c.l.b16 %v536
    %v1766 = vunpack.c.h.b16 %v536
    %v1767 = vunpack.c.l.b16 %v537
    %v1768 = vunpack.c.h.b16 %v537
    %v1769 = vunpack.c.l.b16 %v538
    %v1770 = vunpack.c.h.b16 %v538
    %v1771 = vunpack.c.l.b16 %v539
    %v1772 = vunpack.c.h.b16 %v539
    %v1773 = vunpack.c.l.b16 %v540
    %v1774 = vunpack.c.h.b16 %v540
    %v1775 = vunpack.c.l.b16 %v541
    %v1776 = vunpack.c.h.b16 %v541
    %v1777 = vunpack.c.l.b16 %v542
    %v1778 = vunpack.c.h.b16 %v542
    %v1779 = vunpack.c.l.b16 %v543
    %v1780 = vunpack.c.h.b16 %v543
    %v1781 = vunpack.c.l.b16 %v544
    %v1782 = vunpack.c.h.b16 %v544
    %v1783 = vunpack.c.l.b16 %v545
    %v1784 = vunpack.c.h.b16 %v545
    %v1785 = vunpack.c.l.b16 %v546
    %v1786 = vunpack.c.h.b16 %v546
    %v1787 = vunpack.c.l.b16 %v547
    %v1788 = vunpack.c.h.b16 %v547
    %v1789 = vunpack.c.l.b16 %v548
    %v1790 = vunpack.c.h.b16 %v548
    %v1791 = vunpack.c.l.b16 %v549
    %v1792 = vunpack.c.h.b16 %v549
    %v1793 = vunpack.c.l.b16 %v550
    %v1794 = vunpack.c.h.b16 %v550
    %v1795 = vunpack.c.l.b16 %v551
    %v1796 = vunpack.c.h.b16 %v551
    %v1797 = vunpack.c.l.b16 %v552
    %v1798 = vunpack.c.h.b16 %v552
    %v1799 = vunpack.c.l.b16 %v553
    %v1800 = vunpack.c.h.b16 %v553
    %v1801 = vunpack.c.l.b16 %v554
    %v1802 = vunpack.c.h.b16 %v554
    %v1803 = vunpack.c.l.b16 %v555
    %v1804 = vunpack.c.h.b16 %v555
    %v1805 = vunpack.c.l.b16 %v556
    %v1806 = vunpack.c.h.b16 %v556
    %v1807 = vunpack.c.l.b16 %v557
    %v1808 = vunpack.c.h.b16 %v557
    %v1809 = vunpack.c.l.b16 %v558
    %v1810 = vunpack.c.h.b16 %v558
    %v1811 = vunpack.c.l.b16 %v559
    %v1812 = vunpack.c.h.b16 %v559
    %v1813 = vunpack.c.l.b16 %v560
    %v1814 = vunpack.c.h.b16 %v560
    %v1815 = vunpack.c.l.b16 %v561
    %v1816 = vunpack.c.h.b16 %v561
    %v1817 = vunpack.c.l.b16 %v562
    %v1818 = vunpack.c.h.b16 %v562
    %v1819 = vunpack.c.l.b16 %v563
    %v1820 = vunpack.c.h.b16 %v563
    %v1821 = vunpack.c.l.b16 %v564
    %v1822 = vunpack.c.h.b16 %v564
    %v1823 = vunpack.c.l.b16 %v565
    %v1824 = vunpack.c.h.b16 %v565
    %v1825 = vunpack.c.l.b16 %v566
    %v1826 = vunpack.c.h.b16 %v566
    %v1827 = vunpack.c.l.b16 %v567
    %v1828 = vunpack.c.h.b16 %v567
    %v1829 = vunpack.c.l.b16 %v568
    %v1830 = vunpack.c.h.b16 %v568
    %v1831 = vunpack.c.l.b16 %v569
    %v1832 = vunpack.c.h.b16 %v569
    %v1833 = vunpack.c.l.b16 %v570
    %v1834 = vunpack.c.h.b16 %v570
    %v1835 = vunpack.c.l.b16 %v571
    %v1836 = vunpack.c.h.b16 %v571
    %v1837 = vunpack.c.l.b16 %v572
    %v1838 = vunpack.c.h.b16 %v572
    %v1839 = vunpack.c.l.b16 %v573
    %v1840 = vunpack.c.h.b16 %v573
    %v1841 = vunpack.c.l.b16 %v574
    %v1842 = vunpack.c.h.b16 %v574
    %v1843 = vunpack.c.l.b16 %v575
    %v1844 = vunpack.c.h.b16 %v575
    %v1845 = vunpack.c.l.b16 %v576
    %v1846 = vunpack.c.h.b16 %v576
    %v1847 = vunpack.c.l.b16 %v577
    %v1848 = vunpack.c.h.b16 %v577
    %v1849 = vunpack.c.l.b16 %v578
    %v1850 = vunpack.c.h.b16 %v578
    %v1851 = vunpack.c.l.b16 %v579
    %v1852 = vunpack.c.h.b16 %v579
    %v1853 = vunpack.c.l.b16 %v580
    %v1854 = vunpack.c.h.b16 %v580
    %v1855 = vunpack.c.l.b16 %v581
    %v1856 = vunpack.c.h.b16 %v581
    %v1857 = vunpack.c.l.b16 %v582
    %v1858 = vunpack.c.h.b16 %v582
    %v1859 = vunpack.c.l.b16 %v583
    %v1860 = vunpack.c.h.b16 %v583
    %v1861 = vunpack.c.l.b16 %v584
    %v1862 = vunpack.c.h.b16 %v584
    %v1863 = vunpack.c.l.b16 %v585
    %v1864 = vunpack.c.h.b16 %v585
    %v1865 = vunpack.c.l.b16 %v586
    %v1866 = vunpack.c.h.b16 %v586
    %v1867 = vunpack.c.l.b16 %v587
    %v1868 = vunpack.c.h.b16 %v587
    %v1869 = vunpack.c.l.b16 %v588
    %v1870 = vunpack.c.h.b16 %v588
    %v1871 = vunpack.c.l.b16 %v589
    %v1872 = vunpack.c.h.b16 %v589
    %v1873 = vunpack.c.l.b16 %v590
    %v1874 = vunpack.c.h.b16 %v590
    %v1875 = vunpack.c.l.b16 %v591
    %v1876 = vunpack.c.h.b16 %v591
    %v1877 = vunpack.c.l.b16 %v592
    %v1878 = vunpack.c.h.b16 %v592
    %v1879 = vunpack.c.l.b16 %v593
    %v1880 = vunpack.c.h.b16 %v593
    %v1881 = vunpack.c.l.b16 %v594
    %v1882 = vunpack.c.h.b16 %v594
    %v1883 = vunpack.c.l.b16 %v595
    %v1884 = vunpack.c.h.b16 %v595
    %v1885 = vunpack.c.l.b16 %v596
    %v1886 = vunpack.c.h.b16 %v596
    %v1887 = vunpack.c.l.b16 %v597
    %v1888 = vunpack.c.h.b16 %v597
    %v1889 = vunpack.c.l.b16 %v598
    %v1890 = vunpack.c.h.b16 %v598
    %v1891 = vunpack.c.l.b16 %v599
    %v1892 = vunpack.c.h.b16 %v599
    %v1893 = vunpack.c.l.b16 %v600
    %v1894 = vunpack.c.h.b16 %v600
    %v1895 = vunpack.c.l.b16 %v601
    %v1896 = vunpack.c.h.b16 %v601
    %v1897 = vunpack.c.l.b16 %v602
    %v1898 = vunpack.c.h.b16 %v602
    %v1899 = vunpack.c.l.b16 %v603
    %v1900 = vunpack.c.h.b16 %v603
    %v1901 = vunpack.c.l.b16 %v604
    %v1902 = vunpack.c.h.b16 %v604
    %v1903 = vunpack.c.l.b16 %v605
    %v1904 = vunpack.c.h.b16 %v605
    %v1905 = vunpack.c.l.b16 %v606
    %v1906 = vunpack.c.h.b16 %v606
    %v1907 = vunpack.c.l.b16 %v607
    %v1908 = vunpack.c.h.b16 %v607
    %v1909 = vunpack.c.l.b16 %v608
    %v1910 = vunpack.c.h.b16 %v608
    %v1911 = vunpack.c.l.b16 %v609
    %v1912 = vunpack.c.h.b16 %v609
    %v1913 = vunpack.c.l.b16 %v610
    %v1914 = vunpack.c.h.b16 %v610
    %v1915 = vunpack.c.l.b16 %v611
    %v1916 = vunpack.c.h.b16 %v611
    %v1917 = vunpack.c.l.b16 %v612
    %v1918 = vunpack.c.h.b16 %v612
    %v1919 = vunpack.c.l.b16 %v613
    %v1920 = vunpack.c.h.b16 %v613
    %v1921 = vunpack.c.l.b16 %v614
    %v1922 = vunpack.c.h.b16 %v614
    %v1923 = vunpack.c.l.b16 %v615
    %v1924 = vunpack.c.h.b16 %v615
    %v1925 = vunpack.c.l.b16 %v616
    %v1926 = vunpack.c.h.b16 %v616
    %v1927 = vunpack.c.l.b16 %v617
    %v1928 = vunpack.c.h.b16 %v617
    %v1929 = vunpack.c.l.b16 %v618
    %v1930 = vunpack.c.h.b16 %v618
    %v1931 = vunpack.c.l.b16 %v619
    %v1932 = vunpack.c.h.b16 %v619
    %v1933 = vunpack.c.l.b16 %v620
    %v1934 = vunpack.c.h.b16 %v620
    %v1935 = vunpack.c.l.b16 %v621
    %v1936 = vunpack.c.h.b16 %v621
    %v1937 = vunpack.c.l.b16 %v622
    %v1938 = vunpack.c.h.b16 %v622
    %v1939 = vunpack.c.l.b16 %v623
    %v1940 = vunpack.c.h.b16 %v623
    %v1941 = vunpack.c.l.b16 %v624
    %v1942 = vunpack.c.h.b16 %v624
    %v1943 = vunpack.c.l.b16 %v625
    %v1944 = vunpack.c.h.b16 %v625
    %v1945 = vunpack.c.l.b16 %v626
    %v1946 = vunpack.c.h.b16 %v626
    %v1947 = vunpack.c.l.b16 %v627
    %v1948 = vunpack.c.h.b16 %v627
    %v1949 = vunpack.c.l.b16 %v628
    %v1950 = vunpack.c.h.b16 %v628
    %v1951 = vunpack.c.l.b16 %v629
    %v1952 = vunpack.c.h.b16 %v629
    %v1953 = vunpack.c.l.b16 %v630
    %v1954 = vunpack.c.h.b16 %v630
    %v1955 = vunpack.c.l.b16 %v631
    %v1956 = vunpack.c.h.b16 %v631
    %v1957 = vunpack.c.l.b16 %v632
    %v1958 = vunpack.c.h.b16 %v632
    %v1959 = vunpack.c.l.b16 %v633
    %v1960 = vunpack.c.h.b16 %v633
    %v1961 = vunpack.c.l.b16 %v634
    %v1962 = vunpack.c.h.b16 %v634
    %v1963 = vunpack.c.l.b16 %v635
    %v1964 = vunpack.c.h.b16 %v635
    %v1965 = vunpack.c.l.b16 %v636
    %v1966 = vunpack.c.h.b16 %v636
    %v1967 = vunpack.c.l.b16 %v637
    %v1968 = vunpack.c.h.b16 %v637
    %v1969 = vunpack.c.l.b16 %v638
    %v1970 = vunpack.c.h.b16 %v638
    %v1971 = vunpack.c.l.b16 %v639
    %v1972 = vunpack.c.h.b16 %v639
    %v1973 = vunpack.c.l.b16 %v640
    %v1974 = vunpack.c.h.b16 %v640
    %v1975 = vunpack.c.l.b16 %v641
    %v1976 = vunpack.c.h.b16 %v641
    %v1977 = vunpack.c.l.b16 %v642
    %v1978 = vunpack.c.h.b16 %v642
    %v1979 = vunpack.c.l.b16 %v643
    %v1980 = vunpack.c.h.b16 %v643
    %v1981 = vunpack.c.l.b16 %v644
    %v1982 = vunpack.c.h.b16 %v644
    %v1983 = vunpack.c.l.b16 %v645
    %v1984 = vunpack.c.h.b16 %v645
    %v1985 = vunpack.c.l.b16 %v646
    %v1986 = vunpack.c.h.b16 %v646
    %v1987 = vunpack.c.l.b16 %v647
    %v1988 = vunpack.c.h.b16 %v647
    %v1989 = vunpack.c.l.b16 %v648
    %v1990 = vunpack.c.h.b16 %v648
    %v1991 = vunpack.c.l.b16 %v649
    %v1992 = vunpack.c.h.b16 %v649
    %v1993 = vunpack.c.l.b16 %v650
    %v1994 = vunpack.c.h.b16 %v650
    %v1995 = vunpack.c.l.b16 %v651
    %v1996 = vunpack.c.h.b16 %v651
    %v1997 = vunpack.c.l.b16 %v652
    %v1998 = vunpack.c.h.b16 %v652
    %v1999 = vunpack.c.l.b16 %v653
    %v2000 = vunpack.c.h.b16 %v653
    %v2001 = vunpack.c.l.b16 %v654
    %v2002 = vunpack.c.h.b16 %v654
    %v2003 = vunpack.c.l.b16 %v655
    %v2004 = vunpack.c.h.b16 %v655
    %v2005 = vunpack.c.l.b16 %v656
    %v2006 = vunpack.c.h.b16 %v656
    %v2007 = vunpack.c.l.b16 %v657
    %v2008 = vunpack.c.h.b16 %v657
    %v2009 = vunpack.c.l.b16 %v658
    %v2010 = vunpack.c.h.b16 %v658
    %v2011 = vunpack.c.l.b16 %v659
    %v2012 = vunpack.c.h.b16 %v659
    %v2013 = vunpack.c.l.b16 %v660
    %v2014 = vunpack.c.h.b16 %v660
    %v2015 = vunpack.c.l.b16 %v661
    %v2016 = vunpack.c.h.b16 %v661
    %v2017 = vunpack.c.l.b16 %v662
    %v2018 = vunpack.c.h.b16 %v662
    %v2019 = vunpack.c.l.b16 %v663
    %v2020 = vunpack.c.h.b16 %v663
    %v2021 = vunpack.c.l.b16 %v664
    %v2022 = vunpack.c.h.b16 %v664
    %v2023 = vunpack.c.l.b16 %v665
    %v2024 = vunpack.c.h.b16 %v665
    %v2025 = vunpack.c.l.b16 %v666
    %v2026 = vunpack.c.h.b16 %v666
    %v2027 = vunpack.c.l.b16 %v667
    %v2028 = vunpack.c.h.b16 %v667
    %v2029 = vunpack.c.l.b16 %v668
    %v2030 = vunpack.c.h.b16 %v668
    %v2031 = vunpack.c.l.b16 %v669
    %v2032 = vunpack.c.h.b16 %v669
    %v2033 = vunpack.c.l.b16 %v670
    %v2034 = vunpack.c.h.b16 %v670
    %v2035 = vunpack.c.l.b16 %v671
    %v2036 = vunpack.c.h.b16 %v671
    %v2037 = vunpack.c.l.b16 %v672
    %v2038 = vunpack.c.h.b16 %v672
    %v2039 = vunpack.c.l.b16 %v673
    %v2040 = vunpack.c.h.b16 %v673
    %v2041 = vunpack.c.l.b16 %v674
    %v2042 = vunpack.c.h.b16 %v674
    %v2043 = vunpack.c.l.b16 %v675
    %v2044 = vunpack.c.h.b16 %v675
    %v2045 = vunpack.c.l.b16 %v676
    %v2046 = vunpack.c.h.b16 %v676
    %v2047 = vunpack.c.l.b16 %v677
    %v2048 = vunpack.c.h.b16 %v677
    %v2049 = vunpack.c.l.b16 %v678
    %v2050 = vunpack.c.h.b16 %v678
    %v2051 = vunpack.c.l.b16 %v679
    %v2052 = vunpack.c.h.b16 %v679
    %v2053 = vunpack.c.l.b16 %v680
    %v2054 = vunpack.c.h.b16 %v680
    %v2055 = vunpack.c.l.b16 %v681
    %v2056 = vunpack.c.h.b16 %v681
    %v2057 = vunpack.c.l.b16 %v682
    %v2058 = vunpack.c.h.b16 %v682
    %v2059 = vunpack.c.l.b16 %v683
    %v2060 = vunpack.c.h.b16 %v683
    %v2061 = vunpack.c.l.b16 %v684
    %v2062 = vunpack.c.h.b16 %v684
    %v2063 = vunpack.c.l.b16 %v685
    %v2064 = vunpack.c.h.b16 %v685
    %v2065 = vunpack.c.l.b16 %v686
    %v2066 = vunpack.c.h.b16 %v686
    %v2067 = vunpack.c.l.b16 %v687
    %v2068 = vunpack.c.h.b16 %v687
    %v2069 = vunpack.c.l.b16 %v688
    %v2070 = vunpack.c.h.b16 %v688
    %v2071 = vunpack.c.l.b16 %v689
    %v2072 = vunpack.c.h.b16 %v689
    %v2073 = vunpack.c.l.b16 %v690
    %v2074 = vunpack.c.h.b16 %v690
    %v2075 = vunpack.c.l.b16 %v691
    %v2076 = vunpack.c.h.b16 %v691
    %v2077 = vunpack.c.l.b16 %v692
    %v2078 = vunpack.c.h.b16 %v692
    %v2079 = vunpack.c.l.b16 %v693
    %v2080 = vunpack.c.h.b16 %v693
    %v2081 = vunpack.c.l.b16 %v694
    %v2082 = vunpack.c.h.b16 %v694
    %v2083 = vunpack.c.l.b16 %v695
    %v2084 = vunpack.c.h.b16 %v695
    %v2085 = vunpack.c.l.b16 %v696
    %v2086 = vunpack.c.h.b16 %v696
    %v2087 = vunpack.c.l.b16 %v697
    %v2088 = vunpack.c.h.b16 %v697
    %v2089 = vunpack.c.l.b16 %v698
    %v2090 = vunpack.c.h.b16 %v698
    %v2091 = vunpack.c.l.b16 %v699
    %v2092 = vunpack.c.h.b16 %v699
    %v2093 = vunpack.c.l.b16 %v700
    %v2094 = vunpack.c.h.b16 %v700
    %v2095 = vunpack.c.l.b16 %v701
    %v2096 = vunpack.c.h.b16 %v701
    %v2097 = vunpack.c.l.b16 %v702
    %v2098 = vunpack.c.h.b16 %v702
    %v2099 = vunpack.c.l.b16 %v703
    %v2100 = vunpack.c.h.b16 %v703
    %v2101 = vunpack.c.l.b16 %v704
    %v2102 = vunpack.c.h.b16 %v704
    %v2103 = vunpack.c.l.b16 %v705
    %v2104 = vunpack.c.h.b16 %v705
    %v2105 = vunpack.c.l.b16 %v706
    %v2106 = vunpack.c.h.b16 %v706
    %v2107 = vunpack.c.l.b16 %v707
    %v2108 = vunpack.c.h.b16 %v707
    %v2109 = vunpack.c.l.b16 %v708
    %v2110 = vunpack.c.h.b16 %v708
    %v2111 = vunpack.c.l.b16 %v709
    %v2112 = vunpack.c.h.b16 %v709
    %v2113 = vunpack.c.l.b16 %v710
    %v2114 = vunpack.c.h.b16 %v710
    %v2115 = vunpack.c.l.b16 %v711
    %v2116 = vunpack.c.h.b16 %v711
    %v2117 = vunpack.c.l.b16 %v712
    %v2118 = vunpack.c.h.b16 %v712
    %v2119 = vunpack.c.l.b16 %v713
    %v2120 = vunpack.c.h.b16 %v713
    %v2121 = vunpack.c.l.b16 %v714
    %v2122 = vunpack.c.h.b16 %v714
    %v2123 = vunpack.c.l.b16 %v715
    %v2124 = vunpack.c.h.b16 %v715
    %v2125 = vunpack.c.l.b16 %v716
    %v2126 = vunpack.c.h.b16 %v716
    %v2127 = vunpack.c.l.b16 %v717
    %v2128 = vunpack.c.h.b16 %v717
    %v2129 = vunpack.c.l.b16 %v718
    %v2130 = vunpack.c.h.b16 %v718
    %v2131 = vunpack.c.l.b16 %v719
    %v2132 = vunpack.c.h.b16 %v719
    %v2133 = vunpack.c.l.b16 %v720
    %v2134 = vunpack.c.h.b16 %v720
    %v2135 = vunpack.c.l.b16 %v721
    %v2136 = vunpack.c.h.b16 %v721
    %v2137 = vunpack.c.l.b16 %v722
    %v2138 = vunpack.c.h.b16 %v722
    %v2139 = vunpack.c.l.b16 %v723
    %v2140 = vunpack.c.h.b16 %v723
    %v2141 = vunpack.c.l.b16 %v724
    %v2142 = vunpack.c.h.b16 %v724
    %v2143 = vunpack.c.l.b16 %v725
    %v2144 = vunpack.c.h.b16 %v725
    %v2145 = vunpack.c.l.b16 %v726
    %v2146 = vunpack.c.h.b16 %v726
    %v2147 = vunpack.c.l.b16 %v727
    %v2148 = vunpack.c.h.b16 %v727
    %v2149 = vunpack.c.l.b16 %v728
    %v2150 = vunpack.c.h.b16 %v728
    %v2151 = vunpack.c.l.b16 %v729
    %v2152 = vunpack.c.h.b16 %v729
    %v2153 = vunpack.c.l.b16 %v730
    %v2154 = vunpack.c.h.b16 %v730
    %v2155 = vunpack.c.l.b16 %v731
    %v2156 = vunpack.c.h.b16 %v731
    %v2157 = vunpack.c.l.b16 %v732
    %v2158 = vunpack.c.h.b16 %v732
    %v2159 = vunpack.c.l.b16 %v733
    %v2160 = vunpack.c.h.b16 %v733
    %v2161 = vunpack.c.l.b16 %v734
    %v2162 = vunpack.c.h.b16 %v734
    %v2163 = vunpack.c.l.b16 %v735
    %v2164 = vunpack.c.h.b16 %v735
    %v2165 = vunpack.c.l.b16 %v736
    %v2166 = vunpack.c.h.b16 %v736
    %v2167 = vunpack.c.l.b16 %v737
    %v2168 = vunpack.c.h.b16 %v737
    %v2169 = vunpack.c.l.b16 %v738
    %v2170 = vunpack.c.h.b16 %v738
    %v2171 = vunpack.c.l.b16 %v739
    %v2172 = vunpack.c.h.b16 %v739
    %v2173 = vunpack.c.l.b16 %v740
    %v2174 = vunpack.c.h.b16 %v740
    %v2175 = vunpack.c.l.b16 %v741
    %v2176 = vunpack.c.h.b16 %v741
    %v2177 = vunpack.c.l.b16 %v742
    %v2178 = vunpack.c.h.b16 %v742
    %v2179 = vunpack.c.l.b16 %v743
    %v2180 = vunpack.c.h.b16 %v743
    %v2181 = vunpack.c.l.b16 %v744
    %v2182 = vunpack.c.h.b16 %v744
    %v2183 = vunpack.c.l.b16 %v745
    %v2184 = vunpack.c.h.b16 %v745
    %v2185 = vunpack.c.l.b16 %v746
    %v2186 = vunpack.c.h.b16 %v746
    %v2187 = vunpack.c.l.b16 %v747
    %v2188 = vunpack.c.h.b16 %v747
    %v2189 = vunpack.c.l.b16 %v748
    %v2190 = vunpack.c.h.b16 %v748
    %v2191 = vunpack.c.l.b16 %v749
    %v2192 = vunpack.c.h.b16 %v749
    %v2193 = vunpack.c.l.b16 %v750
    %v2194 = vunpack.c.h.b16 %v750
    %v2195 = vunpack.c.l.b16 %v751
    %v2196 = vunpack.c.h.b16 %v751
    %v2197 = vunpack.c.l.b16 %v752
    %v2198 = vunpack.c.h.b16 %v752
    %v2199 = vunpack.c.l.b16 %v753
    %v2200 = vunpack.c.h.b16 %v753
    %v2201 = vunpack.c.l.b16 %v754
    %v2202 = vunpack.c.h.b16 %v754
    %v2203 = vunpack.c.l.b16 %v755
    %v2204 = vunpack.c.h.b16 %v755
    %v2205 = vunpack.c.l.b16 %v756
    %v2206 = vunpack.c.h.b16 %v756
    %v2207 = vunpack.c.l.b16 %v757
    %v2208 = vunpack.c.h.b16 %v757
    %v2209 = vunpack.c.l.b16 %v758
    %v2210 = vunpack.c.h.b16 %v758
    %v2211 = vunpack.c.l.b16 %v759
    %v2212 = vunpack.c.h.b16 %v759
    %v2213 = vunpack.c.l.b16 %v760
    %v2214 = vunpack.c.h.b16 %v760
    %v2215 = vunpack.c.l.b16 %v761
    %v2216 = vunpack.c.h.b16 %v761
    %v2217 = vunpack.c.l.b16 %v762
    %v2218 = vunpack.c.h.b16 %v762
    %v2219 = vunpack.c.l.b16 %v763
    %v2220 = vunpack.c.h.b16 %v763
    %v2221 = vunpack.c.l.b16 %v764
    %v2222 = vunpack.c.h.b16 %v764
    %v2223 = vunpack.c.l.b16 %v765
    %v2224 = vunpack.c.h.b16 %v765
    %v2225 = vunpack.c.l.b16 %v766
    %v2226 = vunpack.c.h.b16 %v766
    %v2227 = vunpack.c.l.b16 %v767
    %v2228 = vunpack.c.h.b16 %v767
    %v2229 = vunpack.c.l.b16 %v768
    %v2230 = vunpack.c.h.b16 %v768
    %v2231 = vunpack.c.l.b16 %v769
    %v2232 = vunpack.c.h.b16 %v769
    %v2233 = vunpack.c.l.b16 %v770
    %v2234 = vunpack.c.h.b16 %v770
    %v2235 = vunpack.c.l.b16 %v771
    %v2236 = vunpack.c.h.b16 %v771
    %v2237 = vunpack.c.l.b16 %v772
    %v2238 = vunpack.c.h.b16 %v772
    %v2239 = vunpack.c.l.b16 %v773
    %v2240 = vunpack.c.h.b16 %v773
    %v2241 = vunpack.c.l.b16 %v774
    %v2242 = vunpack.c.h.b16 %v774
    %v2243 = vunpack.c.l.b16 %v775
    %v2244 = vunpack.c.h.b16 %v775
    %v2245 = vunpack.c.l.b16 %v776
    %v2246 = vunpack.c.h.b16 %v776
    %v2247 = vunpack.c.l.b16 %v777
    %v2248 = vunpack.c.h.b16 %v777
    %v2249 = vunpack.c.l.b16 %v778
    %v2250 = vunpack.c.h.b16 %v778
    %v2251 = vunpack.c.l.b16 %v779
    %v2252 = vunpack.c.h.b16 %v779
    %v2253 = vunpack.c.l.b16 %v780
    %v2254 = vunpack.c.h.b16 %v780
    %v2255 = vunpack.c.l.b16 %v781
    %v2256 = vunpack.c.h.b16 %v781
    %v2257 = vunpack.c.l.b16 %v782
    %v2258 = vunpack.c.h.b16 %v782
    %v2259 = vunpack.c.l.b16 %v783
    %v2260 = vunpack.c.h.b16 %v783
    %v2261 = vunpack.c.l.b16 %v784
    %v2262 = vunpack.c.h.b16 %v784
    %v2263 = vunpack.c.l.b16 %v785
    %v2264 = vunpack.c.h.b16 %v785
    %v2265 = vunpack.c.l.b16 %v786
    %v2266 = vunpack.c.h.b16 %v786
    %v2267 = vunpack.c.l.b16 %v787
    %v2268 = vunpack.c.h.b16 %v787
    %v2269 = vunpack.c.l.b16 %v788
    %v2270 = vunpack.c.h.b16 %v788
    %v2271 = vunpack.c.l.b16 %v789
    %v2272 = vunpack.c.h.b16 %v789
    %v2273 = vunpack.c.l.b16 %v790
    %v2274 = vunpack.c.h.b16 %v790
    %v2275 = vunpack.c.l.b16 %v791
    %v2276 = vunpack.c.h.b16 %v791
    %v2277 = vunpack.c.l.b16 %v792
    %v2278 = vunpack.c.h.b16 %v792
    %v2279 = vunpack.c.l.b16 %v793
    %v2280 = vunpack.c.h.b16 %v793
    %v2281 = vunpack.c.l.b16 %v794
    %v2282 = vunpack.c.h.b16 %v794
    %v2283 = vunpack.c.l.b16 %v795
    %v2284 = vunpack.c.h.b16 %v795
    %v2285 = vunpack.c.l.b16 %v796
    %v2286 = vunpack.c.h.b16 %v796
    %v2287 = vunpack.c.l.b16 %v797
    %v2288 = vunpack.c.h.b16 %v797
    %v2289 = vunpack.c.l.b16 %v798
    %v2290 = vunpack.c.h.b16 %v798
    %v2291 = vunpack.c.l.b16 %v799
    %v2292 = vunpack.c.h.b16 %v799
    %v2293 = vunpack.c.l.b16 %v800
    %v2294 = vunpack.c.h.b16 %v800
    %v2295 = vunpack.c.l.b16 %v801
    %v2296 = vunpack.c.h.b16 %v801
    %v2297 = vunpack.c.l.b16 %v802
    %v2298 = vunpack.c.h.b16 %v802
    %v2299 = vunpack.c.l.b16 %v803
    %v2300 = vunpack.c.h.b16 %v803
    %v2301 = vunpack.c.l.b16 %v804
    %v2302 = vunpack.c.h.b16 %v804
    %v2303 = vunpack.c.l.b16 %v805
    %v2304 = vunpack.c.h.b16 %v805
    %v2305 = vunpack.c.l.b16 %v806
    %v2306 = vunpack.c.h.b16 %v806
    %v2307 = vunpack.c.l.b16 %v807
    %v2308 = vunpack.c.h.b16 %v807
    %v2309 = vunpack.c.l.b16 %v808
    %v2310 = vunpack.c.h.b16 %v808
    %v2311 = vunpack.c.l.b16 %v809
    %v2312 = vunpack.c.h.b16 %v809
    %v2313 = vunpack.c.l.b16 %v810
    %v2314 = vunpack.c.h.b16 %v810
    %v2315 = vunpack.c.l.b16 %v811
    %v2316 = vunpack.c.h.b16 %v811
    %v2317 = vunpack.c.l.b16 %v812
    %v2318 = vunpack.c.h.b16 %v812
    %v2319 = vunpack.c.l.b16 %v813
    %v2320 = vunpack.c.h.b16 %v813
    %v2321 = vunpack.c.l.b16 %v814
    %v2322 = vunpack.c.h.b16 %v814
    %v2323 = vunpack.c.l.b16 %v815
    %v2324 = vunpack.c.h.b16 %v815
    %v2325 = vunpack.c.l.b16 %v816
    %v2326 = vunpack.c.h.b16 %v816
    %v2327 = vunpack.c.l.b16 %v817
    %v2328 = vunpack.c.h.b16 %v817
    %v2329 = vunpack.c.l.b16 %v818
    %v2330 = vunpack.c.h.b16 %v818
    %v2331 = vunpack.c.l.b16 %v819
    %v2332 = vunpack.c.h.b16 %v819
    %v2333 = vunpack.c.l.b16 %v820
    %v2334 = vunpack.c.h.b16 %v820
    %v2335 = vunpack.c.l.b16 %v821
    %v2336 = vunpack.c.h.b16 %v821
    %v2337 = vunpack.c.l.b16 %v822
    %v2338 = vunpack.c.h.b16 %v822
    %v2339 = vunpack.c.l.b16 %v823
    %v2340 = vunpack.c.h.b16 %v823
    %v2341 = vunpack.c.l.b16 %v824
    %v2342 = vunpack.c.h.b16 %v824
    %v2343 = vunpack.c.l.b16 %v825
    %v2344 = vunpack.c.h.b16 %v825
    %v2345 = vunpack.c.l.b16 %v826
    %v2346 = vunpack.c.h.b16 %v826
    %v2347 = vunpack.c.l.b16 %v827
    %v2348 = vunpack.c.h.b16 %v827
    %v2349 = vunpack.c.l.b16 %v828
    %v2350 = vunpack.c.h.b16 %v828
    %v2351 = vunpack.c.l.b16 %v829
    %v2352 = vunpack.c.h.b16 %v829
    %v2353 = vunpack.c.l.b16 %v830
    %v2354 = vunpack.c.h.b16 %v830
    %v2355 = vunpack.c.l.b16 %v831
    %v2356 = vunpack.c.h.b16 %v831
    %v2357 = vunpack.c.l.b16 %v832
    %v2358 = vunpack.c.h.b16 %v832
    %v2359 = vunpack.c.l.b16 %v833
    %v2360 = vunpack.c.h.b16 %v833
    %v2361 = vunpack.c.l.b16 %v834
    %v2362 = vunpack.c.h.b16 %v834
    %v2363 = vunpack.c.l.b16 %v835
    %v2364 = vunpack.c.h.b16 %v835
    %v2365 = vunpack.c.l.b16 %v836
    %v2366 = vunpack.c.h.b16 %v836
    %v2367 = vunpack.c.l.b16 %v837
    %v2368 = vunpack.c.h.b16 %v837
    %v2369 = vunpack.c.l.b16 %v838
    %v2370 = vunpack.c.h.b16 %v838
    %v2371 = vunpack.c.l.b16 %v839
    %v2372 = vunpack.c.h.b16 %v839
    %v2373 = vunpack.c.l.b16 %v840
    %v2374 = vunpack.c.h.b16 %v840
    %v2375 = vunpack.c.l.b16 %v841
    %v2376 = vunpack.c.h.b16 %v841
    %v2377 = vunpack.c.l.b16 %v842
    %v2378 = vunpack.c.h.b16 %v842
    %v2379 = vunpack.c.l.b16 %v843
    %v2380 = vunpack.c.h.b16 %v843
    %v2381 = vunpack.c.l.b16 %v844
    %v2382 = vunpack.c.h.b16 %v844
    %v2383 = vunpack.c.l.b16 %v845
    %v2384 = vunpack.c.h.b16 %v845
    %v2385 = vunpack.c.l.b16 %v846
    %v2386 = vunpack.c.h.b16 %v846
    %v2387 = vunpack.c.l.b16 %v847
    %v2388 = vunpack.c.h.b16 %v847
    %v2389 = vunpack.c.l.b16 %v848
    %v2390 = vunpack.c.h.b16 %v848
    %v2391 = vunpack.c.l.b16 %v849
    %v2392 = vunpack.c.h.b16 %v849
    %v2393 = vunpack.c.l.b16 %v850
    %v2394 = vunpack.c.h.b16 %v850
    %v2395 = vunpack.c.l.b16 %v851
    %v2396 = vunpack.c.h.b16 %v851
    %v2397 = vunpack.c.l.b16 %v852
    %v2398 = vunpack.c.h.b16 %v852
    %v2399 = vunpack.c.l.b16 %v853
    %v2400 = vunpack.c.h.b16 %v853
    %v2401 = vunpack.c.l.b16 %v854
    %v2402 = vunpack.c.h.b16 %v854
    %v2403 = vpack.c.b16 %v1381, %v1379
    %v2404 = vpack.c.b16 %v1382, %v1380
    %v2405 = vpack.c.b16 %v1385, %v1383
    %v2406 = vpack.c.b16 %v1386, %v1384
    %v2407 = vpack.c.b16 %v1389, %v1387
    %v2408 = vpack.c.b16 %v1390, %v1388
    %v2409 = vpack.c.b16 %v1393, %v1391
    %v2410 = vpack.c.b16 %v1394, %v1392
    %v2411 = vpack.c.b16 %v1397, %v1395
    %v2412 = vpack.c.b16 %v1398, %v1396
    %v2413 = vpack.c.b16 %v1401, %v1399
    %v2414 = vpack.c.b16 %v1402, %v1400
    %v2415 = vpack.c.b16 %v1405, %v1403
    %v2416 = vpack.c.b16 %v1406, %v1404
    %v2417 = vpack.c.b16 %v1409, %v1407
    %v2418 = vpack.c.b16 %v1410, %v1408
    %v2419 = vpack.c.b16 %v1413, %v1411
    %v2420 = vpack.c.b16 %v1414, %v1412
    %v2421 = vpack.c.b16 %v1417, %v1415
    %v2422 = vpack.c.b16 %v1418, %v1416
    %v2423 = vpack.c.b16 %v1421, %v1419
    %v2424 = vpack.c.b16 %v1422, %v1420
    %v2425 = vpack.c.b16 %v1425, %v1423
    %v2426 = vpack.c.b16 %v1426, %v1424
    %v2427 = vpack.c.b16 %v1429, %v1427
    %v2428 = vpack.c.b16 %v1430, %v1428
    %v2429 = vpack.c.b16 %v1433, %v1431
    %v2430 = vpack.c.b16 %v1434, %v1432
    %v2431 = vpack.c.b16 %v1437, %v1435
    %v2432 = vpack.c.b16 %v1438, %v1436
    %v2433 = vpack.c.b16 %v1441, %v1439
    %v2434 = vpack.c.b16 %v1442, %v1440
    %v2435 = vpack.c.b16 %v1445, %v1443
    %v2436 = vpack.c.b16 %v1446, %v1444
    %v2437 = vpack.c.b16 %v1449, %v1447
    %v2438 = vpack.c.b16 %v1450, %v1448
    %v2439 = vpack.c.b16 %v1453, %v1451
    %v2440 = vpack.c.b16 %v1454, %v1452
    %v2441 = vpack.c.b16 %v1457, %v1455
    %v2442 = vpack.c.b16 %v1458, %v1456
    %v2443 = vpack.c.b16 %v1461, %v1459
    %v2444 = vpack.c.b16 %v1462, %v1460
    %v2445 = vpack.c.b16 %v1465, %v1463
    %v2446 = vpack.c.b16 %v1466, %v1464
    %v2447 = vpack.c.b16 %v1469, %v1467
    %v2448 = vpack.c.b16 %v1470, %v1468
    %v2449 = vpack.c.b16 %v1473, %v1471
    %v2450 = vpack.c.b16 %v1474, %v1472
    %v2451 = vpack.c.b16 %v1477, %v1475
    %v2452 = vpack.c.b16 %v1478, %v1476
    %v2453 = vpack.c.b16 %v1481, %v1479
    %v2454 = vpack.c.b16 %v1482, %v1480
    %v2455 = vpack.c.b16 %v1485, %v1483
    %v2456 = vpack.c.b16 %v1486, %v1484
    %v2457 = vpack.c.b16 %v1489, %v1487
    %v2458 = vpack.c.b16 %v1490, %v1488
    %v2459 = vpack.c.b16 %v1493, %v1491
    %v2460 = vpack.c.b16 %v1494, %v1492
    %v2461 = vpack.c.b16 %v1497, %v1495
    %v2462 = vpack.c.b16 %v1498, %v1496
    %v2463 = vpack.c.b16 %v1501, %v1499
    %v2464 = vpack.c.b16 %v1502, %v1500
    %v2465 = vpack.c.b16 %v1505, %v1503
    %v2466 = vpack.c.b16 %v1506, %v1504
    %v2467 = vpack.c.b16 %v1509, %v1507
    %v2468 = vpack.c.b16 %v1510, %v1508
    %v2469 = vpack.c.b16 %v1513, %v1511
    %v2470 = vpack.c.b16 %v1514, %v1512
    %v2471 = vpack.c.b16 %v1517, %v1515
    %v2472 = vpack.c.b16 %v1518, %v1516
    %v2473 = vpack.c.b16 %v1521, %v1519
    %v2474 = vpack.c.b16 %v1522, %v1520
    %v2475 = vpack.c.b16 %v1525, %v1523
    %v2476 = vpack.c.b16 %v1526, %v1524
    %v2477 = vpack.c.b16 %v1529, %v1527
    %v2478 = vpack.c.b16 %v1530, %v1528
    %v2479 = vpack.c.b16 %v1533, %v1531
    %v2480 = vpack.c.b16 %v1534, %v1532
    %v2481 = vpack.c.b16 %v1537, %v1535
    %v2482 = vpack.c.b16 %v1538, %v1536
    %v2483 = vpack.c.b16 %v1541, %v1539
    %v2484 = vpack.c.b16 %v1542, %v1540
    %v2485 = vpack.c.b16 %v1545, %v1543
    %v2486 = vpack.c.b16 %v1546, %v1544
    %v2487 = vpack.c.b16 %v1549, %v1547
    %v2488 = vpack.c.b16 %v1550, %v1548
    %v2489 = vpack.c.b16 %v1553, %v1551
    %v2490 = vpack.c.b16 %v1554, %v1552
    %v2491 = vpack.c.b16 %v1557, %v1555
    %v2492 = vpack.c.b16 %v1558, %v1556
    %v2493 = vpack.c.b16 %v1561, %v1559
    %v2494 = vpack.c.b16 %v1562, %v1560
    %v2495 = vpack.c.b16 %v1565, %v1563
    %v2496 = vpack.c.b16 %v1566, %v1564
    %v2497 = vpack.c.b16 %v1569, %v1567
    %v2498 = vpack.c.b16 %v1570, %v1568
    %v2499 = vpack.c.b16 %v1573, %v1571
    %v2500 = vpack.c.b16 %v1574, %v1572
    %v2501 = vpack.c.b16 %v1577, %v1575
    %v2502 = vpack.c.b16 %v1578, %v1576
    %v2503 = vpack.c.b16 %v1581, %v1579
    %v2504 = vpack.c.b16 %v1582, %v1580
    %v2505 = vpack.c.b16 %v1585, %v1583
    %v2506 = vpack.c.b16 %v1586, %v1584
    %v2507 = vpack.c.b16 %v1589, %v1587
    %v2508 = vpack.c.b16 %v1590, %v1588
    %v2509 = vpack.c.b16 %v1593, %v1591
    %v2510 = vpack.c.b16 %v1594, %v1592
    %v2511 = vpack.c.b16 %v1597, %v1595
    %v2512 = vpack.c.b16 %v1598, %v1596
    %v2513 = vpack.c.b16 %v1601, %v1599
    %v2514 = vpack.c.b16 %v1602, %v1600
    %v2515 = vpack.c.b16 %v1605, %v1603
    %v2516 = vpack.c.b16 %v1606, %v1604
    %v2517 = vpack.c.b16 %v1609, %v1607
    %v2518 = vpack.c.b16 %v1610, %v1608
    %v2519 = vpack.c.b16 %v1613, %v1611
    %v2520 = vpack.c.b16 %v1614, %v1612
    %v2521 = vpack.c.b16 %v1617, %v1615
    %v2522 = vpack.c.b16 %v1618, %v1616
    %v2523 = vpack.c.b16 %v1621, %v1619
    %v2524 = vpack.c.b16 %v1622, %v1620
    %v2525 = vpack.c.b16 %v1625, %v1623
    %v2526 = vpack.c.b16 %v1626, %v1624
    %v2527 = vpack.c.b16 %v1629, %v1627
    %v2528 = vpack.c.b16 %v1630, %v1628
    %v2529 = vpack.c.b16 %v1633, %v1631
    %v2530 = vpack.c.b16 %v1634, %v1632
    %v2531 = vpack.c.b16 %v1637, %v1635
    %v2532 = vpack.c.b16 %v1638, %v1636
    %v2533 = vpack.c.b16 %v1641, %v1639
    %v2534 = vpack.c.b16 %v1642, %v1640
    %v2535 = vpack.c.b16 %v1645, %v1643
    %v2536 = vpack.c.b16 %v1646, %v1644
    %v2537 = vpack.c.b16 %v1649, %v1647
    %v2538 = vpack.c.b16 %v1650, %v1648
    %v2539 = vpack.c.b16 %v1653, %v1651
    %v2540 = vpack.c.b16 %v1654, %v1652
    %v2541 = vpack.c.b16 %v1657, %v1655
    %v2542 = vpack.c.b16 %v1658, %v1656
    %v2543 = vpack.c.b16 %v1661, %v1659
    %v2544 = vpack.c.b16 %v1662, %v1660
    %v2545 = vpack.c.b16 %v1665, %v1663
    %v2546 = vpack.c.b16 %v1666, %v1664
    %v2547 = vpack.c.b16 %v1669, %v1667
    %v2548 = vpack.c.b16 %v1670, %v1668
    %v2549 = vpack.c.b16 %v1673, %v1671
    %v2550 = vpack.c.b16 %v1674, %v1672
    %v2551 = vpack.c.b16 %v1677, %v1675
    %v2552 = vpack.c.b16 %v1678, %v1676
    %v2553 = vpack.c.b16 %v1681, %v1679
    %v2554 = vpack.c.b16 %v1682, %v1680
    %v2555 = vpack.c.b16 %v1685, %v1683
    %v2556 = vpack.c.b16 %v1686, %v1684
    %v2557 = vpack.c.b16 %v1689, %v1687
    %v2558 = vpack.c.b16 %v1690, %v1688
    %v2559 = vpack.c.b16 %v1693, %v1691
    %v2560 = vpack.c.b16 %v1694, %v1692
    %v2561 = vpack.c.b16 %v1697, %v1695
    %v2562 = vpack.c.b16 %v1698, %v1696
    %v2563 = vpack.c.b16 %v1701, %v1699
    %v2564 = vpack.c.b16 %v1702, %v1700
    %v2565 = vpack.c.b16 %v1705, %v1703
    %v2566 = vpack.c.b16 %v1706, %v1704
    %v2567 = vpack.c.b16 %v1709, %v1707
    %v2568 = vpack.c.b16 %v1710, %v1708
    %v2569 = vpack.c.b16 %v1713, %v1711
    %v2570 = vpack.c.b16 %v1714, %v1712
    %v2571 = vpack.c.b16 %v1717, %v1715
    %v2572 = vpack.c.b16 %v1718, %v1716
    %v2573 = vpack.c.b16 %v1721, %v1719
    %v2574 = vpack.c.b16 %v1722, %v1720
    %v2575 = vpack.c.b16 %v1725, %v1723
    %v2576 = vpack.c.b16 %v1726, %v1724
    %v2577 = vpack.c.b16 %v1729, %v1727
    %v2578 = vpack.c.b16 %v1730, %v1728
    %v2579 = vpack.c.b16 %v1733, %v1731
    %v2580 = vpack.c.b16 %v1734, %v1732
    %v2581 = vpack.c.b16 %v1737, %v1735
    %v2582 = vpack.c.b16 %v1738, %v1736
    %v2583 = vpack.c.b16 %v1741, %v1739
    %v2584 = vpack.c.b16 %v1742, %v1740
    %v2585 = vpack.c.b16 %v1745, %v1743
    %v2586 = vpack.c.b16 %v1746, %v1744
    %v2587 = vpack.c.b16 %v1749, %v1747
    %v2588 = vpack.c.b16 %v1750, %v1748
    %v2589 = vpack.c.b16 %v1753, %v1751
    %v2590 = vpack.c.b16 %v1754, %v1752
    %v2591 = vpack.c.b16 %v1757, %v1755
    %v2592 = vpack.c.b16 %v1758, %v1756
    %v2593 = vpack.c.b16 %v1761, %v1759
    %v2594 = vpack.c.b16 %v1762, %v1760
    %v2595 = vpack.c.b16 %v1765, %v1763
    %v2596 = vpack.c.b16 %v1766, %v1764
    %v2597 = vpack.c.b16 %v1769, %v1767
    %v2598 = vpack.c.b16 %v1770, %v1768
    %v2599 = vpack.c.b16 %v1773, %v1771
    %v2600 = vpack.c.b16 %v1774, %v1772
    %v2601 = vpack.c.b16 %v1777, %v1775
    %v2602 = vpack.c.b16 %v1778, %v1776
    %v2603 = vpack.c.b16 %v1781, %v1779
    %v2604 = vpack.c.b16 %v1782, %v1780
    %v2605 = vpack.c.b16 %v1785, %v1783
    %v2606 = vpack.c.b16 %v1786, %v1784
    %v2607 = vpack.c.b16 %v1789, %v1787
    %v2608 = vpack.c.b16 %v1790, %v1788
    %v2609 = vpack.c.b16 %v1793, %v1791
    %v2610 = vpack.c.b16 %v1794, %v1792
    %v2611 = vpack.c.b16 %v1797, %v1795
    %v2612 = vpack.c.b16 %v1798, %v1796
    %v2613 = vpack.c.b16 %v1801, %v1799
    %v2614 = vpack.c.b16 %v1802, %v1800
    %v2615 = vpack.c.b16 %v1805, %v1803
    %v2616 = vpack.c.b16 %v1806, %v1804
    %v2617 = vpack.c.b16 %v1809, %v1807
    %v2618 = vpack.c.b16 %v1810, %v1808
    %v2619 = vpack.c.b16 %v1813, %v1811
    %v2620 = vpack.c.b16 %v1814, %v1812
    %v2621 = vpack.c.b16 %v1817, %v1815
    %v2622 = vpack.c.b16 %v1818, %v1816
    %v2623 = vpack.c.b16 %v1821, %v1819
    %v2624 = vpack.c.b16 %v1822, %v1820
    %v2625 = vpack.c.b16 %v1825, %v1823
    %v2626 = vpack.c.b16 %v1826, %v1824
    %v2627 = vpack.c.b16 %v1829, %v1827
    %v2628 = vpack.c.b16 %v1830, %v1828
    %v2629 = vpack.c.b16 %v1833, %v1831
    %v2630 = vpack.c.b16 %v1834, %v1832
    %v2631 = vpack.c.b16 %v1837, %v1835
    %v2632 = vpack.c.b16 %v1838, %v1836
    %v2633 = vpack.c.b16 %v1841, %v1839
    %v2634 = vpack.c.b16 %v1842, %v1840
    %v2635 = vpack.c.b16 %v1845, %v1843
    %v2636 = vpack.c.b16 %v1846, %v1844
    %v2637 = vpack.c.b16 %v1849, %v1847
    %v2638 = vpack.c.b16 %v1850, %v1848
    %v2639 = vpack.c.b16 %v1853, %v1851
    %v2640 = vpack.c.b16 %v1854, %v1852
    %v2641 = vpack.c.b16 %v1857, %v1855
    %v2642 = vpack.c.b16 %v1858, %v1856
    %v2643 = vpack.c.b16 %v1861, %v1859
    %v2644 = vpack.c.b16 %v1862, %v1860
    %v2645 = vpack.c.b16 %v1865, %v1863
    %v2646 = vpack.c.b16 %v1866, %v1864
    %v2647 = vpack.c.b16 %v1869, %v1867
    %v2648 = vpack.c.b16 %v1870, %v1868
    %v2649 = vpack.c.b16 %v1873, %v1871
    %v2650 = vpack.c.b16 %v1874, %v1872
    %v2651 = vpack.c.b16 %v1877, %v1875
    %v2652 = vpack.c.b16 %v1878, %v1876
    %v2653 = vpack.c.b16 %v1881, %v1879
    %v2654 = vpack.c.b16 %v1882, %v1880
    %v2655 = vpack.c.b16 %v1885, %v1883
    %v2656 = vpack.c.b16 %v1886, %v1884
    %v2657 = vpack.c.b16 %v1889, %v1887
    %v2658 = vpack.c.b16 %v1890, %v1888
    %v2659 = vpack.c.b16 %v1893, %v1891
    %v2660 = vpack.c.b16 %v1894, %v1892
    %v2661 = vpack.c.b16 %v1897, %v1895
    %v2662 = vpack.c.b16 %v1898, %v1896
    %v2663 = vpack.c.b16 %v1901, %v1899
    %v2664 = vpack.c.b16 %v1902, %v1900
    %v2665 = vpack.c.b16 %v1905, %v1903
    %v2666 = vpack.c.b16 %v1906, %v1904
    %v2667 = vpack.c.b16 %v1909, %v1907
    %v2668 = vpack.c.b16 %v1910, %v1908
    %v2669 = vpack.c.b16 %v1913, %v1911
    %v2670 = vpack.c.b16 %v1914, %v1912
    %v2671 = vpack.c.b16 %v1917, %v1915
    %v2672 = vpack.c.b16 %v1918, %v1916
    %v2673 = vpack.c.b16 %v1921, %v1919
    %v2674 = vpack.c.b16 %v1922, %v1920
    %v2675 = vpack.c.b16 %v1925, %v1923
    %v2676 = vpack.c.b16 %v1926, %v1924
    %v2677 = vpack.c.b16 %v1929, %v1927
    %v2678 = vpack.c.b16 %v1930, %v1928
    %v2679 = vpack.c.b16 %v1933, %v1931
    %v2680 = vpack.c.b16 %v1934, %v1932
    %v2681 = vpack.c.b16 %v1937, %v1935
    %v2682 = vpack.c.b16 %v1938, %v1936
    %v2683 = vpack.c.b16 %v1941, %v1939
    %v2684 = vpack.c.b16 %v1942, %v1940
    %v2685 = vpack.c.b16 %v1945, %v1943
    %v2686 = vpack.c.b16 %v1946, %v1944
    %v2687 = vpack.c.b16 %v1949, %v1947
    %v2688 = vpack.c.b16 %v1950, %v1948
    %v2689 = vpack.c.b16 %v1953, %v1951
    %v2690 = vpack.c.b16 %v1954, %v1952
    %v2691 = vpack.c.b16 %v1957, %v1955
    %v2692 = vpack.c.b16 %v1958, %v1956
    %v2693 = vpack.c.b16 %v1961, %v1959
    %v2694 = vpack.c.b16 %v1962, %v1960
    %v2695 = vpack.c.b16 %v1965, %v1963
    %v2696 = vpack.c.b16 %v1966, %v1964
    %v2697 = vpack.c.b16 %v1969, %v1967
    %v2698 = vpack.c.b16 %v1970, %v1968
    %v2699 = vpack.c.b16 %v1973, %v1971
    %v2700 = vpack.c.b16 %v1974, %v1972
    %v2701 = vpack.c.b16 %v1977, %v1975
    %v2702 = vpack.c.b16 %v1978, %v1976
    %v2703 = vpack.c.b16 %v1981, %v1979
    %v2704 = vpack.c.b16 %v1982, %v1980
    %v2705 = vpack.c.b16 %v1985, %v1983
    %v2706 = vpack.c.b16 %v1986, %v1984
    %v2707 = vpack.c.b16 %v1989, %v1987
    %v2708 = vpack.c.b16 %v1990, %v1988
    %v2709 = vpack.c.b16 %v1993, %v1991
    %v2710 = vpack.c.b16 %v1994, %v1992
    %v2711 = vpack.c.b16 %v1997, %v1995
    %v2712 = vpack.c.b16 %v1998, %v1996
    %v2713 = vpack.c.b16 %v2001, %v1999
    %v2714 = vpack.c.b16 %v2002, %v2000
    %v2715 = vpack.c.b16 %v2005, %v2003
    %v2716 = vpack.c.b16 %v2006, %v2004
    %v2717 = vpack.c.b16 %v2009, %v2007
    %v2718 = vpack.c.b16 %v2010, %v2008
    %v2719 = vpack.c.b16 %v2013, %v2011
    %v2720 = vpack.c.b16 %v2014, %v2012
    %v2721 = vpack.c.b16 %v2017, %v2015
    %v2722 = vpack.c.b16 %v2018, %v2016
    %v2723 = vpack.c.b16 %v2021, %v2019
    %v2724 = vpack.c.b16 %v2022, %v2020
    %v2725 = vpack.c.b16 %v2025, %v2023
    %v2726 = vpack.c.b16 %v2026, %v2024
    %v2727 = vpack.c.b16 %v2029, %v2027
    %v2728 = vpack.c.b16 %v2030, %v2028
    %v2729 = vpack.c.b16 %v2033, %v2031
    %v2730 = vpack.c.b16 %v2034, %v2032
    %v2731 = vpack.c.b16 %v2037, %v2035
    %v2732 = vpack.c.b16 %v2038, %v2036
    %v2733 = vpack.c.b16 %v2041, %v2039
    %v2734 = vpack.c.b16 %v2042, %v2040
    %v2735 = vpack.c.b16 %v2045, %v2043
    %v2736 = vpack.c.b16 %v2046, %v2044
    %v2737 = vpack.c.b16 %v2049, %v2047
    %v2738 = vpack.c.b16 %v2050, %v2048
    %v2739 = vpack.c.b16 %v2053, %v2051
    %v2740 = vpack.c.b16 %v2054, %v2052
    %v2741 = vpack.c.b16 %v2057, %v2055
    %v2742 = vpack.c.b16 %v2058, %v2056
    %v2743 = vpack.c.b16 %v2061, %v2059
    %v2744 = vpack.c.b16 %v2062, %v2060
    %v2745 = vpack.c.b16 %v2065, %v2063
    %v2746 = vpack.c.b16 %v2066, %v2064
    %v2747 = vpack.c.b16 %v2069, %v2067
    %v2748 = vpack.c.b16 %v2070, %v2068
    %v2749 = vpack.c.b16 %v2073, %v2071
    %v2750 = vpack.c.b16 %v2074, %v2072
    %v2751 = vpack.c.b16 %v2077, %v2075
    %v2752 = vpack.c.b16 %v2078, %v2076
    %v2753 = vpack.c.b16 %v2081, %v2079
    %v2754 = vpack.c.b16 %v2082, %v2080
    %v2755 = vpack.c.b16 %v2085, %v2083
    %v2756 = vpack.c.b16 %v2086, %v2084
    %v2757 = vpack.c.b16 %v2089, %v2087
    %v2758 = vpack.c.b16 %v2090, %v2088
    %v2759 = vpack.c.b16 %v2093, %v2091
    %v2760 = vpack.c.b16 %v2094, %v2092
    %v2761 = vpack.c.b16 %v2097, %v2095
    %v2762 = vpack.c.b16 %v2098, %v2096
    %v2763 = vpack.c.b16 %v2101, %v2099
    %v2764 = vpack.c.b16 %v2102, %v2100
    %v2765 = vpack.c.b16 %v2105, %v2103
    %v2766 = vpack.c.b16 %v2106, %v2104
    %v2767 = vpack.c.b16 %v2109, %v2107
    %v2768 = vpack.c.b16 %v2110, %v2108
    %v2769 = vpack.c.b16 %v2113, %v2111
    %v2770 = vpack.c.b16 %v2114, %v2112
    %v2771 = vpack.c.b16 %v2117, %v2115
    %v2772 = vpack.c.b16 %v2118, %v2116
    %v2773 = vpack.c.b16 %v2121, %v2119
    %v2774 = vpack.c.b16 %v2122, %v2120
    %v2775 = vpack.c.b16 %v2125, %v2123
    %v2776 = vpack.c.b16 %v2126, %v2124
    %v2777 = vpack.c.b16 %v2129, %v2127
    %v2778 = vpack.c.b16 %v2130, %v2128
    %v2779 = vpack.c.b16 %v2133, %v2131
    %v2780 = vpack.c.b16 %v2134, %v2132
    %v2781 = vpack.c.b16 %v2137, %v2135
    %v2782 = vpack.c.b16 %v2138, %v2136
    %v2783 = vpack.c.b16 %v2141, %v2139
    %v2784 = vpack.c.b16 %v2142, %v2140
    %v2785 = vpack.c.b16 %v2145, %v2143
    %v2786 = vpack.c.b16 %v2146, %v2144
    %v2787 = vpack.c.b16 %v2149, %v2147
    %v2788 = vpack.c.b16 %v2150, %v2148
    %v2789 = vpack.c.b16 %v2153, %v2151
    %v2790 = vpack.c.b16 %v2154, %v2152
    %v2791 = vpack.c.b16 %v2157, %v2155
    %v2792 = vpack.c.b16 %v2158, %v2156
    %v2793 = vpack.c.b16 %v2161, %v2159
    %v2794 = vpack.c.b16 %v2162, %v2160
    %v2795 = vpack.c.b16 %v2165, %v2163
    %v2796 = vpack.c.b16 %v2166, %v2164
    %v2797 = vpack.c.b16 %v2169, %v2167
    %v2798 = vpack.c.b16 %v2170, %v2168
    %v2799 = vpack.c.b16 %v2173, %v2171
    %v2800 = vpack.c.b16 %v2174, %v2172
    %v2801 = vpack.c.b16 %v2177, %v2175
    %v2802 = vpack.c.b16 %v2178, %v2176
    %v2803 = vpack.c.b16 %v2181, %v2179
    %v2804 = vpack.c.b16 %v2182, %v2180
    %v2805 = vpack.c.b16 %v2185, %v2183
    %v2806 = vpack.c.b16 %v2186, %v2184
    %v2807 = vpack.c.b16 %v2189, %v2187
    %v2808 = vpack.c.b16 %v2190, %v2188
    %v2809 = vpack.c.b16 %v2193, %v2191
    %v2810 = vpack.c.b16 %v2194, %v2192
    %v2811 = vpack.c.b16 %v2197, %v2195
    %v2812 = vpack.c.b16 %v2198, %v2196
    %v2813 = vpack.c.b16 %v2201, %v2199
    %v2814 = vpack.c.b16 %v2202, %v2200
    %v2815 = vpack.c.b16 %v2205, %v2203
    %v2816 = vpack.c.b16 %v2206, %v2204
    %v2817 = vpack.c.b16 %v2209, %v2207
    %v2818 = vpack.c.b16 %v2210, %v2208
    %v2819 = vpack.c.b16 %v2213, %v2211
    %v2820 = vpack.c.b16 %v2214, %v2212
    %v2821 = vpack.c.b16 %v2217, %v2215
    %v2822 = vpack.c.b16 %v2218, %v2216
    %v2823 = vpack.c.b16 %v2221, %v2219
    %v2824 = vpack.c.b16 %v2222, %v2220
    %v2825 = vpack.c.b16 %v2225, %v2223
    %v2826 = vpack.c.b16 %v2226, %v2224
    %v2827 = vpack.c.b16 %v2229, %v2227
    %v2828 = vpack.c.b16 %v2230, %v2228
    %v2829 = vpack.c.b16 %v2233, %v2231
    %v2830 = vpack.c.b16 %v2234, %v2232
    %v2831 = vpack.c.b16 %v2237, %v2235
    %v2832 = vpack.c.b16 %v2238, %v2236
    %v2833 = vpack.c.b16 %v2241, %v2239
    %v2834 = vpack.c.b16 %v2242, %v2240
    %v2835 = vpack.c.b16 %v2245, %v2243
    %v2836 = vpack.c.b16 %v2246, %v2244
    %v2837 = vpack.c.b16 %v2249, %v2247
    %v2838 = vpack.c.b16 %v2250, %v2248
    %v2839 = vpack.c.b16 %v2253, %v2251
    %v2840 = vpack.c.b16 %v2254, %v2252
    %v2841 = vpack.c.b16 %v2257, %v2255
    %v2842 = vpack.c.b16 %v2258, %v2256
    %v2843 = vpack.c.b16 %v2261, %v2259
    %v2844 = vpack.c.b16 %v2262, %v2260
    %v2845 = vpack.c.b16 %v2265, %v2263
    %v2846 = vpack.c.b16 %v2266, %v2264
    %v2847 = vpack.c.b16 %v2269, %v2267
    %v2848 = vpack.c.b16 %v2270, %v2268
    %v2849 = vpack.c.b16 %v2273, %v2271
    %v2850 = vpack.c.b16 %v2274, %v2272
    %v2851 = vpack.c.b16 %v2277, %v2275
    %v2852 = vpack.c.b16 %v2278, %v2276
    %v2853 = vpack.c.b16 %v2281, %v2279
    %v2854 = vpack.c.b16 %v2282, %v2280
    %v2855 = vpack.c.b16 %v2285, %v2283
    %v2856 = vpack.c.b16 %v2286, %v2284
    %v2857 = vpack.c.b16 %v2289, %v2287
    %v2858 = vpack.c.b16 %v2290, %v2288
    %v2859 = vpack.c.b16 %v2293, %v2291
    %v2860 = vpack.c.b16 %v2294, %v2292
    %v2861 = vpack.c.b16 %v2297, %v2295
    %v2862 = vpack.c.b16 %v2298, %v2296
    %v2863 = vpack.c.b16 %v2301, %v2299
    %v2864 = vpack.c.b16 %v2302, %v2300
    %v2865 = vpack.c.b16 %v2305, %v2303
    %v2866 = vpack.c.b16 %v2306, %v2304
    %v2867 = vpack.c.b16 %v2309, %v2307
    %v2868 = vpack.c.b16 %v2310, %v2308
    %v2869 = vpack.c.b16 %v2313, %v2311
    %v2870 = vpack.c.b16 %v2314, %v2312
    %v2871 = vpack.c.b16 %v2317, %v2315
    %v2872 = vpack.c.b16 %v2318, %v2316
    %v2873 = vpack.c.b16 %v2321, %v2319
    %v2874 = vpack.c.b16 %v2322, %v2320
    %v2875 = vpack.c.b16 %v2325, %v2323
    %v2876 = vpack.c.b16 %v2326, %v2324
    %v2877 = vpack.c.b16 %v2329, %v2327
    %v2878 = vpack.c.b16 %v2330, %v2328
    %v2879 = vpack.c.b16 %v2333, %v2331
    %v2880 = vpack.c.b16 %v2334, %v2332
    %v2881 = vpack.c.b16 %v2337, %v2335
    %v2882 = vpack.c.b16 %v2338, %v2336
    %v2883 = vpack.c.b16 %v2341, %v2339
    %v2884 = vpack.c.b16 %v2342, %v2340
    %v2885 = vpack.c.b16 %v2345, %v2343
    %v2886 = vpack.c.b16 %v2346, %v2344
    %v2887 = vpack.c.b16 %v2349, %v2347
    %v2888 = vpack.c.b16 %v2350, %v2348
    %v2889 = vpack.c.b16 %v2353, %v2351
    %v2890 = vpack.c.b16 %v2354, %v2352
    %v2891 = vpack.c.b16 %v2357, %v2355
    %v2892 = vpack.c.b16 %v2358, %v2356
    %v2893 = vpack.c.b16 %v2361, %v2359
    %v2894 = vpack.c.b16 %v2362, %v2360
    %v2895 = vpack.c.b16 %v2365, %v2363
    %v2896 = vpack.c.b16 %v2366, %v2364
    %v2897 = vpack.c.b16 %v2369, %v2367
    %v2898 = vpack.c.b16 %v2370, %v2368
    %v2899 = vpack.c.b16 %v2373, %v2371
    %v2900 = vpack.c.b16 %v2374, %v2372
    %v2901 = vpack.c.b16 %v2377, %v2375
    %v2902 = vpack.c.b16 %v2378, %v2376
    %v2903 = vpack.c.b16 %v2381, %v2379
    %v2904 = vpack.c.b16 %v2382, %v2380
    %v2905 = vpack.c.b16 %v2385, %v2383
    %v2906 = vpack.c.b16 %v2386, %v2384
    %v2907 = vpack.c.b16 %v2389, %v2387
    %v2908 = vpack.c.b16 %v2390, %v2388
    %v2909 = vpack.c.b16 %v2393, %v2391
    %v2910 = vpack.c.b16 %v2394, %v2392
    %v2911 = vpack.c.b16 %v2397, %v2395
    %v2912 = vpack.c.b16 %v2398, %v2396
    %v2913 = vpack.c.b16 %v2401, %v2399
    %v2914 = vpack.c.b16 %v2402, %v2400
    %3427 = vmatprep.subr.bf16.mxu0 %v2404
    %3428 = vmatpush1.bf16.msra.mxu0 %v2403
    %3429 = vmatprep.subr.bf16.mxu0 %v2406
    %3430 = vmatpush1.bf16.msra.mxu0 %v2405
    %3431 = vmatprep.subr.bf16.mxu0 %v2408
    %3432 = vmatpush1.bf16.msra.mxu0 %v2407
    %3433 = vmatprep.subr.bf16.mxu0 %v2410
    %3434 = vmatpush1.bf16.msra.mxu0 %v2409
    %3435 = vmatprep.subr.bf16.mxu0 %v2412
    %3436 = vmatpush1.bf16.msra.mxu0 %v2411
    %3437 = vmatprep.subr.bf16.mxu0 %v2414
    %3438 = vmatpush1.bf16.msra.mxu0 %v2413
    %3439 = vmatprep.subr.bf16.mxu0 %v2416
    %3440 = vmatpush1.bf16.msra.mxu0 %v2415
    %3441 = vmatprep.subr.bf16.mxu0 %v2418
    %3442 = vmatpush1.bf16.msra.mxu0 %v2417
    %3443 = vmatprep.subr.bf16.mxu0 %v2420
    %3444 = vmatpush1.bf16.msra.mxu0 %v2419
    %3445 = vmatprep.subr.bf16.mxu0 %v2422
    %3446 = vmatpush1.bf16.msra.mxu0 %v2421
    %3447 = vmatprep.subr.bf16.mxu0 %v2424
    %3448 = vmatpush1.bf16.msra.mxu0 %v2423
    %3449 = vmatprep.subr.bf16.mxu0 %v2426
    %3450 = vmatpush1.bf16.msra.mxu0 %v2425
    %3451 = vmatprep.subr.bf16.mxu0 %v2428
    %3452 = vmatpush1.bf16.msra.mxu0 %v2427
    %3453 = vmatprep.subr.bf16.mxu0 %v2430
    %3454 = vmatpush1.bf16.msra.mxu0 %v2429
    %3455 = vmatprep.subr.bf16.mxu0 %v2432
    %3456 = vmatpush1.bf16.msra.mxu0 %v2431
    %3457 = vmatprep.subr.bf16.mxu0 %v2434
    %3458 = vmatpush1.bf16.msra.mxu0 %v2433
    %3459 = vmatprep.mubr.bf16.mxu0 %v312
    %3460 = vmatmul.mubr.bf16.gmra.mrb[0].mxu0 %v311
    %v3461 = vpop.f32.mrb[0].mxu0
    %v3462 = vadd.f32 %v860, %v3461
    %v3463 = vpop.f32.mrb[0].mxu0
    %v3464 = vadd.f32 %v864, %v3463
    %v3465 = vpop.f32.mrb[0].mxu0
    %v3466 = vadd.f32 %v860, %v3465
    %v3467 = vpop.f32.mrb[0].mxu0
    %v3468 = vadd.f32 %v864, %v3467
    %3469 = vdwg.mxu0
    %3470 = vmatprep.subr.bf16.mxu0 %v2436
    %3471 = vmatpush1.bf16.msra.mxu0 %v2435
    %3472 = vmatprep.subr.bf16.mxu0 %v2438
    %3473 = vmatpush1.bf16.msra.mxu0 %v2437
    %3474 = vmatprep.subr.bf16.mxu0 %v2440
    %3475 = vmatpush1.bf16.msra.mxu0 %v2439
    %3476 = vmatprep.subr.bf16.mxu0 %v2442
    %3477 = vmatpush1.bf16.msra.mxu0 %v2441
    %3478 = vmatprep.subr.bf16.mxu0 %v2444
    %3479 = vmatpush1.bf16.msra.mxu0 %v2443
    %3480 = vmatprep.subr.bf16.mxu0 %v2446
    %3481 = vmatpush1.bf16.msra.mxu0 %v2445
    %3482 = vmatprep.subr.bf16.mxu0 %v2448
    %3483 = vmatpush1.bf16.msra.mxu0 %v2447
    %3484 = vmatprep.subr.bf16.mxu0 %v2450
    %3485 = vmatpush1.bf16.msra.mxu0 %v2449
    %3486 = vmatprep.subr.bf16.mxu0 %v2452
    %3487 = vmatpush1.bf16.msra.mxu0 %v2451
    %3488 = vmatprep.subr.bf16.mxu0 %v2454
    %3489 = vmatpush1.bf16.msra.mxu0 %v2453
    %3490 = vmatprep.subr.bf16.mxu0 %v2456
    %3491 = vmatpush1.bf16.msra.mxu0 %v2455
    %3492 = vmatprep.subr.bf16.mxu0 %v2458
    %3493 = vmatpush1.bf16.msra.mxu0 %v2457
    %3494 = vmatprep.subr.bf16.mxu0 %v2460
    %3495 = vmatpush1.bf16.msra.mxu0 %v2459
    %3496 = vmatprep.subr.bf16.mxu0 %v2462
    %3497 = vmatpush1.bf16.msra.mxu0 %v2461
    %3498 = vmatprep.subr.bf16.mxu0 %v2464
    %3499 = vmatpush1.bf16.msra.mxu0 %v2463
    %3500 = vmatprep.subr.bf16.mxu0 %v2466
    %3501 = vmatpush1.bf16.msra.mxu0 %v2465
    %3502 = vmatprep.mubr.bf16.mxu0 %v314
    %3503 = vmatmul.mubr.bf16.gmra.mrb[0].mxu0 %v313
    %v3504 = vpop.f32.mrb[0].mxu0
    %v3505 = vadd.f32 %v3462, %v3504
    %v3506 = vpop.f32.mrb[0].mxu0
    %v3507 = vadd.f32 %v3464, %v3506
    %v3508 = vpop.f32.mrb[0].mxu0
    %v3509 = vadd.f32 %v3466, %v3508
    %v3510 = vpop.f32.mrb[0].mxu0
    %v3511 = vadd.f32 %v3468, %v3510
    %3512 = vdwg.mxu0
    %3513 = vmatprep.subr.bf16.mxu0 %v2468
    %3514 = vmatpush1.bf16.msra.mxu0 %v2467
    %3515 = vmatprep.subr.bf16.mxu0 %v2470
    %3516 = vmatpush1.bf16.msra.mxu0 %v2469
    %3517 = vmatprep.subr.bf16.mxu0 %v2472
    %3518 = vmatpush1.bf16.msra.mxu0 %v2471
    %3519 = vmatprep.subr.bf16.mxu0 %v2474
    %3520 = vmatpush1.bf16.msra.mxu0 %v2473
    %3521 = vmatprep.subr.bf16.mxu0 %v2476
    %3522 = vmatpush1.bf16.msra.mxu0 %v2475
    %3523 = vmatprep.subr.bf16.mxu0 %v2478
    %3524 = vmatpush1.bf16.msra.mxu0 %v2477
    %3525 = vmatprep.subr.bf16.mxu0 %v2480
    %3526 = vmatpush1.bf16.msra.mxu0 %v2479
    %3527 = vmatprep.subr.bf16.mxu0 %v2482
    %3528 = vmatpush1.bf16.msra.mxu0 %v2481
    %3529 = vmatprep.subr.bf16.mxu0 %v2484
    %3530 = vmatpush1.bf16.msra.mxu0 %v2483
    %3531 = vmatprep.subr.bf16.mxu0 %v2486
    %3532 = vmatpush1.bf16.msra.mxu0 %v2485
    %3533 = vmatprep.subr.bf16.mxu0 %v2488
    %3534 = vmatpush1.bf16.msra.mxu0 %v2487
    %3535 = vmatprep.subr.bf16.mxu0 %v2490
    %3536 = vmatpush1.bf16.msra.mxu0 %v2489
    %3537 = vmatprep.subr.bf16.mxu0 %v2492
    %3538 = vmatpush1.bf16.msra.mxu0 %v2491
    %3539 = vmatprep.subr.bf16.mxu0 %v2494
    %3540 = vmatpush1.bf16.msra.mxu0 %v2493
    %3541 = vmatprep.subr.bf16.mxu0 %v2496
    %3542 = vmatpush1.bf16.msra.mxu0 %v2495
    %3543 = vmatprep.subr.bf16.mxu0 %v2498
    %3544 = vmatpush1.bf16.msra.mxu0 %v2497
    %3545 = vmatprep.mubr.bf16.mxu0 %v316
    %3546 = vmatmul.mubr.bf16.gmra.mrb[0].mxu0 %v315
    %v3547 = vpop.f32.mrb[0].mxu0
    %v3548 = vadd.f32 %v3505, %v3547
    %v3549 = vpop.f32.mrb[0].mxu0
    %v3550 = vadd.f32 %v3507, %v3549
    %v3551 = vpop.f32.mrb[0].mxu0
    %v3552 = vadd.f32 %v3509, %v3551
    %v3553 = vpop.f32.mrb[0].mxu0
    %v3554 = vadd.f32 %v3511, %v3553
    %3555 = vdwg.mxu0
    %3556 = vmatprep.subr.bf16.mxu0 %v2500
    %3557 = vmatpush1.bf16.msra.mxu0 %v2499
    %3558 = vmatprep.subr.bf16.mxu0 %v2502
    %3559 = vmatpush1.bf16.msra.mxu0 %v2501
    %3560 = vmatprep.subr.bf16.mxu0 %v2504
    %3561 = vmatpush1.bf16.msra.mxu0 %v2503
    %3562 = vmatprep.subr.bf16.mxu0 %v2506
    %3563 = vmatpush1.bf16.msra.mxu0 %v2505
    %3564 = vmatprep.subr.bf16.mxu0 %v2508
    %3565 = vmatpush1.bf16.msra.mxu0 %v2507
    %3566 = vmatprep.subr.bf16.mxu0 %v2510
    %3567 = vmatpush1.bf16.msra.mxu0 %v2509
    %3568 = vmatprep.subr.bf16.mxu0 %v2512
    %3569 = vmatpush1.bf16.msra.mxu0 %v2511
    %3570 = vmatprep.subr.bf16.mxu0 %v2514
    %3571 = vmatpush1.bf16.msra.mxu0 %v2513
    %3572 = vmatprep.subr.bf16.mxu0 %v2516
    %3573 = vmatpush1.bf16.msra.mxu0 %v2515
    %3574 = vmatprep.subr.bf16.mxu0 %v2518
    %3575 = vmatpush1.bf16.msra.mxu0 %v2517
    %3576 = vmatprep.subr.bf16.mxu0 %v2520
    %3577 = vmatpush1.bf16.msra.mxu0 %v2519
    %3578 = vmatprep.subr.bf16.mxu0 %v2522
    %3579 = vmatpush1.bf16.msra.mxu0 %v2521
    %3580 = vmatprep.subr.bf16.mxu0 %v2524
    %3581 = vmatpush1.bf16.msra.mxu0 %v2523
    %3582 = vmatprep.subr.bf16.mxu0 %v2526
    %3583 = vmatpush1.bf16.msra.mxu0 %v2525
    %3584 = vmatprep.subr.bf16.mxu0 %v2528
    %3585 = vmatpush1.bf16.msra.mxu0 %v2527
    %3586 = vmatprep.subr.bf16.mxu0 %v2530
    %3587 = vmatpush1.bf16.msra.mxu0 %v2529
    %3588 = vmatprep.mubr.bf16.mxu0 %v318
    %3589 = vmatmul.mubr.bf16.gmra.mrb[0].mxu0 %v317
    %v3590 = vpop.f32.mrb[0].mxu0
    %v3591 = vadd.f32 %v3548, %v3590
    %v3592 = vpop.f32.mrb[0].mxu0
    %v3593 = vadd.f32 %v3550, %v3592
    %v3594 = vpop.f32.mrb[0].mxu0
    %v3595 = vadd.f32 %v3552, %v3594
    %v3596 = vpop.f32.mrb[0].mxu0
    %v3597 = vadd.f32 %v3554, %v3596
    %3598 = vdwg.mxu0
    %3599 = vmatprep.subr.bf16.mxu0 %v2532
    %3600 = vmatpush1.bf16.msra.mxu0 %v2531
    %3601 = vmatprep.subr.bf16.mxu0 %v2534
    %3602 = vmatpush1.bf16.msra.mxu0 %v2533
    %3603 = vmatprep.subr.bf16.mxu0 %v2536
    %3604 = vmatpush1.bf16.msra.mxu0 %v2535
    %3605 = vmatprep.subr.bf16.mxu0 %v2538
    %3606 = vmatpush1.bf16.msra.mxu0 %v2537
    %3607 = vmatprep.subr.bf16.mxu0 %v2540
    %3608 = vmatpush1.bf16.msra.mxu0 %v2539
    %3609 = vmatprep.subr.bf16.mxu0 %v2542
    %3610 = vmatpush1.bf16.msra.mxu0 %v2541
    %3611 = vmatprep.subr.bf16.mxu0 %v2544
    %3612 = vmatpush1.bf16.msra.mxu0 %v2543
    %3613 = vmatprep.subr.bf16.mxu0 %v2546
    %3614 = vmatpush1.bf16.msra.mxu0 %v2545
    %3615 = vmatprep.subr.bf16.mxu0 %v2548
    %3616 = vmatpush1.bf16.msra.mxu0 %v2547
    %3617 = vmatprep.subr.bf16.mxu0 %v2550
    %3618 = vmatpush1.bf16.msra.mxu0 %v2549
    %3619 = vmatprep.subr.bf16.mxu0 %v2552
    %3620 = vmatpush1.bf16.msra.mxu0 %v2551
    %3621 = vmatprep.subr.bf16.mxu0 %v2554
    %3622 = vmatpush1.bf16.msra.mxu0 %v2553
    %3623 = vmatprep.subr.bf16.mxu0 %v2556
    %3624 = vmatpush1.bf16.msra.mxu0 %v2555
    %3625 = vmatprep.subr.bf16.mxu0 %v2558
    %3626 = vmatpush1.bf16.msra.mxu0 %v2557
    %3627 = vmatprep.subr.bf16.mxu0 %v2560
    %3628 = vmatpush1.bf16.msra.mxu0 %v2559
    %3629 = vmatprep.subr.bf16.mxu0 %v2562
    %3630 = vmatpush1.bf16.msra.mxu0 %v2561
    %3631 = vmatprep.mubr.bf16.mxu0 %v320
    %3632 = vmatmul.mubr.bf16.gmra.mrb[0].mxu0 %v319
    %v3633 = vpop.f32.mrb[0].mxu0
    %v3634 = vadd.f32 %v3591, %v3633
    %v3635 = vpop.f32.mrb[0].mxu0
    %v3636 = vadd.f32 %v3593, %v3635
    %v3637 = vpop.f32.mrb[0].mxu0
    %v3638 = vadd.f32 %v3595, %v3637
    %v3639 = vpop.f32.mrb[0].mxu0
    %v3640 = vadd.f32 %v3597, %v3639
    %3641 = vdwg.mxu0
    %3642 = vmatprep.subr.bf16.mxu0 %v2564
    %3643 = vmatpush1.bf16.msra.mxu0 %v2563
    %3644 = vmatprep.subr.bf16.mxu0 %v2566
    %3645 = vmatpush1.bf16.msra.mxu0 %v2565
    %3646 = vmatprep.subr.bf16.mxu0 %v2568
    %3647 = vmatpush1.bf16.msra.mxu0 %v2567
    %3648 = vmatprep.subr.bf16.mxu0 %v2570
    %3649 = vmatpush1.bf16.msra.mxu0 %v2569
    %3650 = vmatprep.subr.bf16.mxu0 %v2572
    %3651 = vmatpush1.bf16.msra.mxu0 %v2571
    %3652 = vmatprep.subr.bf16.mxu0 %v2574
    %3653 = vmatpush1.bf16.msra.mxu0 %v2573
    %3654 = vmatprep.subr.bf16.mxu0 %v2576
    %3655 = vmatpush1.bf16.msra.mxu0 %v2575
    %3656 = vmatprep.subr.bf16.mxu0 %v2578
    %3657 = vmatpush1.bf16.msra.mxu0 %v2577
    %3658 = vmatprep.subr.bf16.mxu0 %v2580
    %3659 = vmatpush1.bf16.msra.mxu0 %v2579
    %3660 = vmatprep.subr.bf16.mxu0 %v2582
    %3661 = vmatpush1.bf16.msra.mxu0 %v2581
    %3662 = vmatprep.subr.bf16.mxu0 %v2584
    %3663 = vmatpush1.bf16.msra.mxu0 %v2583
    %3664 = vmatprep.subr.bf16.mxu0 %v2586
    %3665 = vmatpush1.bf16.msra.mxu0 %v2585
    %3666 = vmatprep.subr.bf16.mxu0 %v2588
    %3667 = vmatpush1.bf16.msra.mxu0 %v2587
    %3668 = vmatprep.subr.bf16.mxu0 %v2590
    %3669 = vmatpush1.bf16.msra.mxu0 %v2589
    %3670 = vmatprep.subr.bf16.mxu0 %v2592
    %3671 = vmatpush1.bf16.msra.mxu0 %v2591
    %3672 = vmatprep.subr.bf16.mxu0 %v2594
    %3673 = vmatpush1.bf16.msra.mxu0 %v2593
    %3674 = vmatprep.mubr.bf16.mxu0 %v322
    %3675 = vmatmul.mubr.bf16.gmra.mrb[0].mxu0 %v321
    %v3676 = vpop.f32.mrb[0].mxu0
    %v3677 = vadd.f32 %v3634, %v3676
    %v3678 = vpop.f32.mrb[0].mxu0
    %v3679 = vadd.f32 %v3636, %v3678
    %v3680 = vpop.f32.mrb[0].mxu0
    %v3681 = vadd.f32 %v3638, %v3680
    %v3682 = vpop.f32.mrb[0].mxu0
    %v3683 = vadd.f32 %v3640, %v3682
    %3684 = vdwg.mxu0
    %3685 = vmatprep.subr.bf16.mxu0 %v2596
    %3686 = vmatpush1.bf16.msra.mxu0 %v2595
    %3687 = vmatprep.subr.bf16.mxu0 %v2598
    %3688 = vmatpush1.bf16.msra.mxu0 %v2597
    %3689 = vmatprep.subr.bf16.mxu0 %v2600
    %3690 = vmatpush1.bf16.msra.mxu0 %v2599
    %3691 = vmatprep.subr.bf16.mxu0 %v2602
    %3692 = vmatpush1.bf16.msra.mxu0 %v2601
    %3693 = vmatprep.subr.bf16.mxu0 %v2604
    %3694 = vmatpush1.bf16.msra.mxu0 %v2603
    %3695 = vmatprep.subr.bf16.mxu0 %v2606
    %3696 = vmatpush1.bf16.msra.mxu0 %v2605
    %3697 = vmatprep.subr.bf16.mxu0 %v2608
    %3698 = vmatpush1.bf16.msra.mxu0 %v2607
    %3699 = vmatprep.subr.bf16.mxu0 %v2610
    %3700 = vmatpush1.bf16.msra.mxu0 %v2609
    %3701 = vmatprep.subr.bf16.mxu0 %v2612
    %3702 = vmatpush1.bf16.msra.mxu0 %v2611
    %3703 = vmatprep.subr.bf16.mxu0 %v2614
    %3704 = vmatpush1.bf16.msra.mxu0 %v2613
    %3705 = vmatprep.subr.bf16.mxu0 %v2616
    %3706 = vmatpush1.bf16.msra.mxu0 %v2615
    %3707 = vmatprep.subr.bf16.mxu0 %v2618
    %3708 = vmatpush1.bf16.msra.mxu0 %v2617
    %3709 = vmatprep.subr.bf16.mxu0 %v2620
    %3710 = vmatpush1.bf16.msra.mxu0 %v2619
    %3711 = vmatprep.subr.bf16.mxu0 %v2622
    %3712 = vmatpush1.bf16.msra.mxu0 %v2621
    %3713 = vmatprep.subr.bf16.mxu0 %v2624
    %3714 = vmatpush1.bf16.msra.mxu0 %v2623
    %3715 = vmatprep.subr.bf16.mxu0 %v2626
    %3716 = vmatpush1.bf16.msra.mxu0 %v2625
    %3717 = vmatprep.mubr.bf16.mxu0 %v324
    %3718 = vmatmul.mubr.bf16.gmra.mrb[0].mxu0 %v323
    %v3719 = vpop.f32.mrb[0].mxu0
    %v3720 = vadd.f32 %v3677, %v3719
    %v3721 = vpop.f32.mrb[0].mxu0
    %v3722 = vadd.f32 %v3679, %v3721
    %v3723 = vpop.f32.mrb[0].mxu0
    %v3724 = vadd.f32 %v3681, %v3723
    %v3725 = vpop.f32.mrb[0].mxu0
    %v3726 = vadd.f32 %v3683, %v3725
    %3727 = vdwg.mxu0
    %3728 = vmatprep.subr.bf16.mxu0 %v2628
    %3729 = vmatpush1.bf16.msra.mxu0 %v2627
    %3730 = vmatprep.subr.bf16.mxu0 %v2630
    %3731 = vmatpush1.bf16.msra.mxu0 %v2629
    %3732 = vmatprep.subr.bf16.mxu0 %v2632
    %3733 = vmatpush1.bf16.msra.mxu0 %v2631
    %3734 = vmatprep.subr.bf16.mxu0 %v2634
    %3735 = vmatpush1.bf16.msra.mxu0 %v2633
    %3736 = vmatprep.subr.bf16.mxu0 %v2636
    %3737 = vmatpush1.bf16.msra.mxu0 %v2635
    %3738 = vmatprep.subr.bf16.mxu0 %v2638
    %3739 = vmatpush1.bf16.msra.mxu0 %v2637
    %3740 = vmatprep.subr.bf16.mxu0 %v2640
    %3741 = vmatpush1.bf16.msra.mxu0 %v2639
    %3742 = vmatprep.subr.bf16.mxu0 %v2642
    %3743 = vmatpush1.bf16.msra.mxu0 %v2641
    %3744 = vmatprep.subr.bf16.mxu0 %v2644
    %3745 = vmatpush1.bf16.msra.mxu0 %v2643
    %3746 = vmatprep.subr.bf16.mxu0 %v2646
    %3747 = vmatpush1.bf16.msra.mxu0 %v2645
    %3748 = vmatprep.subr.bf16.mxu0 %v2648
    %3749 = vmatpush1.bf16.msra.mxu0 %v2647
    %3750 = vmatprep.subr.bf16.mxu0 %v2650
    %3751 = vmatpush1.bf16.msra.mxu0 %v2649
    %3752 = vmatprep.subr.bf16.mxu0 %v2652
    %3753 = vmatpush1.bf16.msra.mxu0 %v2651
    %3754 = vmatprep.subr.bf16.mxu0 %v2654
    %3755 = vmatpush1.bf16.msra.mxu0 %v2653
    %3756 = vmatprep.subr.bf16.mxu0 %v2656
    %3757 = vmatpush1.bf16.msra.mxu0 %v2655
    %3758 = vmatprep.subr.bf16.mxu0 %v2658
    %3759 = vmatpush1.bf16.msra.mxu0 %v2657
    %3760 = vmatprep.mubr.bf16.mxu0 %v326
    %3761 = vmatmul.mubr.bf16.gmra.mrb[0].mxu0 %v325
    %v3762 = vpop.f32.mrb[0].mxu0
    %v3763 = vadd.f32 %v3720, %v3762
    %v3764 = vpop.f32.mrb[0].mxu0
    %v3765 = vadd.f32 %v3722, %v3764
    %v3766 = vpop.f32.mrb[0].mxu0
    %v3767 = vadd.f32 %v3724, %v3766
    %v3768 = vpop.f32.mrb[0].mxu0
    %v3769 = vadd.f32 %v3726, %v3768
    %3770 = vdwg.mxu0
    %3771 = vmatprep.subr.bf16.mxu0 %v2660
    %3772 = vmatpush1.bf16.msra.mxu0 %v2659
    %3773 = vmatprep.subr.bf16.mxu0 %v2662
    %3774 = vmatpush1.bf16.msra.mxu0 %v2661
    %3775 = vmatprep.subr.bf16.mxu0 %v2664
    %3776 = vmatpush1.bf16.msra.mxu0 %v2663
    %3777 = vmatprep.subr.bf16.mxu0 %v2666
    %3778 = vmatpush1.bf16.msra.mxu0 %v2665
    %3779 = vmatprep.subr.bf16.mxu0 %v2668
    %3780 = vmatpush1.bf16.msra.mxu0 %v2667
    %3781 = vmatprep.subr.bf16.mxu0 %v2670
    %3782 = vmatpush1.bf16.msra.mxu0 %v2669
    %3783 = vmatprep.subr.bf16.mxu0 %v2672
    %3784 = vmatpush1.bf16.msra.mxu0 %v2671
    %3785 = vmatprep.subr.bf16.mxu0 %v2674
    %3786 = vmatpush1.bf16.msra.mxu0 %v2673
    %3787 = vmatprep.subr.bf16.mxu0 %v2676
    %3788 = vmatpush1.bf16.msra.mxu0 %v2675
    %3789 = vmatprep.subr.bf16.mxu0 %v2678
    %3790 = vmatpush1.bf16.msra.mxu0 %v2677
    %3791 = vmatprep.subr.bf16.mxu0 %v2680
    %3792 = vmatpush1.bf16.msra.mxu0 %v2679
    %3793 = vmatprep.subr.bf16.mxu0 %v2682
    %3794 = vmatpush1.bf16.msra.mxu0 %v2681
    %3795 = vmatprep.subr.bf16.mxu0 %v2684
    %3796 = vmatpush1.bf16.msra.mxu0 %v2683
    %3797 = vmatprep.subr.bf16.mxu0 %v2686
    %3798 = vmatpush1.bf16.msra.mxu0 %v2685
    %3799 = vmatprep.subr.bf16.mxu0 %v2688
    %3800 = vmatpush1.bf16.msra.mxu0 %v2687
    %3801 = vmatprep.subr.bf16.mxu0 %v2690
    %3802 = vmatpush1.bf16.msra.mxu0 %v2689
    %3803 = vmatprep.mubr.bf16.mxu0 %v328
    %3804 = vmatmul.mubr.bf16.gmra.mrb[0].mxu0 %v327
    %v3805 = vpop.f32.mrb[0].mxu0
    %v3806 = vadd.f32 %v3763, %v3805
    %v3807 = vpop.f32.mrb[0].mxu0
    %v3808 = vadd.f32 %v3765, %v3807
    %v3809 = vpop.f32.mrb[0].mxu0
    %v3810 = vadd.f32 %v3767, %v3809
    %v3811 = vpop.f32.mrb[0].mxu0
    %v3812 = vadd.f32 %v3769, %v3811
    %3813 = vdwg.mxu0
    %3814 = vmatprep.subr.bf16.mxu0 %v2692
    %3815 = vmatpush1.bf16.msra.mxu0 %v2691
    %3816 = vmatprep.subr.bf16.mxu0 %v2694
    %3817 = vmatpush1.bf16.msra.mxu0 %v2693
    %3818 = vmatprep.subr.bf16.mxu0 %v2696
    %3819 = vmatpush1.bf16.msra.mxu0 %v2695
    %3820 = vmatprep.subr.bf16.mxu0 %v2698
    %3821 = vmatpush1.bf16.msra.mxu0 %v2697
    %3822 = vmatprep.subr.bf16.mxu0 %v2700
    %3823 = vmatpush1.bf16.msra.mxu0 %v2699
    %3824 = vmatprep.subr.bf16.mxu0 %v2702
    %3825 = vmatpush1.bf16.msra.mxu0 %v2701
    %3826 = vmatprep.subr.bf16.mxu0 %v2704
    %3827 = vmatpush1.bf16.msra.mxu0 %v2703
    %3828 = vmatprep.subr.bf16.mxu0 %v2706
    %3829 = vmatpush1.bf16.msra.mxu0 %v2705
    %3830 = vmatprep.subr.bf16.mxu0 %v2708
    %3831 = vmatpush1.bf16.msra.mxu0 %v2707
    %3832 = vmatprep.subr.bf16.mxu0 %v2710
    %3833 = vmatpush1.bf16.msra.mxu0 %v2709
    %3834 = vmatprep.subr.bf16.mxu0 %v2712
    %3835 = vmatpush1.bf16.msra.mxu0 %v2711
    %3836 = vmatprep.subr.bf16.mxu0 %v2714
    %3837 = vmatpush1.bf16.msra.mxu0 %v2713
    %3838 = vmatprep.subr.bf16.mxu0 %v2716
    %3839 = vmatpush1.bf16.msra.mxu0 %v2715
    %3840 = vmatprep.subr.bf16.mxu0 %v2718
    %3841 = vmatpush1.bf16.msra.mxu0 %v2717
    %3842 = vmatprep.subr.bf16.mxu0 %v2720
    %3843 = vmatpush1.bf16.msra.mxu0 %v2719
    %3844 = vmatprep.subr.bf16.mxu0 %v2722
    %3845 = vmatpush1.bf16.msra.mxu0 %v2721
    %3846 = vmatprep.mubr.bf16.mxu0 %v330
    %3847 = vmatmul.mubr.bf16.gmra.mrb[0].mxu0 %v329
    %v3848 = vpop.f32.mrb[0].mxu0
    %v3849 = vadd.f32 %v3806, %v3848
    %v3850 = vpop.f32.mrb[0].mxu0
    %v3851 = vadd.f32 %v3808, %v3850
    %v3852 = vpop.f32.mrb[0].mxu0
    %v3853 = vadd.f32 %v3810, %v3852
    %v3854 = vpop.f32.mrb[0].mxu0
    %v3855 = vadd.f32 %v3812, %v3854
    %3856 = vdwg.mxu0
    %3857 = vmatprep.subr.bf16.mxu0 %v2724
    %3858 = vmatpush1.bf16.msra.mxu0 %v2723
    %3859 = vmatprep.subr.bf16.mxu0 %v2726
    %3860 = vmatpush1.bf16.msra.mxu0 %v2725
    %3861 = vmatprep.subr.bf16.mxu0 %v2728
    %3862 = vmatpush1.bf16.msra.mxu0 %v2727
    %3863 = vmatprep.subr.bf16.mxu0 %v2730
    %3864 = vmatpush1.bf16.msra.mxu0 %v2729
    %3865 = vmatprep.subr.bf16.mxu0 %v2732
    %3866 = vmatpush1.bf16.msra.mxu0 %v2731
    %3867 = vmatprep.subr.bf16.mxu0 %v2734
    %3868 = vmatpush1.bf16.msra.mxu0 %v2733
    %3869 = vmatprep.subr.bf16.mxu0 %v2736
    %3870 = vmatpush1.bf16.msra.mxu0 %v2735
    %3871 = vmatprep.subr.bf16.mxu0 %v2738
    %3872 = vmatpush1.bf16.msra.mxu0 %v2737
    %3873 = vmatprep.subr.bf16.mxu0 %v2740
    %3874 = vmatpush1.bf16.msra.mxu0 %v2739
    %3875 = vmatprep.subr.bf16.mxu0 %v2742
    %3876 = vmatpush1.bf16.msra.mxu0 %v2741
    %3877 = vmatprep.subr.bf16.mxu0 %v2744
    %3878 = vmatpush1.bf16.msra.mxu0 %v2743
    %3879 = vmatprep.subr.bf16.mxu0 %v2746
    %3880 = vmatpush1.bf16.msra.mxu0 %v2745
    %3881 = vmatprep.subr.bf16.mxu0 %v2748
    %3882 = vmatpush1.bf16.msra.mxu0 %v2747
    %3883 = vmatprep.subr.bf16.mxu0 %v2750
    %3884 = vmatpush1.bf16.msra.mxu0 %v2749
    %3885 = vmatprep.subr.bf16.mxu0 %v2752
    %3886 = vmatpush1.bf16.msra.mxu0 %v2751
    %3887 = vmatprep.subr.bf16.mxu0 %v2754
    %3888 = vmatpush1.bf16.msra.mxu0 %v2753
    %3889 = vmatprep.mubr.bf16.mxu0 %v332
    %3890 = vmatmul.mubr.bf16.gmra.mrb[0].mxu0 %v331
    %v3891 = vpop.f32.mrb[0].mxu0
    %v3892 = vadd.f32 %v3849, %v3891
    %v3893 = vpop.f32.mrb[0].mxu0
    %v3894 = vadd.f32 %v3851, %v3893
    %v3895 = vpop.f32.mrb[0].mxu0
    %v3896 = vadd.f32 %v3853, %v3895
    %v3897 = vpop.f32.mrb[0].mxu0
    %v3898 = vadd.f32 %v3855, %v3897
    %3899 = vdwg.mxu0
    %3900 = vmatprep.subr.bf16.mxu0 %v2756
    %3901 = vmatpush1.bf16.msra.mxu0 %v2755
    %3902 = vmatprep.subr.bf16.mxu0 %v2758
    %3903 = vmatpush1.bf16.msra.mxu0 %v2757
    %3904 = vmatprep.subr.bf16.mxu0 %v2760
    %3905 = vmatpush1.bf16.msra.mxu0 %v2759
    %3906 = vmatprep.subr.bf16.mxu0 %v2762
    %3907 = vmatpush1.bf16.msra.mxu0 %v2761
    %3908 = vmatprep.subr.bf16.mxu0 %v2764
    %3909 = vmatpush1.bf16.msra.mxu0 %v2763
    %3910 = vmatprep.subr.bf16.mxu0 %v2766
    %3911 = vmatpush1.bf16.msra.mxu0 %v2765
    %3912 = vmatprep.subr.bf16.mxu0 %v2768
    %3913 = vmatpush1.bf16.msra.mxu0 %v2767
    %3914 = vmatprep.subr.bf16.mxu0 %v2770
    %3915 = vmatpush1.bf16.msra.mxu0 %v2769
    %3916 = vmatprep.subr.bf16.mxu0 %v2772
    %3917 = vmatpush1.bf16.msra.mxu0 %v2771
    %3918 = vmatprep.subr.bf16.mxu0 %v2774
    %3919 = vmatpush1.bf16.msra.mxu0 %v2773
    %3920 = vmatprep.subr.bf16.mxu0 %v2776
    %3921 = vmatpush1.bf16.msra.mxu0 %v2775
    %3922 = vmatprep.subr.bf16.mxu0 %v2778
    %3923 = vmatpush1.bf16.msra.mxu0 %v2777
    %3924 = vmatprep.subr.bf16.mxu0 %v2780
    %3925 = vmatpush1.bf16.msra.mxu0 %v2779
    %3926 = vmatprep.subr.bf16.mxu0 %v2782
    %3927 = vmatpush1.bf16.msra.mxu0 %v2781
    %3928 = vmatprep.subr.bf16.mxu0 %v2784
    %3929 = vmatpush1.bf16.msra.mxu0 %v2783
    %3930 = vmatprep.subr.bf16.mxu0 %v2786
    %3931 = vmatpush1.bf16.msra.mxu0 %v2785
    %3932 = vmatprep.mubr.bf16.mxu0 %v334
    %3933 = vmatmul.mubr.bf16.gmra.mrb[0].mxu0 %v333
    %v3934 = vpop.f32.mrb[0].mxu0
    %v3935 = vadd.f32 %v3892, %v3934
    %v3936 = vpop.f32.mrb[0].mxu0
    %v3937 = vadd.f32 %v3894, %v3936
    %v3938 = vpop.f32.mrb[0].mxu0
    %v3939 = vadd.f32 %v3896, %v3938
    %v3940 = vpop.f32.mrb[0].mxu0
    %v3941 = vadd.f32 %v3898, %v3940
    %3942 = vdwg.mxu0
    %3943 = vmatprep.subr.bf16.mxu0 %v2788
    %3944 = vmatpush1.bf16.msra.mxu0 %v2787
    %3945 = vmatprep.subr.bf16.mxu0 %v2790
    %3946 = vmatpush1.bf16.msra.mxu0 %v2789
    %3947 = vmatprep.subr.bf16.mxu0 %v2792
    %3948 = vmatpush1.bf16.msra.mxu0 %v2791
    %3949 = vmatprep.subr.bf16.mxu0 %v2794
    %3950 = vmatpush1.bf16.msra.mxu0 %v2793
    %3951 = vmatprep.subr.bf16.mxu0 %v2796
    %3952 = vmatpush1.bf16.msra.mxu0 %v2795
    %3953 = vmatprep.subr.bf16.mxu0 %v2798
    %3954 = vmatpush1.bf16.msra.mxu0 %v2797
    %3955 = vmatprep.subr.bf16.mxu0 %v2800
    %3956 = vmatpush1.bf16.msra.mxu0 %v2799
    %3957 = vmatprep.subr.bf16.mxu0 %v2802
    %3958 = vmatpush1.bf16.msra.mxu0 %v2801
    %3959 = vmatprep.subr.bf16.mxu0 %v2804
    %3960 = vmatpush1.bf16.msra.mxu0 %v2803
    %3961 = vmatprep.subr.bf16.mxu0 %v2806
    %3962 = vmatpush1.bf16.msra.mxu0 %v2805
    %3963 = vmatprep.subr.bf16.mxu0 %v2808
    %3964 = vmatpush1.bf16.msra.mxu0 %v2807
    %3965 = vmatprep.subr.bf16.mxu0 %v2810
    %3966 = vmatpush1.bf16.msra.mxu0 %v2809
    %3967 = vmatprep.subr.bf16.mxu0 %v2812
    %3968 = vmatpush1.bf16.msra.mxu0 %v2811
    %3969 = vmatprep.subr.bf16.mxu0 %v2814
    %3970 = vmatpush1.bf16.msra.mxu0 %v2813
    %3971 = vmatprep.subr.bf16.mxu0 %v2816
    %3972 = vmatpush1.bf16.msra.mxu0 %v2815
    %3973 = vmatprep.subr.bf16.mxu0 %v2818
    %3974 = vmatpush1.bf16.msra.mxu0 %v2817
    %3975 = vmatprep.mubr.bf16.mxu0 %v336
    %3976 = vmatmul.mubr.bf16.gmra.mrb[0].mxu0 %v335
    %v3977 = vpop.f32.mrb[0].mxu0
    %v3978 = vadd.f32 %v3935, %v3977
    %v3979 = vpop.f32.mrb[0].mxu0
    %v3980 = vadd.f32 %v3937, %v3979
    %v3981 = vpop.f32.mrb[0].mxu0
    %v3982 = vadd.f32 %v3939, %v3981
    %v3983 = vpop.f32.mrb[0].mxu0
    %v3984 = vadd.f32 %v3941, %v3983
    %3985 = vdwg.mxu0
    %3986 = vmatprep.subr.bf16.mxu0 %v2820
    %3987 = vmatpush1.bf16.msra.mxu0 %v2819
    %3988 = vmatprep.subr.bf16.mxu0 %v2822
    %3989 = vmatpush1.bf16.msra.mxu0 %v2821
    %3990 = vmatprep.subr.bf16.mxu0 %v2824
    %3991 = vmatpush1.bf16.msra.mxu0 %v2823
    %3992 = vmatprep.subr.bf16.mxu0 %v2826
    %3993 = vmatpush1.bf16.msra.mxu0 %v2825
    %3994 = vmatprep.subr.bf16.mxu0 %v2828
    %3995 = vmatpush1.bf16.msra.mxu0 %v2827
    %3996 = vmatprep.subr.bf16.mxu0 %v2830
    %3997 = vmatpush1.bf16.msra.mxu0 %v2829
    %3998 = vmatprep.subr.bf16.mxu0 %v2832
    %3999 = vmatpush1.bf16.msra.mxu0 %v2831
    %4000 = vmatprep.subr.bf16.mxu0 %v2834
    %4001 = vmatpush1.bf16.msra.mxu0 %v2833
    %4002 = vmatprep.subr.bf16.mxu0 %v2836
    %4003 = vmatpush1.bf16.msra.mxu0 %v2835
    %4004 = vmatprep.subr.bf16.mxu0 %v2838
    %4005 = vmatpush1.bf16.msra.mxu0 %v2837
    %4006 = vmatprep.subr.bf16.mxu0 %v2840
    %4007 = vmatpush1.bf16.msra.mxu0 %v2839
    %4008 = vmatprep.subr.bf16.mxu0 %v2842
    %4009 = vmatpush1.bf16.msra.mxu0 %v2841
    %4010 = vmatprep.subr.bf16.mxu0 %v2844
    %4011 = vmatpush1.bf16.msra.mxu0 %v2843
    %4012 = vmatprep.subr.bf16.mxu0 %v2846
    %4013 = vmatpush1.bf16.msra.mxu0 %v2845
    %4014 = vmatprep.subr.bf16.mxu0 %v2848
    %4015 = vmatpush1.bf16.msra.mxu0 %v2847
    %4016 = vmatprep.subr.bf16.mxu0 %v2850
    %4017 = vmatpush1.bf16.msra.mxu0 %v2849
    %4018 = vmatprep.mubr.bf16.mxu0 %v338
    %4019 = vmatmul.mubr.bf16.gmra.mrb[0].mxu0 %v337
    %v4020 = vpop.f32.mrb[0].mxu0
    %v4021 = vadd.f32 %v3978, %v4020
    %v4022 = vpop.f32.mrb[0].mxu0
    %v4023 = vadd.f32 %v3980, %v4022
    %v4024 = vpop.f32.mrb[0].mxu0
    %v4025 = vadd.f32 %v3982, %v4024
    %v4026 = vpop.f32.mrb[0].mxu0
    %v4027 = vadd.f32 %v3984, %v4026
    %4028 = vdwg.mxu0
    %4029 = vmatprep.subr.bf16.mxu0 %v2852
    %4030 = vmatpush1.bf16.msra.mxu0 %v2851
    %4031 = vmatprep.subr.bf16.mxu0 %v2854
    %4032 = vmatpush1.bf16.msra.mxu0 %v2853
    %4033 = vmatprep.subr.bf16.mxu0 %v2856
    %4034 = vmatpush1.bf16.msra.mxu0 %v2855
    %4035 = vmatprep.subr.bf16.mxu0 %v2858
    %4036 = vmatpush1.bf16.msra.mxu0 %v2857
    %4037 = vmatprep.subr.bf16.mxu0 %v2860
    %4038 = vmatpush1.bf16.msra.mxu0 %v2859
    %4039 = vmatprep.subr.bf16.mxu0 %v2862
    %4040 = vmatpush1.bf16.msra.mxu0 %v2861
    %4041 = vmatprep.subr.bf16.mxu0 %v2864
    %4042 = vmatpush1.bf16.msra.mxu0 %v2863
    %4043 = vmatprep.subr.bf16.mxu0 %v2866
    %4044 = vmatpush1.bf16.msra.mxu0 %v2865
    %4045 = vmatprep.subr.bf16.mxu0 %v2868
    %4046 = vmatpush1.bf16.msra.mxu0 %v2867
    %4047 = vmatprep.subr.bf16.mxu0 %v2870
    %4048 = vmatpush1.bf16.msra.mxu0 %v2869
    %4049 = vmatprep.subr.bf16.mxu0 %v2872
    %4050 = vmatpush1.bf16.msra.mxu0 %v2871
    %4051 = vmatprep.subr.bf16.mxu0 %v2874
    %4052 = vmatpush1.bf16.msra.mxu0 %v2873
    %4053 = vmatprep.subr.bf16.mxu0 %v2876
    %4054 = vmatpush1.bf16.msra.mxu0 %v2875
    %4055 = vmatprep.subr.bf16.mxu0 %v2878
    %4056 = vmatpush1.bf16.msra.mxu0 %v2877
    %4057 = vmatprep.subr.bf16.mxu0 %v2880
    %4058 = vmatpush1.bf16.msra.mxu0 %v2879
    %4059 = vmatprep.subr.bf16.mxu0 %v2882
    %4060 = vmatpush1.bf16.msra.mxu0 %v2881
    %4061 = vmatprep.mubr.bf16.mxu0 %v340
    %4062 = vmatmul.mubr.bf16.gmra.mrb[0].mxu0 %v339
    %v4063 = vpop.f32.mrb[0].mxu0
    %v4064 = vadd.f32 %v4021, %v4063
    %v4065 = vpop.f32.mrb[0].mxu0
    %v4066 = vadd.f32 %v4023, %v4065
    %v4067 = vpop.f32.mrb[0].mxu0
    %v4068 = vadd.f32 %v4025, %v4067
    %v4069 = vpop.f32.mrb[0].mxu0
    %v4070 = vadd.f32 %v4027, %v4069
    %4071 = vdwg.mxu0
    %4072 = vmatprep.subr.bf16.mxu0 %v2884
    %4073 = vmatpush1.bf16.msra.mxu0 %v2883
    %4074 = vmatprep.subr.bf16.mxu0 %v2886
    %4075 = vmatpush1.bf16.msra.mxu0 %v2885
    %4076 = vmatprep.subr.bf16.mxu0 %v2888
    %4077 = vmatpush1.bf16.msra.mxu0 %v2887
    %4078 = vmatprep.subr.bf16.mxu0 %v2890
    %4079 = vmatpush1.bf16.msra.mxu0 %v2889
    %4080 = vmatprep.subr.bf16.mxu0 %v2892
    %4081 = vmatpush1.bf16.msra.mxu0 %v2891
    %4082 = vmatprep.subr.bf16.mxu0 %v2894
    %4083 = vmatpush1.bf16.msra.mxu0 %v2893
    %4084 = vmatprep.subr.bf16.mxu0 %v2896
    %4085 = vmatpush1.bf16.msra.mxu0 %v2895
    %4086 = vmatprep.subr.bf16.mxu0 %v2898
    %4087 = vmatpush1.bf16.msra.mxu0 %v2897
    %4088 = vmatprep.subr.bf16.mxu0 %v2900
    %4089 = vmatpush1.bf16.msra.mxu0 %v2899
    %4090 = vmatprep.subr.bf16.mxu0 %v2902
    %4091 = vmatpush1.bf16.msra.mxu0 %v2901
    %4092 = vmatprep.subr.bf16.mxu0 %v2904
    %4093 = vmatpush1.bf16.msra.mxu0 %v2903
    %4094 = vmatprep.subr.bf16.mxu0 %v2906
    %4095 = vmatpush1.bf16.msra.mxu0 %v2905
    %4096 = vmatprep.subr.bf16.mxu0 %v2908
    %4097 = vmatpush1.bf16.msra.mxu0 %v2907
    %4098 = vmatprep.subr.bf16.mxu0 %v2910
    %4099 = vmatpush1.bf16.msra.mxu0 %v2909
    %4100 = vmatprep.subr.bf16.mxu0 %v2912
    %4101 = vmatpush1.bf16.msra.mxu0 %v2911
    %4102 = vmatprep.subr.bf16.mxu0 %v2914
    %4103 = vmatpush1.bf16.msra.mxu0 %v2913
    %4104 = vmatprep.mubr.bf16.mxu0 %v342
    %4105 = vmatmul.mubr.bf16.gmra.mrb[0].mxu0 %v341
    %v4106 = vpop.f32.mrb[0].mxu0
    %v4107 = vadd.f32 %v4064, %v4106
    %v4108 = vpop.f32.mrb[0].mxu0
    %v4109 = vadd.f32 %v4066, %v4108
    %v4110 = vpop.f32.mrb[0].mxu0
    %v4111 = vadd.f32 %v4068, %v4110
    %v4112 = vpop.f32.mrb[0].mxu0
    %v4113 = vadd.f32 %v4070, %v4112
    %4114 = vdwg.mxu0
    %v4115 = vmax.f32 %v4107, 0.0
    %v4116 = vmax.f32 %v4109, 0.0
    %v4117 = vmax.f32 %v4111, 0.0
    %v4118 = vmax.f32 %v4113, 0.0
    %v4119 = vpack.c.bf16 %v4117, %v4115
    %v4120 = vpack.c.bf16 %v4118, %v4116
    %v4121 = vld [vmem:[#allocation11] sm:$0xf]
    %v4122 = vld [vmem:[#allocation11 + $0x4] sm:$0xf]
    %v4123 = vld [vmem:[#allocation11 + $0x8] sm:$0xf]
    %v4124 = vld [vmem:[#allocation11 + $0xc] sm:$0xf]
    %v4125 = vld [vmem:[#allocation11 + $0x10] sm:$0xf]
    %v4126 = vld [vmem:[#allocation11 + $0x14] sm:$0xf]
    %v4127 = vld [vmem:[#allocation11 + $0x18] sm:$0xf]
    %v4128 = vld [vmem:[#allocation11 + $0x1c] sm:$0xf]
    %v4129 = vld [vmem:[#allocation11 + $0x20] sm:$0xf]
    %v4130 = vld [vmem:[#allocation11 + $0x24] sm:$0xf]
    %v4131 = vld [vmem:[#allocation11 + $0x28] sm:$0xf]
    %v4132 = vld [vmem:[#allocation11 + $0x2c] sm:$0xf]
    %v4133 = vld [vmem:[#allocation11 + $0x30] sm:$0xf]
    %v4134 = vld [vmem:[#allocation11 + $0x34] sm:$0xf]
    %v4135 = vld [vmem:[#allocation11 + $0x38] sm:$0xf]
    %v4136 = vld [vmem:[#allocation11 + $0x3c] sm:$0xf]
    %v4137 = vld [vmem:[#allocation11 + $0x40] sm:$0xf]
    %v4138 = vld [vmem:[#allocation11 + $0x44] sm:$0xf]
    %v4139 = vld [vmem:[#allocation11 + $0x48] sm:$0xf]
    %v4140 = vld [vmem:[#allocation11 + $0x4c] sm:$0xf]
    %v4141 = vld [vmem:[#allocation11 + $0x50] sm:$0xf]
    %v4142 = vld [vmem:[#allocation11 + $0x54] sm:$0xf]
    %v4143 = vld [vmem:[#allocation11 + $0x58] sm:$0xf]
    %v4144 = vld [vmem:[#allocation11 + $0x5c] sm:$0xf]
    %v4145 = vld [vmem:[#allocation11 + $0x60] sm:$0xf]
    %v4146 = vld [vmem:[#allocation11 + $0x64] sm:$0xf]
    %v4147 = vld [vmem:[#allocation11 + $0x68] sm:$0xf]
    %v4148 = vld [vmem:[#allocation11 + $0x6c] sm:$0xf]
    %v4149 = vld [vmem:[#allocation11 + $0x70] sm:$0xf]
    %v4150 = vld [vmem:[#allocation11 + $0x74] sm:$0xf]
    %v4151 = vld [vmem:[#allocation11 + $0x78] sm:$0xf]
    %v4152 = vld [vmem:[#allocation11 + $0x7c] sm:$0xf]
    %v4153 = vld [vmem:[#allocation13] sm:$0x1]
    %v4155 = vlaneseq
    %v4156 = vshrl.u32 %v4155, 7
    %v4157 = vsub.s32 0, %v4156
    %v4158 = vrot.slane %v4153, %v4157
    %v4192 = vunpack.c.l.b16 %v4121
    %v4193 = vunpack.c.l.b16 %v4122
    %v4194 = vunpack.c.l.b16 %v4123
    %v4195 = vunpack.c.l.b16 %v4124
    %v4196 = vunpack.c.l.b16 %v4125
    %v4197 = vunpack.c.l.b16 %v4126
    %v4198 = vunpack.c.l.b16 %v4127
    %v4199 = vunpack.c.l.b16 %v4128
    %v4200 = vunpack.c.l.b16 %v4129
    %v4201 = vunpack.c.l.b16 %v4130
    %v4202 = vunpack.c.l.b16 %v4131
    %v4203 = vunpack.c.l.b16 %v4132
    %v4204 = vunpack.c.l.b16 %v4133
    %v4205 = vunpack.c.l.b16 %v4134
    %v4206 = vunpack.c.l.b16 %v4135
    %v4207 = vunpack.c.l.b16 %v4136
    %v4208 = vunpack.c.l.b16 %v4137
    %v4209 = vunpack.c.l.b16 %v4138
    %v4210 = vunpack.c.l.b16 %v4139
    %v4211 = vunpack.c.l.b16 %v4140
    %v4212 = vunpack.c.l.b16 %v4141
    %v4213 = vunpack.c.l.b16 %v4142
    %v4214 = vunpack.c.l.b16 %v4143
    %v4215 = vunpack.c.l.b16 %v4144
    %v4216 = vunpack.c.l.b16 %v4145
    %v4217 = vunpack.c.l.b16 %v4146
    %v4218 = vunpack.c.l.b16 %v4147
    %v4219 = vunpack.c.l.b16 %v4148
    %v4220 = vunpack.c.l.b16 %v4149
    %v4221 = vunpack.c.l.b16 %v4150
    %v4222 = vunpack.c.l.b16 %v4151
    %v4223 = vunpack.c.l.b16 %v4152
    %v4224 = vpack.c.b16 %v4193, %v4192
    %v4225 = vpack.c.b16 %v4195, %v4194
    %v4226 = vpack.c.b16 %v4197, %v4196
    %v4227 = vpack.c.b16 %v4199, %v4198
    %v4228 = vpack.c.b16 %v4201, %v4200
    %v4229 = vpack.c.b16 %v4203, %v4202
    %v4230 = vpack.c.b16 %v4205, %v4204
    %v4231 = vpack.c.b16 %v4207, %v4206
    %v4232 = vpack.c.b16 %v4209, %v4208
    %v4233 = vpack.c.b16 %v4211, %v4210
    %v4234 = vpack.c.b16 %v4213, %v4212
    %v4235 = vpack.c.b16 %v4215, %v4214
    %v4236 = vpack.c.b16 %v4217, %v4216
    %v4237 = vpack.c.b16 %v4219, %v4218
    %v4238 = vpack.c.b16 %v4221, %v4220
    %v4239 = vpack.c.b16 %v4223, %v4222
    %4256 = vmatprep.subr.bf16.mxu0 0
    %4257 = vmatpush1.bf16.msra.mxu0 %v4224
    %4258 = vmatprep.subr.bf16.mxu0 0
    %4259 = vmatpush1.bf16.msra.mxu0 %v4225
    %4260 = vmatprep.subr.bf16.mxu0 0
    %4261 = vmatpush1.bf16.msra.mxu0 %v4226
    %4262 = vmatprep.subr.bf16.mxu0 0
    %4263 = vmatpush1.bf16.msra.mxu0 %v4227
    %4264 = vmatprep.subr.bf16.mxu0 0
    %4265 = vmatpush1.bf16.msra.mxu0 %v4228
    %4266 = vmatprep.subr.bf16.mxu0 0
    %4267 = vmatpush1.bf16.msra.mxu0 %v4229
    %4268 = vmatprep.subr.bf16.mxu0 0
    %4269 = vmatpush1.bf16.msra.mxu0 %v4230
    %4270 = vmatprep.subr.bf16.mxu0 0
    %4271 = vmatpush1.bf16.msra.mxu0 %v4231
    %4272 = vmatprep.subr.bf16.mxu0 0
    %4273 = vmatpush1.bf16.msra.mxu0 %v4232
    %4274 = vmatprep.subr.bf16.mxu0 0
    %4275 = vmatpush1.bf16.msra.mxu0 %v4233
    %4276 = vmatprep.subr.bf16.mxu0 0
    %4277 = vmatpush1.bf16.msra.mxu0 %v4234
    %4278 = vmatprep.subr.bf16.mxu0 0
    %4279 = vmatpush1.bf16.msra.mxu0 %v4235
    %4280 = vmatprep.subr.bf16.mxu0 0
    %4281 = vmatpush1.bf16.msra.mxu0 %v4236
    %4282 = vmatprep.subr.bf16.mxu0 0
    %4283 = vmatpush1.bf16.msra.mxu0 %v4237
    %4284 = vmatprep.subr.bf16.mxu0 0
    %4285 = vmatpush1.bf16.msra.mxu0 %v4238
    %4286 = vmatprep.subr.bf16.mxu0 0
    %4287 = vmatpush1.bf16.msra.mxu0 %v4239
    %4288 = vmatprep.mubr.bf16.mxu0 %v4120
    %4289 = vmatmul.mubr.bf16.gmra.mrb[0].mxu0 %v4119
    %v4290 = vpop.f32.mrb[0].mxu0
    %v4291 = vadd.f32 %v4158, %v4290
    %v4292 = vpop.f32.mrb[0].mxu0
    %v4293 = vpop.f32.mrb[0].mxu0
    %v4294 = vadd.f32 %v4158, %v4293
    %v4295 = vpop.f32.mrb[0].mxu0
    %4296 = vdwg.mxu0
    %v4297 = vmax.f32 %v4291, 0.0
    %v4298 = vmax.f32 %v4294, 0.0
    %4299 = vst [vmem:[#allocation26] sm:$0xff] %v4297
    %4300 = vst [vmem:[#allocation26 + $0x8] sm:$0xff] %v4298
    %v4301 = vld [vmem:[#allocation5] sm:$0xff]
    %v4302 = vld [vmem:[#allocation5 + $0x8] sm:$0xff]
    %v4303 = vld [vmem:[#allocation5 + $0x10] sm:$0xff]
    %v4304 = vld [vmem:[#allocation5 + $0x18] sm:$0xff]
    %v4305 = vld [vmem:[#allocation5 + $0x20] sm:$0xff]
    %v4306 = vld [vmem:[#allocation5 + $0x28] sm:$0xff]
    %v4307 = vld [vmem:[#allocation5 + $0x30] sm:$0xff]
    %v4308 = vld [vmem:[#allocation5 + $0x38] sm:$0xff]
    %v4309 = vld [vmem:[#allocation5 + $0x40] sm:$0xff]
    %v4310 = vld [vmem:[#allocation5 + $0x48] sm:$0xff]
    %v4311 = vld [vmem:[#allocation5 + $0x50] sm:$0xff]
    %v4312 = vld [vmem:[#allocation5 + $0x58] sm:$0xff]
    %v4313 = vld [vmem:[#allocation5 + $0x60] sm:$0xff]
    %v4314 = vld [vmem:[#allocation5 + $0x68] sm:$0xff]
    %v4315 = vld [vmem:[#allocation5 + $0x70] sm:$0xff]
    %v4316 = vld [vmem:[#allocation5 + $0x78] sm:$0xff]
    %v4317 = vpack.c.bf16 %v4309, %v4301
    %v4318 = vpack.c.bf16 %v4310, %v4302
    %v4319 = vpack.c.bf16 %v4311, %v4303
    %v4320 = vpack.c.bf16 %v4312, %v4304
    %v4321 = vpack.c.bf16 %v4313, %v4305
    %v4322 = vpack.c.bf16 %v4314, %v4306
    %v4323 = vpack.c.bf16 %v4315, %v4307
    %v4324 = vpack.c.bf16 %v4316, %v4308
    %v4325 = vld [vmem:[#allocation14] sm:$0xff]
    %v4326 = vld [vmem:[#allocation14 + $0x8] sm:$0xff]
    %v4327 = vld [vmem:[#allocation14 + $0x10] sm:$0xff]
    %v4328 = vld [vmem:[#allocation14 + $0x18] sm:$0xff]
    %v4329 = vld [vmem:[#allocation14 + $0x20] sm:$0xff]
    %v4330 = vld [vmem:[#allocation14 + $0x28] sm:$0xff]
    %v4331 = vld [vmem:[#allocation14 + $0x30] sm:$0xff]
    %v4332 = vld [vmem:[#allocation14 + $0x38] sm:$0xff]
    %v4333 = vld [vmem:[#allocation14 + $0x40] sm:$0xff]
    %v4334 = vld [vmem:[#allocation14 + $0x48] sm:$0xff]
    %v4335 = vld [vmem:[#allocation14 + $0x50] sm:$0xff]
    %v4336 = vld [vmem:[#allocation14 + $0x58] sm:$0xff]
    %v4337 = vld [vmem:[#allocation14 + $0x60] sm:$0xff]
    %v4338 = vld [vmem:[#allocation14 + $0x68] sm:$0xff]
    %v4339 = vld [vmem:[#allocation14 + $0x70] sm:$0xff]
    %v4340 = vld [vmem:[#allocation14 + $0x78] sm:$0xff]
    %v4341 = vld [vmem:[#allocation14 + $0x80] sm:$0xff]
    %v4342 = vld [vmem:[#allocation14 + $0x88] sm:$0xff]
    %v4343 = vld [vmem:[#allocation14 + $0x90] sm:$0xff]
    %v4344 = vld [vmem:[#allocation14 + $0x98] sm:$0xff]
    %v4345 = vld [vmem:[#allocation14 + $0xa0] sm:$0xff]
    %v4346 = vld [vmem:[#allocation14 + $0xa8] sm:$0xff]
    %v4347 = vld [vmem:[#allocation14 + $0xb0] sm:$0xff]
    %v4348 = vld [vmem:[#allocation14 + $0xb8] sm:$0xff]
    %v4349 = vld [vmem:[#allocation14 + $0xc0] sm:$0xff]
    %v4350 = vld [vmem:[#allocation14 + $0xc8] sm:$0xff]
    %v4351 = vld [vmem:[#allocation14 + $0xd0] sm:$0xff]
    %v4352 = vld [vmem:[#allocation14 + $0xd8] sm:$0xff]
    %v4353 = vld [vmem:[#allocation14 + $0xe0] sm:$0xff]
    %v4354 = vld [vmem:[#allocation14 + $0xe8] sm:$0xff]
    %v4355 = vld [vmem:[#allocation14 + $0xf0] sm:$0xff]
    %v4356 = vld [vmem:[#allocation14 + $0xf8] sm:$0xff]
    %v4357 = vld [vmem:[#allocation14 + $0x100] sm:$0xff]
    %v4358 = vld [vmem:[#allocation14 + $0x108] sm:$0xff]
    %v4359 = vld [vmem:[#allocation14 + $0x110] sm:$0xff]
    %v4360 = vld [vmem:[#allocation14 + $0x118] sm:$0xff]
    %v4361 = vld [vmem:[#allocation14 + $0x120] sm:$0xff]
    %v4362 = vld [vmem:[#allocation14 + $0x128] sm:$0xff]
    %v4363 = vld [vmem:[#allocation14 + $0x130] sm:$0xff]
    %v4364 = vld [vmem:[#allocation14 + $0x138] sm:$0xff]
    %v4365 = vld [vmem:[#allocation14 + $0x140] sm:$0xff]
    %v4366 = vld [vmem:[#allocation14 + $0x148] sm:$0xff]
    %v4367 = vld [vmem:[#allocation14 + $0x150] sm:$0xff]
    %v4368 = vld [vmem:[#allocation14 + $0x158] sm:$0xff]
    %v4369 = vld [vmem:[#allocation14 + $0x160] sm:$0xff]
    %v4370 = vld [vmem:[#allocation14 + $0x168] sm:$0xff]
    %v4371 = vld [vmem:[#allocation14 + $0x170] sm:$0xff]
    %v4372 = vld [vmem:[#allocation14 + $0x178] sm:$0xff]
    %v4373 = vld [vmem:[#allocation14 + $0x180] sm:$0xff]
    %v4374 = vld [vmem:[#allocation14 + $0x188] sm:$0xff]
    %v4375 = vld [vmem:[#allocation14 + $0x190] sm:$0xff]
    %v4376 = vld [vmem:[#allocation14 + $0x198] sm:$0xff]
    %v4377 = vld [vmem:[#allocation14 + $0x1a0] sm:$0xff]
    %v4378 = vld [vmem:[#allocation14 + $0x1a8] sm:$0xff]
    %v4379 = vld [vmem:[#allocation14 + $0x1b0] sm:$0xff]
    %v4380 = vld [vmem:[#allocation14 + $0x1b8] sm:$0xff]
    %v4381 = vld [vmem:[#allocation14 + $0x1c0] sm:$0xff]
    %v4382 = vld [vmem:[#allocation14 + $0x1c8] sm:$0xff]
    %v4383 = vld [vmem:[#allocation14 + $0x1d0] sm:$0xff]
    %v4384 = vld [vmem:[#allocation14 + $0x1d8] sm:$0xff]
    %v4385 = vld [vmem:[#allocation14 + $0x1e0] sm:$0xff]
    %v4386 = vld [vmem:[#allocation14 + $0x1e8] sm:$0xff]
    %v4387 = vld [vmem:[#allocation14 + $0x1f0] sm:$0xff]
    %v4388 = vld [vmem:[#allocation14 + $0x1f8] sm:$0xff]
    %v4389 = vld [vmem:[#allocation14 + $0x200] sm:$0xff]
    %v4390 = vld [vmem:[#allocation14 + $0x208] sm:$0xff]
    %v4391 = vld [vmem:[#allocation14 + $0x210] sm:$0xff]
    %v4392 = vld [vmem:[#allocation14 + $0x218] sm:$0xff]
    %v4393 = vld [vmem:[#allocation14 + $0x220] sm:$0xff]
    %v4394 = vld [vmem:[#allocation14 + $0x228] sm:$0xff]
    %v4395 = vld [vmem:[#allocation14 + $0x230] sm:$0xff]
    %v4396 = vld [vmem:[#allocation14 + $0x238] sm:$0xff]
    %v4397 = vld [vmem:[#allocation14 + $0x240] sm:$0xff]
    %v4398 = vld [vmem:[#allocation14 + $0x248] sm:$0xff]
    %v4399 = vld [vmem:[#allocation14 + $0x250] sm:$0xff]
    %v4400 = vld [vmem:[#allocation14 + $0x258] sm:$0xff]
    %v4401 = vld [vmem:[#allocation14 + $0x260] sm:$0xff]
    %v4402 = vld [vmem:[#allocation14 + $0x268] sm:$0xff]
    %v4403 = vld [vmem:[#allocation14 + $0x270] sm:$0xff]
    %v4404 = vld [vmem:[#allocation14 + $0x278] sm:$0xff]
    %v4405 = vld [vmem:[#allocation14 + $0x280] sm:$0xff]
    %v4406 = vld [vmem:[#allocation14 + $0x288] sm:$0xff]
    %v4407 = vld [vmem:[#allocation14 + $0x290] sm:$0xff]
    %v4408 = vld [vmem:[#allocation14 + $0x298] sm:$0xff]
    %v4409 = vld [vmem:[#allocation14 + $0x2a0] sm:$0xff]
    %v4410 = vld [vmem:[#allocation14 + $0x2a8] sm:$0xff]
    %v4411 = vld [vmem:[#allocation14 + $0x2b0] sm:$0xff]
    %v4412 = vld [vmem:[#allocation14 + $0x2b8] sm:$0xff]
    %v4413 = vld [vmem:[#allocation14 + $0x2c0] sm:$0xff]
    %v4414 = vld [vmem:[#allocation14 + $0x2c8] sm:$0xff]
    %v4415 = vld [vmem:[#allocation14 + $0x2d0] sm:$0xff]
    %v4416 = vld [vmem:[#allocation14 + $0x2d8] sm:$0xff]
    %v4417 = vld [vmem:[#allocation14 + $0x2e0] sm:$0xff]
    %v4418 = vld [vmem:[#allocation14 + $0x2e8] sm:$0xff]
    %v4419 = vld [vmem:[#allocation14 + $0x2f0] sm:$0xff]
    %v4420 = vld [vmem:[#allocation14 + $0x2f8] sm:$0xff]
    %v4421 = vld [vmem:[#allocation14 + $0x300] sm:$0xff]
    %v4422 = vld [vmem:[#allocation14 + $0x308] sm:$0xff]
    %v4423 = vld [vmem:[#allocation14 + $0x310] sm:$0xff]
    %v4424 = vld [vmem:[#allocation14 + $0x318] sm:$0xff]
    %v4425 = vld [vmem:[#allocation14 + $0x320] sm:$0xff]
    %v4426 = vld [vmem:[#allocation14 + $0x328] sm:$0xff]
    %v4427 = vld [vmem:[#allocation14 + $0x330] sm:$0xff]
    %v4428 = vld [vmem:[#allocation14 + $0x338] sm:$0xff]
    %v4429 = vld [vmem:[#allocation14 + $0x340] sm:$0xff]
    %v4430 = vld [vmem:[#allocation14 + $0x348] sm:$0xff]
    %v4431 = vld [vmem:[#allocation14 + $0x350] sm:$0xff]
    %v4432 = vld [vmem:[#allocation14 + $0x358] sm:$0xff]
    %v4433 = vld [vmem:[#allocation14 + $0x360] sm:$0xff]
    %v4434 = vld [vmem:[#allocation14 + $0x368] sm:$0xff]
    %v4435 = vld [vmem:[#allocation14 + $0x370] sm:$0xff]
    %v4436 = vld [vmem:[#allocation14 + $0x378] sm:$0xff]
    %v4437 = vld [vmem:[#allocation14 + $0x380] sm:$0xff]
    %v4438 = vld [vmem:[#allocation14 + $0x388] sm:$0xff]
    %v4439 = vld [vmem:[#allocation14 + $0x390] sm:$0xff]
    %v4440 = vld [vmem:[#allocation14 + $0x398] sm:$0xff]
    %v4441 = vld [vmem:[#allocation14 + $0x3a0] sm:$0xff]
    %v4442 = vld [vmem:[#allocation14 + $0x3a8] sm:$0xff]
    %v4443 = vld [vmem:[#allocation14 + $0x3b0] sm:$0xff]
    %v4444 = vld [vmem:[#allocation14 + $0x3b8] sm:$0xff]
    %v4445 = vld [vmem:[#allocation14 + $0x3c0] sm:$0xff]
    %v4446 = vld [vmem:[#allocation14 + $0x3c8] sm:$0xff]
    %v4447 = vld [vmem:[#allocation14 + $0x3d0] sm:$0xff]
    %v4448 = vld [vmem:[#allocation14 + $0x3d8] sm:$0xff]
    %v4449 = vld [vmem:[#allocation14 + $0x3e0] sm:$0xff]
    %v4450 = vld [vmem:[#allocation14 + $0x3e8] sm:$0xff]
    %v4451 = vld [vmem:[#allocation14 + $0x3f0] sm:$0xff]
    %v4452 = vld [vmem:[#allocation14 + $0x3f8] sm:$0xff]
    %v4453 = vld [vmem:[#allocation16] sm:$0x3]
    %v4455 = vlaneseq
    %v4456 = vshrl.u32 %v4455, 7
    %v4457 = vsub.s32 0, %v4456
    %v4458 = vrot.slane %v4453, %v4457
    %v4459 = vlaneseq
    %v4460 = vshrl.u32 %v4459, 7
    %v4461 = vsub.s32 1, %v4460
    %v4462 = vrot.slane %v4453, %v4461
    %v4593 = vunpack.c.l.b16 %v4325
    %v4594 = vunpack.c.h.b16 %v4325
    %v4595 = vunpack.c.l.b16 %v4326
    %v4596 = vunpack.c.h.b16 %v4326
    %v4597 = vunpack.c.l.b16 %v4327
    %v4598 = vunpack.c.h.b16 %v4327
    %v4599 = vunpack.c.l.b16 %v4328
    %v4600 = vunpack.c.h.b16 %v4328
    %v4601 = vunpack.c.l.b16 %v4329
    %v4602 = vunpack.c.h.b16 %v4329
    %v4603 = vunpack.c.l.b16 %v4330
    %v4604 = vunpack.c.h.b16 %v4330
    %v4605 = vunpack.c.l.b16 %v4331
    %v4606 = vunpack.c.h.b16 %v4331
    %v4607 = vunpack.c.l.b16 %v4332
    %v4608 = vunpack.c.h.b16 %v4332
    %v4609 = vunpack.c.l.b16 %v4333
    %v4610 = vunpack.c.h.b16 %v4333
    %v4611 = vunpack.c.l.b16 %v4334
    %v4612 = vunpack.c.h.b16 %v4334
    %v4613 = vunpack.c.l.b16 %v4335
    %v4614 = vunpack.c.h.b16 %v4335
    %v4615 = vunpack.c.l.b16 %v4336
    %v4616 = vunpack.c.h.b16 %v4336
    %v4617 = vunpack.c.l.b16 %v4337
    %v4618 = vunpack.c.h.b16 %v4337
    %v4619 = vunpack.c.l.b16 %v4338
    %v4620 = vunpack.c.h.b16 %v4338
    %v4621 = vunpack.c.l.b16 %v4339
    %v4622 = vunpack.c.h.b16 %v4339
    %v4623 = vunpack.c.l.b16 %v4340
    %v4624 = vunpack.c.h.b16 %v4340
    %v4625 = vunpack.c.l.b16 %v4341
    %v4626 = vunpack.c.h.b16 %v4341
    %v4627 = vunpack.c.l.b16 %v4342
    %v4628 = vunpack.c.h.b16 %v4342
    %v4629 = vunpack.c.l.b16 %v4343
    %v4630 = vunpack.c.h.b16 %v4343
    %v4631 = vunpack.c.l.b16 %v4344
    %v4632 = vunpack.c.h.b16 %v4344
    %v4633 = vunpack.c.l.b16 %v4345
    %v4634 = vunpack.c.h.b16 %v4345
    %v4635 = vunpack.c.l.b16 %v4346
    %v4636 = vunpack.c.h.b16 %v4346
    %v4637 = vunpack.c.l.b16 %v4347
    %v4638 = vunpack.c.h.b16 %v4347
    %v4639 = vunpack.c.l.b16 %v4348
    %v4640 = vunpack.c.h.b16 %v4348
    %v4641 = vunpack.c.l.b16 %v4349
    %v4642 = vunpack.c.h.b16 %v4349
    %v4643 = vunpack.c.l.b16 %v4350
    %v4644 = vunpack.c.h.b16 %v4350
    %v4645 = vunpack.c.l.b16 %v4351
    %v4646 = vunpack.c.h.b16 %v4351
    %v4647 = vunpack.c.l.b16 %v4352
    %v4648 = vunpack.c.h.b16 %v4352
    %v4649 = vunpack.c.l.b16 %v4353
    %v4650 = vunpack.c.h.b16 %v4353
    %v4651 = vunpack.c.l.b16 %v4354
    %v4652 = vunpack.c.h.b16 %v4354
    %v4653 = vunpack.c.l.b16 %v4355
    %v4654 = vunpack.c.h.b16 %v4355
    %v4655 = vunpack.c.l.b16 %v4356
    %v4656 = vunpack.c.h.b16 %v4356
    %v4657 = vunpack.c.l.b16 %v4357
    %v4658 = vunpack.c.h.b16 %v4357
    %v4659 = vunpack.c.l.b16 %v4358
    %v4660 = vunpack.c.h.b16 %v4358
    %v4661 = vunpack.c.l.b16 %v4359
    %v4662 = vunpack.c.h.b16 %v4359
    %v4663 = vunpack.c.l.b16 %v4360
    %v4664 = vunpack.c.h.b16 %v4360
    %v4665 = vunpack.c.l.b16 %v4361
    %v4666 = vunpack.c.h.b16 %v4361
    %v4667 = vunpack.c.l.b16 %v4362
    %v4668 = vunpack.c.h.b16 %v4362
    %v4669 = vunpack.c.l.b16 %v4363
    %v4670 = vunpack.c.h.b16 %v4363
    %v4671 = vunpack.c.l.b16 %v4364
    %v4672 = vunpack.c.h.b16 %v4364
    %v4673 = vunpack.c.l.b16 %v4365
    %v4674 = vunpack.c.h.b16 %v4365
    %v4675 = vunpack.c.l.b16 %v4366
    %v4676 = vunpack.c.h.b16 %v4366
    %v4677 = vunpack.c.l.b16 %v4367
    %v4678 = vunpack.c.h.b16 %v4367
    %v4679 = vunpack.c.l.b16 %v4368
    %v4680 = vunpack.c.h.b16 %v4368
    %v4681 = vunpack.c.l.b16 %v4369
    %v4682 = vunpack.c.h.b16 %v4369
    %v4683 = vunpack.c.l.b16 %v4370
    %v4684 = vunpack.c.h.b16 %v4370
    %v4685 = vunpack.c.l.b16 %v4371
    %v4686 = vunpack.c.h.b16 %v4371
    %v4687 = vunpack.c.l.b16 %v4372
    %v4688 = vunpack.c.h.b16 %v4372
    %v4689 = vunpack.c.l.b16 %v4373
    %v4690 = vunpack.c.h.b16 %v4373
    %v4691 = vunpack.c.l.b16 %v4374
    %v4692 = vunpack.c.h.b16 %v4374
    %v4693 = vunpack.c.l.b16 %v4375
    %v4694 = vunpack.c.h.b16 %v4375
    %v4695 = vunpack.c.l.b16 %v4376
    %v4696 = vunpack.c.h.b16 %v4376
    %v4697 = vunpack.c.l.b16 %v4377
    %v4698 = vunpack.c.h.b16 %v4377
    %v4699 = vunpack.c.l.b16 %v4378
    %v4700 = vunpack.c.h.b16 %v4378
    %v4701 = vunpack.c.l.b16 %v4379
    %v4702 = vunpack.c.h.b16 %v4379
    %v4703 = vunpack.c.l.b16 %v4380
    %v4704 = vunpack.c.h.b16 %v4380
    %v4705 = vunpack.c.l.b16 %v4381
    %v4706 = vunpack.c.h.b16 %v4381
    %v4707 = vunpack.c.l.b16 %v4382
    %v4708 = vunpack.c.h.b16 %v4382
    %v4709 = vunpack.c.l.b16 %v4383
    %v4710 = vunpack.c.h.b16 %v4383
    %v4711 = vunpack.c.l.b16 %v4384
    %v4712 = vunpack.c.h.b16 %v4384
    %v4713 = vunpack.c.l.b16 %v4385
    %v4714 = vunpack.c.h.b16 %v4385
    %v4715 = vunpack.c.l.b16 %v4386
    %v4716 = vunpack.c.h.b16 %v4386
    %v4717 = vunpack.c.l.b16 %v4387
    %v4718 = vunpack.c.h.b16 %v4387
    %v4719 = vunpack.c.l.b16 %v4388
    %v4720 = vunpack.c.h.b16 %v4388
    %v4721 = vunpack.c.l.b16 %v4389
    %v4722 = vunpack.c.h.b16 %v4389
    %v4723 = vunpack.c.l.b16 %v4390
    %v4724 = vunpack.c.h.b16 %v4390
    %v4725 = vunpack.c.l.b16 %v4391
    %v4726 = vunpack.c.h.b16 %v4391
    %v4727 = vunpack.c.l.b16 %v4392
    %v4728 = vunpack.c.h.b16 %v4392
    %v4729 = vunpack.c.l.b16 %v4393
    %v4730 = vunpack.c.h.b16 %v4393
    %v4731 = vunpack.c.l.b16 %v4394
    %v4732 = vunpack.c.h.b16 %v4394
    %v4733 = vunpack.c.l.b16 %v4395
    %v4734 = vunpack.c.h.b16 %v4395
    %v4735 = vunpack.c.l.b16 %v4396
    %v4736 = vunpack.c.h.b16 %v4396
    %v4737 = vunpack.c.l.b16 %v4397
    %v4738 = vunpack.c.h.b16 %v4397
    %v4739 = vunpack.c.l.b16 %v4398
    %v4740 = vunpack.c.h.b16 %v4398
    %v4741 = vunpack.c.l.b16 %v4399
    %v4742 = vunpack.c.h.b16 %v4399
    %v4743 = vunpack.c.l.b16 %v4400
    %v4744 = vunpack.c.h.b16 %v4400
    %v4745 = vunpack.c.l.b16 %v4401
    %v4746 = vunpack.c.h.b16 %v4401
    %v4747 = vunpack.c.l.b16 %v4402
    %v4748 = vunpack.c.h.b16 %v4402
    %v4749 = vunpack.c.l.b16 %v4403
    %v4750 = vunpack.c.h.b16 %v4403
    %v4751 = vunpack.c.l.b16 %v4404
    %v4752 = vunpack.c.h.b16 %v4404
    %v4753 = vunpack.c.l.b16 %v4405
    %v4754 = vunpack.c.h.b16 %v4405
    %v4755 = vunpack.c.l.b16 %v4406
    %v4756 = vunpack.c.h.b16 %v4406
    %v4757 = vunpack.c.l.b16 %v4407
    %v4758 = vunpack.c.h.b16 %v4407
    %v4759 = vunpack.c.l.b16 %v4408
    %v4760 = vunpack.c.h.b16 %v4408
    %v4761 = vunpack.c.l.b16 %v4409
    %v4762 = vunpack.c.h.b16 %v4409
    %v4763 = vunpack.c.l.b16 %v4410
    %v4764 = vunpack.c.h.b16 %v4410
    %v4765 = vunpack.c.l.b16 %v4411
    %v4766 = vunpack.c.h.b16 %v4411
    %v4767 = vunpack.c.l.b16 %v4412
    %v4768 = vunpack.c.h.b16 %v4412
    %v4769 = vunpack.c.l.b16 %v4413
    %v4770 = vunpack.c.h.b16 %v4413
    %v4771 = vunpack.c.l.b16 %v4414
    %v4772 = vunpack.c.h.b16 %v4414
    %v4773 = vunpack.c.l.b16 %v4415
    %v4774 = vunpack.c.h.b16 %v4415
    %v4775 = vunpack.c.l.b16 %v4416
    %v4776 = vunpack.c.h.b16 %v4416
    %v4777 = vunpack.c.l.b16 %v4417
    %v4778 = vunpack.c.h.b16 %v4417
    %v4779 = vunpack.c.l.b16 %v4418
    %v4780 = vunpack.c.h.b16 %v4418
    %v4781 = vunpack.c.l.b16 %v4419
    %v4782 = vunpack.c.h.b16 %v4419
    %v4783 = vunpack.c.l.b16 %v4420
    %v4784 = vunpack.c.h.b16 %v4420
    %v4785 = vunpack.c.l.b16 %v4421
    %v4786 = vunpack.c.h.b16 %v4421
    %v4787 = vunpack.c.l.b16 %v4422
    %v4788 = vunpack.c.h.b16 %v4422
    %v4789 = vunpack.c.l.b16 %v4423
    %v4790 = vunpack.c.h.b16 %v4423
    %v4791 = vunpack.c.l.b16 %v4424
    %v4792 = vunpack.c.h.b16 %v4424
    %v4793 = vunpack.c.l.b16 %v4425
    %v4794 = vunpack.c.h.b16 %v4425
    %v4795 = vunpack.c.l.b16 %v4426
    %v4796 = vunpack.c.h.b16 %v4426
    %v4797 = vunpack.c.l.b16 %v4427
    %v4798 = vunpack.c.h.b16 %v4427
    %v4799 = vunpack.c.l.b16 %v4428
    %v4800 = vunpack.c.h.b16 %v4428
    %v4801 = vunpack.c.l.b16 %v4429
    %v4802 = vunpack.c.h.b16 %v4429
    %v4803 = vunpack.c.l.b16 %v4430
    %v4804 = vunpack.c.h.b16 %v4430
    %v4805 = vunpack.c.l.b16 %v4431
    %v4806 = vunpack.c.h.b16 %v4431
    %v4807 = vunpack.c.l.b16 %v4432
    %v4808 = vunpack.c.h.b16 %v4432
    %v4809 = vunpack.c.l.b16 %v4433
    %v4810 = vunpack.c.h.b16 %v4433
    %v4811 = vunpack.c.l.b16 %v4434
    %v4812 = vunpack.c.h.b16 %v4434
    %v4813 = vunpack.c.l.b16 %v4435
    %v4814 = vunpack.c.h.b16 %v4435
    %v4815 = vunpack.c.l.b16 %v4436
    %v4816 = vunpack.c.h.b16 %v4436
    %v4817 = vunpack.c.l.b16 %v4437
    %v4818 = vunpack.c.h.b16 %v4437
    %v4819 = vunpack.c.l.b16 %v4438
    %v4820 = vunpack.c.h.b16 %v4438
    %v4821 = vunpack.c.l.b16 %v4439
    %v4822 = vunpack.c.h.b16 %v4439
    %v4823 = vunpack.c.l.b16 %v4440
    %v4824 = vunpack.c.h.b16 %v4440
    %v4825 = vunpack.c.l.b16 %v4441
    %v4826 = vunpack.c.h.b16 %v4441
    %v4827 = vunpack.c.l.b16 %v4442
    %v4828 = vunpack.c.h.b16 %v4442
    %v4829 = vunpack.c.l.b16 %v4443
    %v4830 = vunpack.c.h.b16 %v4443
    %v4831 = vunpack.c.l.b16 %v4444
    %v4832 = vunpack.c.h.b16 %v4444
    %v4833 = vunpack.c.l.b16 %v4445
    %v4834 = vunpack.c.h.b16 %v4445
    %v4835 = vunpack.c.l.b16 %v4446
    %v4836 = vunpack.c.h.b16 %v4446
    %v4837 = vunpack.c.l.b16 %v4447
    %v4838 = vunpack.c.h.b16 %v4447
    %v4839 = vunpack.c.l.b16 %v4448
    %v4840 = vunpack.c.h.b16 %v4448
    %v4841 = vunpack.c.l.b16 %v4449
    %v4842 = vunpack.c.h.b16 %v4449
    %v4843 = vunpack.c.l.b16 %v4450
    %v4844 = vunpack.c.h.b16 %v4450
    %v4845 = vunpack.c.l.b16 %v4451
    %v4846 = vunpack.c.h.b16 %v4451
    %v4847 = vunpack.c.l.b16 %v4452
    %v4848 = vunpack.c.h.b16 %v4452
    %v4849 = vpack.c.b16 %v4595, %v4593
    %v4850 = vpack.c.b16 %v4596, %v4594
    %v4851 = vpack.c.b16 %v4599, %v4597
    %v4852 = vpack.c.b16 %v4600, %v4598
    %v4853 = vpack.c.b16 %v4603, %v4601
    %v4854 = vpack.c.b16 %v4604, %v4602
    %v4855 = vpack.c.b16 %v4607, %v4605
    %v4856 = vpack.c.b16 %v4608, %v4606
    %v4857 = vpack.c.b16 %v4611, %v4609
    %v4858 = vpack.c.b16 %v4612, %v4610
    %v4859 = vpack.c.b16 %v4615, %v4613
    %v4860 = vpack.c.b16 %v4616, %v4614
    %v4861 = vpack.c.b16 %v4619, %v4617
    %v4862 = vpack.c.b16 %v4620, %v4618
    %v4863 = vpack.c.b16 %v4623, %v4621
    %v4864 = vpack.c.b16 %v4624, %v4622
    %v4865 = vpack.c.b16 %v4627, %v4625
    %v4866 = vpack.c.b16 %v4628, %v4626
    %v4867 = vpack.c.b16 %v4631, %v4629
    %v4868 = vpack.c.b16 %v4632, %v4630
    %v4869 = vpack.c.b16 %v4635, %v4633
    %v4870 = vpack.c.b16 %v4636, %v4634
    %v4871 = vpack.c.b16 %v4639, %v4637
    %v4872 = vpack.c.b16 %v4640, %v4638
    %v4873 = vpack.c.b16 %v4643, %v4641
    %v4874 = vpack.c.b16 %v4644, %v4642
    %v4875 = vpack.c.b16 %v4647, %v4645
    %v4876 = vpack.c.b16 %v4648, %v4646
    %v4877 = vpack.c.b16 %v4651, %v4649
    %v4878 = vpack.c.b16 %v4652, %v4650
    %v4879 = vpack.c.b16 %v4655, %v4653
    %v4880 = vpack.c.b16 %v4656, %v4654
    %v4881 = vpack.c.b16 %v4659, %v4657
    %v4882 = vpack.c.b16 %v4660, %v4658
    %v4883 = vpack.c.b16 %v4663, %v4661
    %v4884 = vpack.c.b16 %v4664, %v4662
    %v4885 = vpack.c.b16 %v4667, %v4665
    %v4886 = vpack.c.b16 %v4668, %v4666
    %v4887 = vpack.c.b16 %v4671, %v4669
    %v4888 = vpack.c.b16 %v4672, %v4670
    %v4889 = vpack.c.b16 %v4675, %v4673
    %v4890 = vpack.c.b16 %v4676, %v4674
    %v4891 = vpack.c.b16 %v4679, %v4677
    %v4892 = vpack.c.b16 %v4680, %v4678
    %v4893 = vpack.c.b16 %v4683, %v4681
    %v4894 = vpack.c.b16 %v4684, %v4682
    %v4895 = vpack.c.b16 %v4687, %v4685
    %v4896 = vpack.c.b16 %v4688, %v4686
    %v4897 = vpack.c.b16 %v4691, %v4689
    %v4898 = vpack.c.b16 %v4692, %v4690
    %v4899 = vpack.c.b16 %v4695, %v4693
    %v4900 = vpack.c.b16 %v4696, %v4694
    %v4901 = vpack.c.b16 %v4699, %v4697
    %v4902 = vpack.c.b16 %v4700, %v4698
    %v4903 = vpack.c.b16 %v4703, %v4701
    %v4904 = vpack.c.b16 %v4704, %v4702
    %v4905 = vpack.c.b16 %v4707, %v4705
    %v4906 = vpack.c.b16 %v4708, %v4706
    %v4907 = vpack.c.b16 %v4711, %v4709
    %v4908 = vpack.c.b16 %v4712, %v4710
    %v4909 = vpack.c.b16 %v4715, %v4713
    %v4910 = vpack.c.b16 %v4716, %v4714
    %v4911 = vpack.c.b16 %v4719, %v4717
    %v4912 = vpack.c.b16 %v4720, %v4718
    %v4913 = vpack.c.b16 %v4723, %v4721
    %v4914 = vpack.c.b16 %v4724, %v4722
    %v4915 = vpack.c.b16 %v4727, %v4725
    %v4916 = vpack.c.b16 %v4728, %v4726
    %v4917 = vpack.c.b16 %v4731, %v4729
    %v4918 = vpack.c.b16 %v4732, %v4730
    %v4919 = vpack.c.b16 %v4735, %v4733
    %v4920 = vpack.c.b16 %v4736, %v4734
    %v4921 = vpack.c.b16 %v4739, %v4737
    %v4922 = vpack.c.b16 %v4740, %v4738
    %v4923 = vpack.c.b16 %v4743, %v4741
    %v4924 = vpack.c.b16 %v4744, %v4742
    %v4925 = vpack.c.b16 %v4747, %v4745
    %v4926 = vpack.c.b16 %v4748, %v4746
    %v4927 = vpack.c.b16 %v4751, %v4749
    %v4928 = vpack.c.b16 %v4752, %v4750
    %v4929 = vpack.c.b16 %v4755, %v4753
    %v4930 = vpack.c.b16 %v4756, %v4754
    %v4931 = vpack.c.b16 %v4759, %v4757
    %v4932 = vpack.c.b16 %v4760, %v4758
    %v4933 = vpack.c.b16 %v4763, %v4761
    %v4934 = vpack.c.b16 %v4764, %v4762
    %v4935 = vpack.c.b16 %v4767, %v4765
    %v4936 = vpack.c.b16 %v4768, %v4766
    %v4937 = vpack.c.b16 %v4771, %v4769
    %v4938 = vpack.c.b16 %v4772, %v4770
    %v4939 = vpack.c.b16 %v4775, %v4773
    %v4940 = vpack.c.b16 %v4776, %v4774
    %v4941 = vpack.c.b16 %v4779, %v4777
    %v4942 = vpack.c.b16 %v4780, %v4778
    %v4943 = vpack.c.b16 %v4783, %v4781
    %v4944 = vpack.c.b16 %v4784, %v4782
    %v4945 = vpack.c.b16 %v4787, %v4785
    %v4946 = vpack.c.b16 %v4788, %v4786
    %v4947 = vpack.c.b16 %v4791, %v4789
    %v4948 = vpack.c.b16 %v4792, %v4790
    %v4949 = vpack.c.b16 %v4795, %v4793
    %v4950 = vpack.c.b16 %v4796, %v4794
    %v4951 = vpack.c.b16 %v4799, %v4797
    %v4952 = vpack.c.b16 %v4800, %v4798
    %v4953 = vpack.c.b16 %v4803, %v4801
    %v4954 = vpack.c.b16 %v4804, %v4802
    %v4955 = vpack.c.b16 %v4807, %v4805
    %v4956 = vpack.c.b16 %v4808, %v4806
    %v4957 = vpack.c.b16 %v4811, %v4809
    %v4958 = vpack.c.b16 %v4812, %v4810
    %v4959 = vpack.c.b16 %v4815, %v4813
    %v4960 = vpack.c.b16 %v4816, %v4814
    %v4961 = vpack.c.b16 %v4819, %v4817
    %v4962 = vpack.c.b16 %v4820, %v4818
    %v4963 = vpack.c.b16 %v4823, %v4821
    %v4964 = vpack.c.b16 %v4824, %v4822
    %v4965 = vpack.c.b16 %v4827, %v4825
    %v4966 = vpack.c.b16 %v4828, %v4826
    %v4967 = vpack.c.b16 %v4831, %v4829
    %v4968 = vpack.c.b16 %v4832, %v4830
    %v4969 = vpack.c.b16 %v4835, %v4833
    %v4970 = vpack.c.b16 %v4836, %v4834
    %v4971 = vpack.c.b16 %v4839, %v4837
    %v4972 = vpack.c.b16 %v4840, %v4838
    %v4973 = vpack.c.b16 %v4843, %v4841
    %v4974 = vpack.c.b16 %v4844, %v4842
    %v4975 = vpack.c.b16 %v4847, %v4845
    %v4976 = vpack.c.b16 %v4848, %v4846
    %5105 = vmatprep.subr.bf16.mxu0 %v4850
    %5106 = vmatpush1.bf16.msra.mxu0 %v4849
    %5107 = vmatprep.subr.bf16.mxu0 %v4852
    %5108 = vmatpush1.bf16.msra.mxu0 %v4851
    %5109 = vmatprep.subr.bf16.mxu0 %v4854
    %5110 = vmatpush1.bf16.msra.mxu0 %v4853
    %5111 = vmatprep.subr.bf16.mxu0 %v4856
    %5112 = vmatpush1.bf16.msra.mxu0 %v4855
    %5113 = vmatprep.subr.bf16.mxu0 %v4858
    %5114 = vmatpush1.bf16.msra.mxu0 %v4857
    %5115 = vmatprep.subr.bf16.mxu0 %v4860
    %5116 = vmatpush1.bf16.msra.mxu0 %v4859
    %5117 = vmatprep.subr.bf16.mxu0 %v4862
    %5118 = vmatpush1.bf16.msra.mxu0 %v4861
    %5119 = vmatprep.subr.bf16.mxu0 %v4864
    %5120 = vmatpush1.bf16.msra.mxu0 %v4863
    %5121 = vmatprep.subr.bf16.mxu0 %v4866
    %5122 = vmatpush1.bf16.msra.mxu0 %v4865
    %5123 = vmatprep.subr.bf16.mxu0 %v4868
    %5124 = vmatpush1.bf16.msra.mxu0 %v4867
    %5125 = vmatprep.subr.bf16.mxu0 %v4870
    %5126 = vmatpush1.bf16.msra.mxu0 %v4869
    %5127 = vmatprep.subr.bf16.mxu0 %v4872
    %5128 = vmatpush1.bf16.msra.mxu0 %v4871
    %5129 = vmatprep.subr.bf16.mxu0 %v4874
    %5130 = vmatpush1.bf16.msra.mxu0 %v4873
    %5131 = vmatprep.subr.bf16.mxu0 %v4876
    %5132 = vmatpush1.bf16.msra.mxu0 %v4875
    %5133 = vmatprep.subr.bf16.mxu0 %v4878
    %5134 = vmatpush1.bf16.msra.mxu0 %v4877
    %5135 = vmatprep.subr.bf16.mxu0 %v4880
    %5136 = vmatpush1.bf16.msra.mxu0 %v4879
    %5137 = vmatprep.mubr.bf16.mxu0 %v4318
    %5138 = vmatmul.mubr.bf16.gmra.mrb[0].mxu0 %v4317
    %v5139 = vpop.f32.mrb[0].mxu0
    %v5140 = vadd.f32 %v4458, %v5139
    %v5141 = vpop.f32.mrb[0].mxu0
    %v5142 = vadd.f32 %v4462, %v5141
    %v5143 = vpop.f32.mrb[0].mxu0
    %v5144 = vadd.f32 %v4458, %v5143
    %v5145 = vpop.f32.mrb[0].mxu0
    %v5146 = vadd.f32 %v4462, %v5145
    %5147 = vdwg.mxu0
    %5148 = vmatprep.subr.bf16.mxu0 %v4882
    %5149 = vmatpush1.bf16.msra.mxu0 %v4881
    %5150 = vmatprep.subr.bf16.mxu0 %v4884
    %5151 = vmatpush1.bf16.msra.mxu0 %v4883
    %5152 = vmatprep.subr.bf16.mxu0 %v4886
    %5153 = vmatpush1.bf16.msra.mxu0 %v4885
    %5154 = vmatprep.subr.bf16.mxu0 %v4888
    %5155 = vmatpush1.bf16.msra.mxu0 %v4887
    %5156 = vmatprep.subr.bf16.mxu0 %v4890
    %5157 = vmatpush1.bf16.msra.mxu0 %v4889
    %5158 = vmatprep.subr.bf16.mxu0 %v4892
    %5159 = vmatpush1.bf16.msra.mxu0 %v4891
    %5160 = vmatprep.subr.bf16.mxu0 %v4894
    %5161 = vmatpush1.bf16.msra.mxu0 %v4893
    %5162 = vmatprep.subr.bf16.mxu0 %v4896
    %5163 = vmatpush1.bf16.msra.mxu0 %v4895
    %5164 = vmatprep.subr.bf16.mxu0 %v4898
    %5165 = vmatpush1.bf16.msra.mxu0 %v4897
    %5166 = vmatprep.subr.bf16.mxu0 %v4900
    %5167 = vmatpush1.bf16.msra.mxu0 %v4899
    %5168 = vmatprep.subr.bf16.mxu0 %v4902
    %5169 = vmatpush1.bf16.msra.mxu0 %v4901
    %5170 = vmatprep.subr.bf16.mxu0 %v4904
    %5171 = vmatpush1.bf16.msra.mxu0 %v4903
    %5172 = vmatprep.subr.bf16.mxu0 %v4906
    %5173 = vmatpush1.bf16.msra.mxu0 %v4905
    %5174 = vmatprep.subr.bf16.mxu0 %v4908
    %5175 = vmatpush1.bf16.msra.mxu0 %v4907
    %5176 = vmatprep.subr.bf16.mxu0 %v4910
    %5177 = vmatpush1.bf16.msra.mxu0 %v4909
    %5178 = vmatprep.subr.bf16.mxu0 %v4912
    %5179 = vmatpush1.bf16.msra.mxu0 %v4911
    %5180 = vmatprep.mubr.bf16.mxu0 %v4320
    %5181 = vmatmul.mubr.bf16.gmra.mrb[0].mxu0 %v4319
    %v5182 = vpop.f32.mrb[0].mxu0
    %v5183 = vadd.f32 %v5140, %v5182
    %v5184 = vpop.f32.mrb[0].mxu0
    %v5185 = vadd.f32 %v5142, %v5184
    %v5186 = vpop.f32.mrb[0].mxu0
    %v5187 = vadd.f32 %v5144, %v5186
    %v5188 = vpop.f32.mrb[0].mxu0
    %v5189 = vadd.f32 %v5146, %v5188
    %5190 = vdwg.mxu0
    %5191 = vmatprep.subr.bf16.mxu0 %v4914
    %5192 = vmatpush1.bf16.msra.mxu0 %v4913
    %5193 = vmatprep.subr.bf16.mxu0 %v4916
    %5194 = vmatpush1.bf16.msra.mxu0 %v4915
    %5195 = vmatprep.subr.bf16.mxu0 %v4918
    %5196 = vmatpush1.bf16.msra.mxu0 %v4917
    %5197 = vmatprep.subr.bf16.mxu0 %v4920
    %5198 = vmatpush1.bf16.msra.mxu0 %v4919
    %5199 = vmatprep.subr.bf16.mxu0 %v4922
    %5200 = vmatpush1.bf16.msra.mxu0 %v4921
    %5201 = vmatprep.subr.bf16.mxu0 %v4924
    %5202 = vmatpush1.bf16.msra.mxu0 %v4923
    %5203 = vmatprep.subr.bf16.mxu0 %v4926
    %5204 = vmatpush1.bf16.msra.mxu0 %v4925
    %5205 = vmatprep.subr.bf16.mxu0 %v4928
    %5206 = vmatpush1.bf16.msra.mxu0 %v4927
    %5207 = vmatprep.subr.bf16.mxu0 %v4930
    %5208 = vmatpush1.bf16.msra.mxu0 %v4929
    %5209 = vmatprep.subr.bf16.mxu0 %v4932
    %5210 = vmatpush1.bf16.msra.mxu0 %v4931
    %5211 = vmatprep.subr.bf16.mxu0 %v4934
    %5212 = vmatpush1.bf16.msra.mxu0 %v4933
    %5213 = vmatprep.subr.bf16.mxu0 %v4936
    %5214 = vmatpush1.bf16.msra.mxu0 %v4935
    %5215 = vmatprep.subr.bf16.mxu0 %v4938
    %5216 = vmatpush1.bf16.msra.mxu0 %v4937
    %5217 = vmatprep.subr.bf16.mxu0 %v4940
    %5218 = vmatpush1.bf16.msra.mxu0 %v4939
    %5219 = vmatprep.subr.bf16.mxu0 %v4942
    %5220 = vmatpush1.bf16.msra.mxu0 %v4941
    %5221 = vmatprep.subr.bf16.mxu0 %v4944
    %5222 = vmatpush1.bf16.msra.mxu0 %v4943
    %5223 = vmatprep.mubr.bf16.mxu0 %v4322
    %5224 = vmatmul.mubr.bf16.gmra.mrb[0].mxu0 %v4321
    %v5225 = vpop.f32.mrb[0].mxu0
    %v5226 = vadd.f32 %v5183, %v5225
    %v5227 = vpop.f32.mrb[0].mxu0
    %v5228 = vadd.f32 %v5185, %v5227
    %v5229 = vpop.f32.mrb[0].mxu0
    %v5230 = vadd.f32 %v5187, %v5229
    %v5231 = vpop.f32.mrb[0].mxu0
    %v5232 = vadd.f32 %v5189, %v5231
    %5233 = vdwg.mxu0
    %5234 = vmatprep.subr.bf16.mxu0 %v4946
    %5235 = vmatpush1.bf16.msra.mxu0 %v4945
    %5236 = vmatprep.subr.bf16.mxu0 %v4948
    %5237 = vmatpush1.bf16.msra.mxu0 %v4947
    %5238 = vmatprep.subr.bf16.mxu0 %v4950
    %5239 = vmatpush1.bf16.msra.mxu0 %v4949
    %5240 = vmatprep.subr.bf16.mxu0 %v4952
    %5241 = vmatpush1.bf16.msra.mxu0 %v4951
    %5242 = vmatprep.subr.bf16.mxu0 %v4954
    %5243 = vmatpush1.bf16.msra.mxu0 %v4953
    %5244 = vmatprep.subr.bf16.mxu0 %v4956
    %5245 = vmatpush1.bf16.msra.mxu0 %v4955
    %5246 = vmatprep.subr.bf16.mxu0 %v4958
    %5247 = vmatpush1.bf16.msra.mxu0 %v4957
    %5248 = vmatprep.subr.bf16.mxu0 %v4960
    %5249 = vmatpush1.bf16.msra.mxu0 %v4959
    %5250 = vmatprep.subr.bf16.mxu0 %v4962
    %5251 = vmatpush1.bf16.msra.mxu0 %v4961
    %5252 = vmatprep.subr.bf16.mxu0 %v4964
    %5253 = vmatpush1.bf16.msra.mxu0 %v4963
    %5254 = vmatprep.subr.bf16.mxu0 %v4966
    %5255 = vmatpush1.bf16.msra.mxu0 %v4965
    %5256 = vmatprep.subr.bf16.mxu0 %v4968
    %5257 = vmatpush1.bf16.msra.mxu0 %v4967
    %5258 = vmatprep.subr.bf16.mxu0 %v4970
    %5259 = vmatpush1.bf16.msra.mxu0 %v4969
    %5260 = vmatprep.subr.bf16.mxu0 %v4972
    %5261 = vmatpush1.bf16.msra.mxu0 %v4971
    %5262 = vmatprep.subr.bf16.mxu0 %v4974
    %5263 = vmatpush1.bf16.msra.mxu0 %v4973
    %5264 = vmatprep.subr.bf16.mxu0 %v4976
    %5265 = vmatpush1.bf16.msra.mxu0 %v4975
    %5266 = vmatprep.mubr.bf16.mxu0 %v4324
    %5267 = vmatmul.mubr.bf16.gmra.mrb[0].mxu0 %v4323
    %v5268 = vpop.f32.mrb[0].mxu0
    %v5269 = vadd.f32 %v5226, %v5268
    %v5270 = vpop.f32.mrb[0].mxu0
    %v5271 = vadd.f32 %v5228, %v5270
    %v5272 = vpop.f32.mrb[0].mxu0
    %v5273 = vadd.f32 %v5230, %v5272
    %v5274 = vpop.f32.mrb[0].mxu0
    %v5275 = vadd.f32 %v5232, %v5274
    %5276 = vdwg.mxu0
    %v5277 = vmax.f32 %v5269, 0.0
    %v5278 = vmax.f32 %v5271, 0.0
    %v5279 = vmax.f32 %v5273, 0.0
    %v5280 = vmax.f32 %v5275, 0.0
    %v5281 = vpack.c.bf16 %v5279, %v5277
    %v5282 = vpack.c.bf16 %v5280, %v5278
    %v5283 = vld [vmem:[#allocation17] sm:$0xf]
    %v5284 = vld [vmem:[#allocation17 + $0x4] sm:$0xf]
    %v5285 = vld [vmem:[#allocation17 + $0x8] sm:$0xf]
    %v5286 = vld [vmem:[#allocation17 + $0xc] sm:$0xf]
    %v5287 = vld [vmem:[#allocation17 + $0x10] sm:$0xf]
    %v5288 = vld [vmem:[#allocation17 + $0x14] sm:$0xf]
    %v5289 = vld [vmem:[#allocation17 + $0x18] sm:$0xf]
    %v5290 = vld [vmem:[#allocation17 + $0x1c] sm:$0xf]
    %v5291 = vld [vmem:[#allocation17 + $0x20] sm:$0xf]
    %v5292 = vld [vmem:[#allocation17 + $0x24] sm:$0xf]
    %v5293 = vld [vmem:[#allocation17 + $0x28] sm:$0xf]
    %v5294 = vld [vmem:[#allocation17 + $0x2c] sm:$0xf]
    %v5295 = vld [vmem:[#allocation17 + $0x30] sm:$0xf]
    %v5296 = vld [vmem:[#allocation17 + $0x34] sm:$0xf]
    %v5297 = vld [vmem:[#allocation17 + $0x38] sm:$0xf]
    %v5298 = vld [vmem:[#allocation17 + $0x3c] sm:$0xf]
    %v5299 = vld [vmem:[#allocation17 + $0x40] sm:$0xf]
    %v5300 = vld [vmem:[#allocation17 + $0x44] sm:$0xf]
    %v5301 = vld [vmem:[#allocation17 + $0x48] sm:$0xf]
    %v5302 = vld [vmem:[#allocation17 + $0x4c] sm:$0xf]
    %v5303 = vld [vmem:[#allocation17 + $0x50] sm:$0xf]
    %v5304 = vld [vmem:[#allocation17 + $0x54] sm:$0xf]
    %v5305 = vld [vmem:[#allocation17 + $0x58] sm:$0xf]
    %v5306 = vld [vmem:[#allocation17 + $0x5c] sm:$0xf]
    %v5307 = vld [vmem:[#allocation17 + $0x60] sm:$0xf]
    %v5308 = vld [vmem:[#allocation17 + $0x64] sm:$0xf]
    %v5309 = vld [vmem:[#allocation17 + $0x68] sm:$0xf]
    %v5310 = vld [vmem:[#allocation17 + $0x6c] sm:$0xf]
    %v5311 = vld [vmem:[#allocation17 + $0x70] sm:$0xf]
    %v5312 = vld [vmem:[#allocation17 + $0x74] sm:$0xf]
    %v5313 = vld [vmem:[#allocation17 + $0x78] sm:$0xf]
    %v5314 = vld [vmem:[#allocation17 + $0x7c] sm:$0xf]
    %v5315 = vld [vmem:[#allocation19] sm:$0x1]
    %v5317 = vlaneseq
    %v5318 = vshrl.u32 %v5317, 7
    %v5319 = vsub.s32 0, %v5318
    %v5320 = vrot.slane %v5315, %v5319
    %v5354 = vunpack.c.l.b16 %v5283
    %v5355 = vunpack.c.l.b16 %v5284
    %v5356 = vunpack.c.l.b16 %v5285
    %v5357 = vunpack.c.l.b16 %v5286
    %v5358 = vunpack.c.l.b16 %v5287
    %v5359 = vunpack.c.l.b16 %v5288
    %v5360 = vunpack.c.l.b16 %v5289
    %v5361 = vunpack.c.l.b16 %v5290
    %v5362 = vunpack.c.l.b16 %v5291
    %v5363 = vunpack.c.l.b16 %v5292
    %v5364 = vunpack.c.l.b16 %v5293
    %v5365 = vunpack.c.l.b16 %v5294
    %v5366 = vunpack.c.l.b16 %v5295
    %v5367 = vunpack.c.l.b16 %v5296
    %v5368 = vunpack.c.l.b16 %v5297
    %v5369 = vunpack.c.l.b16 %v5298
    %v5370 = vunpack.c.l.b16 %v5299
    %v5371 = vunpack.c.l.b16 %v5300
    %v5372 = vunpack.c.l.b16 %v5301
    %v5373 = vunpack.c.l.b16 %v5302
    %v5374 = vunpack.c.l.b16 %v5303
    %v5375 = vunpack.c.l.b16 %v5304
    %v5376 = vunpack.c.l.b16 %v5305
    %v5377 = vunpack.c.l.b16 %v5306
    %v5378 = vunpack.c.l.b16 %v5307
    %v5379 = vunpack.c.l.b16 %v5308
    %v5380 = vunpack.c.l.b16 %v5309
    %v5381 = vunpack.c.l.b16 %v5310
    %v5382 = vunpack.c.l.b16 %v5311
    %v5383 = vunpack.c.l.b16 %v5312
    %v5384 = vunpack.c.l.b16 %v5313
    %v5385 = vunpack.c.l.b16 %v5314
    %v5386 = vpack.c.b16 %v5355, %v5354
    %v5387 = vpack.c.b16 %v5357, %v5356
    %v5388 = vpack.c.b16 %v5359, %v5358
    %v5389 = vpack.c.b16 %v5361, %v5360
    %v5390 = vpack.c.b16 %v5363, %v5362
    %v5391 = vpack.c.b16 %v5365, %v5364
    %v5392 = vpack.c.b16 %v5367, %v5366
    %v5393 = vpack.c.b16 %v5369, %v5368
    %v5394 = vpack.c.b16 %v5371, %v5370
    %v5395 = vpack.c.b16 %v5373, %v5372
    %v5396 = vpack.c.b16 %v5375, %v5374
    %v5397 = vpack.c.b16 %v5377, %v5376
    %v5398 = vpack.c.b16 %v5379, %v5378
    %v5399 = vpack.c.b16 %v5381, %v5380
    %v5400 = vpack.c.b16 %v5383, %v5382
    %v5401 = vpack.c.b16 %v5385, %v5384
    %5418 = vmatprep.subr.bf16.mxu0 0
    %5419 = vmatpush1.bf16.msra.mxu0 %v5386
    %5420 = vmatprep.subr.bf16.mxu0 0
    %5421 = vmatpush1.bf16.msra.mxu0 %v5387
    %5422 = vmatprep.subr.bf16.mxu0 0
    %5423 = vmatpush1.bf16.msra.mxu0 %v5388
    %5424 = vmatprep.subr.bf16.mxu0 0
    %5425 = vmatpush1.bf16.msra.mxu0 %v5389
    %5426 = vmatprep.subr.bf16.mxu0 0
    %5427 = vmatpush1.bf16.msra.mxu0 %v5390
    %5428 = vmatprep.subr.bf16.mxu0 0
    %5429 = vmatpush1.bf16.msra.mxu0 %v5391
    %5430 = vmatprep.subr.bf16.mxu0 0
    %5431 = vmatpush1.bf16.msra.mxu0 %v5392
    %5432 = vmatprep.subr.bf16.mxu0 0
    %5433 = vmatpush1.bf16.msra.mxu0 %v5393
    %5434 = vmatprep.subr.bf16.mxu0 0
    %5435 = vmatpush1.bf16.msra.mxu0 %v5394
    %5436 = vmatprep.subr.bf16.mxu0 0
    %5437 = vmatpush1.bf16.msra.mxu0 %v5395
    %5438 = vmatprep.subr.bf16.mxu0 0
    %5439 = vmatpush1.bf16.msra.mxu0 %v5396
    %5440 = vmatprep.subr.bf16.mxu0 0
    %5441 = vmatpush1.bf16.msra.mxu0 %v5397
    %5442 = vmatprep.subr.bf16.mxu0 0
    %5443 = vmatpush1.bf16.msra.mxu0 %v5398
    %5444 = vmatprep.subr.bf16.mxu0 0
    %5445 = vmatpush1.bf16.msra.mxu0 %v5399
    %5446 = vmatprep.subr.bf16.mxu0 0
    %5447 = vmatpush1.bf16.msra.mxu0 %v5400
    %5448 = vmatprep.subr.bf16.mxu0 0
    %5449 = vmatpush1.bf16.msra.mxu0 %v5401
    %5450 = vmatprep.mubr.bf16.mxu0 %v5282
    %5451 = vmatmul.mubr.bf16.gmra.mrb[0].mxu0 %v5281
    %v5452 = vpop.f32.mrb[0].mxu0
    %v5453 = vadd.f32 %v5320, %v5452
    %v5454 = vpop.f32.mrb[0].mxu0
    %v5455 = vpop.f32.mrb[0].mxu0
    %v5456 = vadd.f32 %v5320, %v5455
    %v5457 = vpop.f32.mrb[0].mxu0
    %5458 = vdwg.mxu0
    %v5459 = vmax.f32 %v5453, 0.0
    %v5460 = vmax.f32 %v5456, 0.0
    %5461 = vst [vmem:[#allocation27] sm:$0xff] %v5459
    %5462 = vst [vmem:[#allocation27 + $0x8] sm:$0xff] %v5460
    %v5463 = vld [vmem:[#allocation7] sm:$0xff]
    %v5464 = vld [vmem:[#allocation7 + $0x8] sm:$0xff]
    %v5465 = vld [vmem:[#allocation7 + $0x10] sm:$0xff]
    %v5466 = vld [vmem:[#allocation7 + $0x18] sm:$0xff]
    %v5467 = vld [vmem:[#allocation7 + $0x20] sm:$0xff]
    %v5468 = vld [vmem:[#allocation7 + $0x28] sm:$0xff]
    %v5469 = vpack.c.bf16 %v5466, %v5463
    %v5470 = vpack.c.bf16 %v5467, %v5464
    %v5471 = vpack.c.bf16 %v5468, %v5465
    %v5472 = vld [vmem:[#allocation20] sm:$0xff]
    %v5473 = vld [vmem:[#allocation20 + $0x8] sm:$0xff]
    %v5474 = vld [vmem:[#allocation20 + $0x10] sm:$0xff]
    %v5475 = vld [vmem:[#allocation20 + $0x18] sm:$0xff]
    %v5476 = vld [vmem:[#allocation20 + $0x20] sm:$0xff]
    %v5477 = vld [vmem:[#allocation20 + $0x28] sm:$0xff]
    %v5478 = vld [vmem:[#allocation20 + $0x30] sm:$0xff]
    %v5479 = vld [vmem:[#allocation20 + $0x38] sm:$0xff]
    %v5480 = vld [vmem:[#allocation20 + $0x40] sm:$0xff]
    %v5481 = vld [vmem:[#allocation20 + $0x48] sm:$0xff]
    %v5482 = vld [vmem:[#allocation20 + $0x50] sm:$0xff]
    %v5483 = vld [vmem:[#allocation20 + $0x58] sm:$0xff]
    %v5484 = vld [vmem:[#allocation20 + $0x60] sm:$0xff]
    %v5485 = vld [vmem:[#allocation20 + $0x68] sm:$0xff]
    %v5486 = vld [vmem:[#allocation20 + $0x70] sm:$0xff]
    %v5487 = vld [vmem:[#allocation20 + $0x78] sm:$0xff]
    %v5488 = vld [vmem:[#allocation20 + $0x80] sm:$0xff]
    %v5489 = vld [vmem:[#allocation20 + $0x88] sm:$0xff]
    %v5490 = vld [vmem:[#allocation20 + $0x90] sm:$0xff]
    %v5491 = vld [vmem:[#allocation20 + $0x98] sm:$0xff]
    %v5492 = vld [vmem:[#allocation20 + $0xa0] sm:$0xff]
    %v5493 = vld [vmem:[#allocation20 + $0xa8] sm:$0xff]
    %v5494 = vld [vmem:[#allocation20 + $0xb0] sm:$0xff]
    %v5495 = vld [vmem:[#allocation20 + $0xb8] sm:$0xff]
    %v5496 = vld [vmem:[#allocation20 + $0xc0] sm:$0xff]
    %v5497 = vld [vmem:[#allocation20 + $0xc8] sm:$0xff]
    %v5498 = vld [vmem:[#allocation20 + $0xd0] sm:$0xff]
    %v5499 = vld [vmem:[#allocation20 + $0xd8] sm:$0xff]
    %v5500 = vld [vmem:[#allocation20 + $0xe0] sm:$0xff]
    %v5501 = vld [vmem:[#allocation20 + $0xe8] sm:$0xff]
    %v5502 = vld [vmem:[#allocation20 + $0xf0] sm:$0xff]
    %v5503 = vld [vmem:[#allocation20 + $0xf8] sm:$0xff]
    %v5504 = vld [vmem:[#allocation20 + $0x100] sm:$0xff]
    %v5505 = vld [vmem:[#allocation20 + $0x108] sm:$0xff]
    %v5506 = vld [vmem:[#allocation20 + $0x110] sm:$0xff]
    %v5507 = vld [vmem:[#allocation20 + $0x118] sm:$0xff]
    %v5508 = vld [vmem:[#allocation20 + $0x120] sm:$0xff]
    %v5509 = vld [vmem:[#allocation20 + $0x128] sm:$0xff]
    %v5510 = vld [vmem:[#allocation20 + $0x130] sm:$0xff]
    %v5511 = vld [vmem:[#allocation20 + $0x138] sm:$0xff]
    %v5512 = vld [vmem:[#allocation20 + $0x140] sm:$0xff]
    %v5513 = vld [vmem:[#allocation20 + $0x148] sm:$0xff]
    %v5514 = vld [vmem:[#allocation20 + $0x150] sm:$0xff]
    %v5515 = vld [vmem:[#allocation20 + $0x158] sm:$0xff]
    %v5516 = vld [vmem:[#allocation20 + $0x160] sm:$0xff]
    %v5517 = vld [vmem:[#allocation20 + $0x168] sm:$0xff]
    %v5518 = vld [vmem:[#allocation20 + $0x170] sm:$0xff]
    %v5519 = vld [vmem:[#allocation20 + $0x178] sm:$0xff]
    %v5520 = vld [vmem:[#allocation22] sm:$0x3]
    %v5522 = vlaneseq
    %v5523 = vshrl.u32 %v5522, 7
    %v5524 = vsub.s32 0, %v5523
    %v5525 = vrot.slane %v5520, %v5524
    %v5526 = vlaneseq
    %v5527 = vshrl.u32 %v5526, 7
    %v5528 = vsub.s32 1, %v5527
    %v5529 = vrot.slane %v5520, %v5528
    %v5580 = vunpack.c.l.b16 %v5472
    %v5581 = vunpack.c.h.b16 %v5472
    %v5582 = vunpack.c.l.b16 %v5473
    %v5583 = vunpack.c.h.b16 %v5473
    %v5584 = vunpack.c.l.b16 %v5474
    %v5585 = vunpack.c.h.b16 %v5474
    %v5586 = vunpack.c.l.b16 %v5475
    %v5587 = vunpack.c.h.b16 %v5475
    %v5588 = vunpack.c.l.b16 %v5476
    %v5589 = vunpack.c.h.b16 %v5476
    %v5590 = vunpack.c.l.b16 %v5477
    %v5591 = vunpack.c.h.b16 %v5477
    %v5592 = vunpack.c.l.b16 %v5478
    %v5593 = vunpack.c.h.b16 %v5478
    %v5594 = vunpack.c.l.b16 %v5479
    %v5595 = vunpack.c.h.b16 %v5479
    %v5596 = vunpack.c.l.b16 %v5480
    %v5597 = vunpack.c.h.b16 %v5480
    %v5598 = vunpack.c.l.b16 %v5481
    %v5599 = vunpack.c.h.b16 %v5481
    %v5600 = vunpack.c.l.b16 %v5482
    %v5601 = vunpack.c.h.b16 %v5482
    %v5602 = vunpack.c.l.b16 %v5483
    %v5603 = vunpack.c.h.b16 %v5483
    %v5604 = vunpack.c.l.b16 %v5484
    %v5605 = vunpack.c.h.b16 %v5484
    %v5606 = vunpack.c.l.b16 %v5485
    %v5607 = vunpack.c.h.b16 %v5485
    %v5608 = vunpack.c.l.b16 %v5486
    %v5609 = vunpack.c.h.b16 %v5486
    %v5610 = vunpack.c.l.b16 %v5487
    %v5611 = vunpack.c.h.b16 %v5487
    %v5612 = vunpack.c.l.b16 %v5488
    %v5613 = vunpack.c.h.b16 %v5488
    %v5614 = vunpack.c.l.b16 %v5489
    %v5615 = vunpack.c.h.b16 %v5489
    %v5616 = vunpack.c.l.b16 %v5490
    %v5617 = vunpack.c.h.b16 %v5490
    %v5618 = vunpack.c.l.b16 %v5491
    %v5619 = vunpack.c.h.b16 %v5491
    %v5620 = vunpack.c.l.b16 %v5492
    %v5621 = vunpack.c.h.b16 %v5492
    %v5622 = vunpack.c.l.b16 %v5493
    %v5623 = vunpack.c.h.b16 %v5493
    %v5624 = vunpack.c.l.b16 %v5494
    %v5625 = vunpack.c.h.b16 %v5494
    %v5626 = vunpack.c.l.b16 %v5495
    %v5627 = vunpack.c.h.b16 %v5495
    %v5628 = vunpack.c.l.b16 %v5496
    %v5629 = vunpack.c.h.b16 %v5496
    %v5630 = vunpack.c.l.b16 %v5497
    %v5631 = vunpack.c.h.b16 %v5497
    %v5632 = vunpack.c.l.b16 %v5498
    %v5633 = vunpack.c.h.b16 %v5498
    %v5634 = vunpack.c.l.b16 %v5499
    %v5635 = vunpack.c.h.b16 %v5499
    %v5636 = vunpack.c.l.b16 %v5500
    %v5637 = vunpack.c.h.b16 %v5500
    %v5638 = vunpack.c.l.b16 %v5501
    %v5639 = vunpack.c.h.b16 %v5501
    %v5640 = vunpack.c.l.b16 %v5502
    %v5641 = vunpack.c.h.b16 %v5502
    %v5642 = vunpack.c.l.b16 %v5503
    %v5643 = vunpack.c.h.b16 %v5503
    %v5644 = vunpack.c.l.b16 %v5504
    %v5645 = vunpack.c.h.b16 %v5504
    %v5646 = vunpack.c.l.b16 %v5505
    %v5647 = vunpack.c.h.b16 %v5505
    %v5648 = vunpack.c.l.b16 %v5506
    %v5649 = vunpack.c.h.b16 %v5506
    %v5650 = vunpack.c.l.b16 %v5507
    %v5651 = vunpack.c.h.b16 %v5507
    %v5652 = vunpack.c.l.b16 %v5508
    %v5653 = vunpack.c.h.b16 %v5508
    %v5654 = vunpack.c.l.b16 %v5509
    %v5655 = vunpack.c.h.b16 %v5509
    %v5656 = vunpack.c.l.b16 %v5510
    %v5657 = vunpack.c.h.b16 %v5510
    %v5658 = vunpack.c.l.b16 %v5511
    %v5659 = vunpack.c.h.b16 %v5511
    %v5660 = vunpack.c.l.b16 %v5512
    %v5661 = vunpack.c.h.b16 %v5512
    %v5662 = vunpack.c.l.b16 %v5513
    %v5663 = vunpack.c.h.b16 %v5513
    %v5664 = vunpack.c.l.b16 %v5514
    %v5665 = vunpack.c.h.b16 %v5514
    %v5666 = vunpack.c.l.b16 %v5515
    %v5667 = vunpack.c.h.b16 %v5515
    %v5668 = vunpack.c.l.b16 %v5516
    %v5669 = vunpack.c.h.b16 %v5516
    %v5670 = vunpack.c.l.b16 %v5517
    %v5671 = vunpack.c.h.b16 %v5517
    %v5672 = vunpack.c.l.b16 %v5518
    %v5673 = vunpack.c.h.b16 %v5518
    %v5674 = vunpack.c.l.b16 %v5519
    %v5675 = vunpack.c.h.b16 %v5519
    %v5676 = vpack.c.b16 %v5582, %v5580
    %v5677 = vpack.c.b16 %v5583, %v5581
    %v5678 = vpack.c.b16 %v5586, %v5584
    %v5679 = vpack.c.b16 %v5587, %v5585
    %v5680 = vpack.c.b16 %v5590, %v5588
    %v5681 = vpack.c.b16 %v5591, %v5589
    %v5682 = vpack.c.b16 %v5594, %v5592
    %v5683 = vpack.c.b16 %v5595, %v5593
    %v5684 = vpack.c.b16 %v5598, %v5596
    %v5685 = vpack.c.b16 %v5599, %v5597
    %v5686 = vpack.c.b16 %v5602, %v5600
    %v5687 = vpack.c.b16 %v5603, %v5601
    %v5688 = vpack.c.b16 %v5606, %v5604
    %v5689 = vpack.c.b16 %v5607, %v5605
    %v5690 = vpack.c.b16 %v5610, %v5608
    %v5691 = vpack.c.b16 %v5611, %v5609
    %v5692 = vpack.c.b16 %v5614, %v5612
    %v5693 = vpack.c.b16 %v5615, %v5613
    %v5694 = vpack.c.b16 %v5618, %v5616
    %v5695 = vpack.c.b16 %v5619, %v5617
    %v5696 = vpack.c.b16 %v5622, %v5620
    %v5697 = vpack.c.b16 %v5623, %v5621
    %v5698 = vpack.c.b16 %v5626, %v5624
    %v5699 = vpack.c.b16 %v5627, %v5625
    %v5700 = vpack.c.b16 %v5630, %v5628
    %v5701 = vpack.c.b16 %v5631, %v5629
    %v5702 = vpack.c.b16 %v5634, %v5632
    %v5703 = vpack.c.b16 %v5635, %v5633
    %v5704 = vpack.c.b16 %v5638, %v5636
    %v5705 = vpack.c.b16 %v5639, %v5637
    %v5706 = vpack.c.b16 %v5642, %v5640
    %v5707 = vpack.c.b16 %v5643, %v5641
    %v5708 = vpack.c.b16 %v5646, %v5644
    %v5709 = vpack.c.b16 %v5647, %v5645
    %v5710 = vpack.c.b16 %v5650, %v5648
    %v5711 = vpack.c.b16 %v5651, %v5649
    %v5712 = vpack.c.b16 %v5654, %v5652
    %v5713 = vpack.c.b16 %v5655, %v5653
    %v5714 = vpack.c.b16 %v5658, %v5656
    %v5715 = vpack.c.b16 %v5659, %v5657
    %v5716 = vpack.c.b16 %v5662, %v5660
    %v5717 = vpack.c.b16 %v5663, %v5661
    %v5718 = vpack.c.b16 %v5666, %v5664
    %v5719 = vpack.c.b16 %v5667, %v5665
    %v5720 = vpack.c.b16 %v5670, %v5668
    %v5721 = vpack.c.b16 %v5671, %v5669
    %v5722 = vpack.c.b16 %v5674, %v5672
    %v5723 = vpack.c.b16 %v5675, %v5673
    %5772 = vmatprep.subr.bf16.mxu0 %v5677
    %5773 = vmatpush1.bf16.msra.mxu0 %v5676
    %5774 = vmatprep.subr.bf16.mxu0 %v5679
    %5775 = vmatpush1.bf16.msra.mxu0 %v5678
    %5776 = vmatprep.subr.bf16.mxu0 %v5681
    %5777 = vmatpush1.bf16.msra.mxu0 %v5680
    %5778 = vmatprep.subr.bf16.mxu0 %v5683
    %5779 = vmatpush1.bf16.msra.mxu0 %v5682
    %5780 = vmatprep.subr.bf16.mxu0 %v5685
    %5781 = vmatpush1.bf16.msra.mxu0 %v5684
    %5782 = vmatprep.subr.bf16.mxu0 %v5687
    %5783 = vmatpush1.bf16.msra.mxu0 %v5686
    %5784 = vmatprep.subr.bf16.mxu0 %v5689
    %5785 = vmatpush1.bf16.msra.mxu0 %v5688
    %5786 = vmatprep.subr.bf16.mxu0 %v5691
    %5787 = vmatpush1.bf16.msra.mxu0 %v5690
    %5788 = vmatprep.subr.bf16.mxu0 %v5693
    %5789 = vmatpush1.bf16.msra.mxu0 %v5692
    %5790 = vmatprep.subr.bf16.mxu0 %v5695
    %5791 = vmatpush1.bf16.msra.mxu0 %v5694
    %5792 = vmatprep.subr.bf16.mxu0 %v5697
    %5793 = vmatpush1.bf16.msra.mxu0 %v5696
    %5794 = vmatprep.subr.bf16.mxu0 %v5699
    %5795 = vmatpush1.bf16.msra.mxu0 %v5698
    %5796 = vmatprep.subr.bf16.mxu0 %v5701
    %5797 = vmatpush1.bf16.msra.mxu0 %v5700
    %5798 = vmatprep.subr.bf16.mxu0 %v5703
    %5799 = vmatpush1.bf16.msra.mxu0 %v5702
    %5800 = vmatprep.subr.bf16.mxu0 %v5705
    %5801 = vmatpush1.bf16.msra.mxu0 %v5704
    %5802 = vmatprep.subr.bf16.mxu0 %v5707
    %5803 = vmatpush1.bf16.msra.mxu0 %v5706
    %5804 = vmatprep.mubr.bf16.mxu0 %v5470
    %5805 = vmatmul.mubr.bf16.gmra.mrb[0].mxu0 %v5469
    %v5806 = vpop.f32.mrb[0].mxu0
    %v5807 = vadd.f32 %v5525, %v5806
    %v5808 = vpop.f32.mrb[0].mxu0
    %v5809 = vadd.f32 %v5529, %v5808
    %v5810 = vpop.f32.mrb[0].mxu0
    %v5811 = vadd.f32 %v5525, %v5810
    %v5812 = vpop.f32.mrb[0].mxu0
    %v5813 = vadd.f32 %v5529, %v5812
    %5814 = vdwg.mxu0
    %5815 = vmatprep.subr.bf16.mxu0 %v5709
    %5816 = vmatpush1.bf16.msra.mxu0 %v5708
    %5817 = vmatprep.subr.bf16.mxu0 %v5711
    %5818 = vmatpush1.bf16.msra.mxu0 %v5710
    %5819 = vmatprep.subr.bf16.mxu0 %v5713
    %5820 = vmatpush1.bf16.msra.mxu0 %v5712
    %5821 = vmatprep.subr.bf16.mxu0 %v5715
    %5822 = vmatpush1.bf16.msra.mxu0 %v5714
    %5823 = vmatprep.subr.bf16.mxu0 %v5717
    %5824 = vmatpush1.bf16.msra.mxu0 %v5716
    %5825 = vmatprep.subr.bf16.mxu0 %v5719
    %5826 = vmatpush1.bf16.msra.mxu0 %v5718
    %5827 = vmatprep.subr.bf16.mxu0 %v5721
    %5828 = vmatpush1.bf16.msra.mxu0 %v5720
    %5829 = vmatprep.subr.bf16.mxu0 %v5723
    %5830 = vmatpush1.bf16.msra.mxu0 %v5722
    %5831 = vmatprep.subr.bf16.mxu0 0
    %5832 = vmatpush1.bf16.msra.mxu0 0
    %5833 = vmatprep.subr.bf16.mxu0 0
    %5834 = vmatpush1.bf16.msra.mxu0 0
    %5835 = vmatprep.subr.bf16.mxu0 0
    %5836 = vmatpush1.bf16.msra.mxu0 0
    %5837 = vmatprep.subr.bf16.mxu0 0
    %5838 = vmatpush1.bf16.msra.mxu0 0
    %5839 = vmatprep.subr.bf16.mxu0 0
    %5840 = vmatpush1.bf16.msra.mxu0 0
    %5841 = vmatprep.subr.bf16.mxu0 0
    %5842 = vmatpush1.bf16.msra.mxu0 0
    %5843 = vmatprep.subr.bf16.mxu0 0
    %5844 = vmatpush1.bf16.msra.mxu0 0
    %5845 = vmatprep.subr.bf16.mxu0 0
    %5846 = vmatpush1.bf16.msra.mxu0 0
    %5847 = vmatprep.mubr.bf16.mxu0 0
    %5848 = vmatmul.mubr.bf16.gmra.mrb[0].mxu0 %v5471
    %v5849 = vpop.f32.mrb[0].mxu0
    %v5850 = vadd.f32 %v5807, %v5849
    %v5851 = vpop.f32.mrb[0].mxu0
    %v5852 = vadd.f32 %v5809, %v5851
    %v5853 = vpop.f32.mrb[0].mxu0
    %v5854 = vadd.f32 %v5811, %v5853
    %v5855 = vpop.f32.mrb[0].mxu0
    %v5856 = vadd.f32 %v5813, %v5855
    %5857 = vdwg.mxu0
    %v5858 = vmax.f32 %v5850, 0.0
    %v5859 = vmax.f32 %v5852, 0.0
    %v5860 = vmax.f32 %v5854, 0.0
    %v5861 = vmax.f32 %v5856, 0.0
    %v5862 = vpack.c.bf16 %v5860, %v5858
    %v5863 = vpack.c.bf16 %v5861, %v5859
    %v5864 = vld [vmem:[#allocation23] sm:$0xf]
    %v5865 = vld [vmem:[#allocation23 + $0x4] sm:$0xf]
    %v5866 = vld [vmem:[#allocation23 + $0x8] sm:$0xf]
    %v5867 = vld [vmem:[#allocation23 + $0xc] sm:$0xf]
    %v5868 = vld [vmem:[#allocation23 + $0x10] sm:$0xf]
    %v5869 = vld [vmem:[#allocation23 + $0x14] sm:$0xf]
    %v5870 = vld [vmem:[#allocation23 + $0x18] sm:$0xf]
    %v5871 = vld [vmem:[#allocation23 + $0x1c] sm:$0xf]
    %v5872 = vld [vmem:[#allocation23 + $0x20] sm:$0xf]
    %v5873 = vld [vmem:[#allocation23 + $0x24] sm:$0xf]
    %v5874 = vld [vmem:[#allocation23 + $0x28] sm:$0xf]
    %v5875 = vld [vmem:[#allocation23 + $0x2c] sm:$0xf]
    %v5876 = vld [vmem:[#allocation23 + $0x30] sm:$0xf]
    %v5877 = vld [vmem:[#allocation23 + $0x34] sm:$0xf]
    %v5878 = vld [vmem:[#allocation23 + $0x38] sm:$0xf]
    %v5879 = vld [vmem:[#allocation23 + $0x3c] sm:$0xf]
    %v5880 = vld [vmem:[#allocation23 + $0x40] sm:$0xf]
    %v5881 = vld [vmem:[#allocation23 + $0x44] sm:$0xf]
    %v5882 = vld [vmem:[#allocation23 + $0x48] sm:$0xf]
    %v5883 = vld [vmem:[#allocation23 + $0x4c] sm:$0xf]
    %v5884 = vld [vmem:[#allocation23 + $0x50] sm:$0xf]
    %v5885 = vld [vmem:[#allocation23 + $0x54] sm:$0xf]
    %v5886 = vld [vmem:[#allocation23 + $0x58] sm:$0xf]
    %v5887 = vld [vmem:[#allocation23 + $0x5c] sm:$0xf]
    %v5888 = vld [vmem:[#allocation23 + $0x60] sm:$0xf]
    %v5889 = vld [vmem:[#allocation23 + $0x64] sm:$0xf]
    %v5890 = vld [vmem:[#allocation23 + $0x68] sm:$0xf]
    %v5891 = vld [vmem:[#allocation23 + $0x6c] sm:$0xf]
    %v5892 = vld [vmem:[#allocation23 + $0x70] sm:$0xf]
    %v5893 = vld [vmem:[#allocation23 + $0x74] sm:$0xf]
    %v5894 = vld [vmem:[#allocation23 + $0x78] sm:$0xf]
    %v5895 = vld [vmem:[#allocation23 + $0x7c] sm:$0xf]
    %v5896 = vld [vmem:[#allocation25] sm:$0x1]
    %v5898 = vlaneseq
    %v5899 = vshrl.u32 %v5898, 7
    %v5900 = vsub.s32 0, %v5899
    %v5901 = vrot.slane %v5896, %v5900
    %v5935 = vunpack.c.l.b16 %v5864
    %v5936 = vunpack.c.l.b16 %v5865
    %v5937 = vunpack.c.l.b16 %v5866
    %v5938 = vunpack.c.l.b16 %v5867
    %v5939 = vunpack.c.l.b16 %v5868
    %v5940 = vunpack.c.l.b16 %v5869
    %v5941 = vunpack.c.l.b16 %v5870
    %v5942 = vunpack.c.l.b16 %v5871
    %v5943 = vunpack.c.l.b16 %v5872
    %v5944 = vunpack.c.l.b16 %v5873
    %v5945 = vunpack.c.l.b16 %v5874
    %v5946 = vunpack.c.l.b16 %v5875
    %v5947 = vunpack.c.l.b16 %v5876
    %v5948 = vunpack.c.l.b16 %v5877
    %v5949 = vunpack.c.l.b16 %v5878
    %v5950 = vunpack.c.l.b16 %v5879
    %v5951 = vunpack.c.l.b16 %v5880
    %v5952 = vunpack.c.l.b16 %v5881
    %v5953 = vunpack.c.l.b16 %v5882
    %v5954 = vunpack.c.l.b16 %v5883
    %v5955 = vunpack.c.l.b16 %v5884
    %v5956 = vunpack.c.l.b16 %v5885
    %v5957 = vunpack.c.l.b16 %v5886
    %v5958 = vunpack.c.l.b16 %v5887
    %v5959 = vunpack.c.l.b16 %v5888
    %v5960 = vunpack.c.l.b16 %v5889
    %v5961 = vunpack.c.l.b16 %v5890
    %v5962 = vunpack.c.l.b16 %v5891
    %v5963 = vunpack.c.l.b16 %v5892
    %v5964 = vunpack.c.l.b16 %v5893
    %v5965 = vunpack.c.l.b16 %v5894
    %v5966 = vunpack.c.l.b16 %v5895
    %v5967 = vpack.c.b16 %v5936, %v5935
    %v5968 = vpack.c.b16 %v5938, %v5937
    %v5969 = vpack.c.b16 %v5940, %v5939
    %v5970 = vpack.c.b16 %v5942, %v5941
    %v5971 = vpack.c.b16 %v5944, %v5943
    %v5972 = vpack.c.b16 %v5946, %v5945
    %v5973 = vpack.c.b16 %v5948, %v5947
    %v5974 = vpack.c.b16 %v5950, %v5949
    %v5975 = vpack.c.b16 %v5952, %v5951
    %v5976 = vpack.c.b16 %v5954, %v5953
    %v5977 = vpack.c.b16 %v5956, %v5955
    %v5978 = vpack.c.b16 %v5958, %v5957
    %v5979 = vpack.c.b16 %v5960, %v5959
    %v5980 = vpack.c.b16 %v5962, %v5961
    %v5981 = vpack.c.b16 %v5964, %v5963
    %v5982 = vpack.c.b16 %v5966, %v5965
    %5999 = vmatprep.subr.bf16.mxu0 0
    %6000 = vmatpush1.bf16.msra.mxu0 %v5967
    %6001 = vmatprep.subr.bf16.mxu0 0
    %6002 = vmatpush1.bf16.msra.mxu0 %v5968
    %6003 = vmatprep.subr.bf16.mxu0 0
    %6004 = vmatpush1.bf16.msra.mxu0 %v5969
    %6005 = vmatprep.subr.bf16.mxu0 0
    %6006 = vmatpush1.bf16.msra.mxu0 %v5970
    %6007 = vmatprep.subr.bf16.mxu0 0
    %6008 = vmatpush1.bf16.msra.mxu0 %v5971
    %6009 = vmatprep.subr.bf16.mxu0 0
    %6010 = vmatpush1.bf16.msra.mxu0 %v5972
    %6011 = vmatprep.subr.bf16.mxu0 0
    %6012 = vmatpush1.bf16.msra.mxu0 %v5973
    %6013 = vmatprep.subr.bf16.mxu0 0
    %6014 = vmatpush1.bf16.msra.mxu0 %v5974
    %6015 = vmatprep.subr.bf16.mxu0 0
    %6016 = vmatpush1.bf16.msra.mxu0 %v5975
    %6017 = vmatprep.subr.bf16.mxu0 0
    %6018 = vmatpush1.bf16.msra.mxu0 %v5976
    %6019 = vmatprep.subr.bf16.mxu0 0
    %6020 = vmatpush1.bf16.msra.mxu0 %v5977
    %6021 = vmatprep.subr.bf16.mxu0 0
    %6022 = vmatpush1.bf16.msra.mxu0 %v5978
    %6023 = vmatprep.subr.bf16.mxu0 0
    %6024 = vmatpush1.bf16.msra.mxu0 %v5979
    %6025 = vmatprep.subr.bf16.mxu0 0
    %6026 = vmatpush1.bf16.msra.mxu0 %v5980
    %6027 = vmatprep.subr.bf16.mxu0 0
    %6028 = vmatpush1.bf16.msra.mxu0 %v5981
    %6029 = vmatprep.subr.bf16.mxu0 0
    %6030 = vmatpush1.bf16.msra.mxu0 %v5982
    %6031 = vmatprep.mubr.bf16.mxu0 %v5863
    %6032 = vmatmul.mubr.bf16.gmra.mrb[0].mxu0 %v5862
    %v6033 = vpop.f32.mrb[0].mxu0
    %v6034 = vadd.f32 %v5901, %v6033
    %v6035 = vpop.f32.mrb[0].mxu0
    %v6036 = vpop.f32.mrb[0].mxu0
    %v6037 = vadd.f32 %v5901, %v6036
    %v6038 = vpop.f32.mrb[0].mxu0
    %6039 = vdwg.mxu0
    %v6040 = vmax.f32 %v6034, 0.0
    %v6041 = vmax.f32 %v6037, 0.0
    %6042 = vst [vmem:[#allocation29] sm:$0xff] %v6040
    %6043 = vst [vmem:[#allocation29 + $0x8] sm:$0xff] %v6041
    // Predicated region
    $region122: #{multi_res_mlp_heads_forward.1} parent=1 // pred_check
      _
    $region123: #{multi_res_mlp_heads_forward.1} parent=1 // pred_check_branch
      %6045 = sbr.rel (0) target = $region125
    $region124: #{multi_res_mlp_heads_forward.1} parent=1 // pred_region
      %s6047 = ssub.s32 256, 256
      %6048 = vsyncadd [#allocation4], %s6047
      %s6049 = sshll.u32 [#allocation26], 4
      %s6050 = int_to_ptr.vmem [resolvable:$true] %s6049
      %6055 = dma.vmem_to_hbm [thread:$0]  %s6050, 256, %s15, [#allocation4], 128, 128, 8
    $region125: #{multi_res_mlp_heads_forward.1} parent=1 // pred_fallthru
      _
    // Predicated region
    $region126: #{multi_res_mlp_heads_forward.1} parent=1 // pred_check
      _
    $region127: #{multi_res_mlp_heads_forward.1} parent=1 // pred_check_branch
      %6057 = sbr.rel (0) target = $region129
    $region128: #{multi_res_mlp_heads_forward.1} parent=1 // pred_region
      %s6059 = ssub.s32 256, 256
      %6060 = vsyncadd [#allocation28], %s6059
      %s6061 = sshll.u32 [#allocation27], 4
      %s6062 = int_to_ptr.vmem [resolvable:$true] %s6061
      %6067 = dma.vmem_to_hbm [thread:$0]  %s6062, 256, %s16, [#allocation28], 128, 128, 8
    $region129: #{multi_res_mlp_heads_forward.1} parent=1 // pred_fallthru
      _
    // Predicated region
    $region130: #{multi_res_mlp_heads_forward.1} parent=1 // pred_check
      _
    $region131: #{multi_res_mlp_heads_forward.1} parent=1 // pred_check_branch
      %6069 = sbr.rel (0) target = $region133
    $region132: #{multi_res_mlp_heads_forward.1} parent=1 // pred_region
      %s6071 = ssub.s32 256, 256
      %6072 = vsyncadd [#allocation28], %s6071
      %s6073 = sshll.u32 [#allocation29], 4
      %s6074 = int_to_ptr.vmem [resolvable:$true] %s6073
      %6079 = dma.vmem_to_hbm [thread:$0]  %s6074, 256, %s17, [#allocation28], 128, 128, 8
    $region133: #{multi_res_mlp_heads_forward.1} parent=1 // pred_fallthru
      _
    // Predicated region
    $region134: #{multi_res_mlp_heads_forward.1} parent=1 // pred_check
      _
    $region135: #{multi_res_mlp_heads_forward.1} parent=1 // pred_check_branch
      %6081 = sbr.rel (0) target = $region137
    $region136: #{multi_res_mlp_heads_forward.1} parent=1 // pred_region
      %6082 = dma.done [#allocation4], 256
    $region137: #{multi_res_mlp_heads_forward.1} parent=1 // pred_fallthru
      _
    // Predicated region
    $region138: #{multi_res_mlp_heads_forward.1} parent=1 // pred_check
      _
    $region139: #{multi_res_mlp_heads_forward.1} parent=1 // pred_check_branch
      %6084 = sbr.rel (0) target = $region141
    $region140: #{multi_res_mlp_heads_forward.1} parent=1 // pred_region
      %6085 = dma.done [#allocation28], 256
    $region141: #{multi_res_mlp_heads_forward.1} parent=1 // pred_fallthru
      _
    // Predicated region
    $region142: #{multi_res_mlp_heads_forward.1} parent=1 // pred_check
      _
    $region143: #{multi_res_mlp_heads_forward.1} parent=1 // pred_check_branch
      %6087 = sbr.rel (0) target = $region145
    $region144: #{multi_res_mlp_heads_forward.1} parent=1 // pred_region
      %6088 = dma.done [#allocation28], 256
    $region145: #{multi_res_mlp_heads_forward.1} parent=1 // pred_fallthru
      _
    %6089 = vsyncpa [#allocation3], 1
    %6090 = vsyncpa [#allocation6], 1
    %6091 = vsyncpa [#allocation9], 1
    %6092 = vsyncpa [#allocation12], 1
    %6093 = vsyncpa [#allocation15], 1
    %6094 = vsyncpa [#allocation18], 1
    %6095 = vsyncpa [#allocation21], 1
    %6096 = vsyncpa [#allocation24], 1
    %6097 = vsyncpa [#allocation4], 1
    %6098 = vsyncpa [#allocation28], 1

</llo_original>
